<compile_context>
chip_gen: v5e
topology: v5e:2x2
jax: 0.10.0
libtpu: 0.0.40
codegen_flags: <defaults>
</compile_context>

<pallas_src>
import functools

import numpy as np
import jax
import jax.numpy as jnp
from jax.experimental import pallas as pl
from jax.experimental.pallas import tpu as pltpu


# ----------------------------------------------------------------------------
# small helpers
# ----------------------------------------------------------------------------
def _sigmoid(x):
    # Numerically stable logistic routed through the EUP tanh unit.
    return 0.5 * (jnp.tanh(0.5 * x) + 1.0)


def _silu(x):
    return x * _sigmoid(x)


def _bdot(a, b):
    # bf16 MXU operands, f32 accumulation.
    return jnp.dot(a.astype(jnp.bfloat16), b.astype(jnp.bfloat16),
                   preferred_element_type=jnp.float32)


def _vmem():
    return pl.BlockSpec(memory_space=pltpu.MemorySpace.VMEM)


@functools.lru_cache(maxsize=None)
def _rep_sel_const(H):
    """Constant repeat/select matrices for the flat NNConv message form."""
    k = np.arange(H * H)
    rep = (np.arange(H)[:, None] == (k[None, :] // H)).astype(np.float32)
    sel = ((k[:, None] % H) == np.arange(H)[None, :]).astype(np.float32)
    return jnp.asarray(rep, jnp.bfloat16), jnp.asarray(sel, jnp.bfloat16)


# ----------------------------------------------------------------------------
# fused forward kernel
# ----------------------------------------------------------------------------
def _gnn_fused_kernel(
    x_ref, ea_ref, src_ref, dst_ref, batch_ref, rep_ref, sel_ref,
    fw_ref, fb_ref,
    ew1_ref, eb1_ref, ew2_ref, eb2_ref,
    root_ref, cbias_ref,
    gruw_ref, grub_ref,
    s2sw_ref, s2sb_ref,
    ow1_ref, ob1_ref, ow2_ref, ob2_ref,
    o_ref, *, num_layers, s2s_steps, hidden):
    H = hidden
    N = x_ref.shape[0]
    E = ea_ref.shape[0]
    B = o_ref.shape[0]
    bf16 = jnp.bfloat16

    # ---- gather / scatter / membership one-hots built in-kernel from int32
    #      indices (no dense O(E*N) f32 matrices ever touch HBM). ----
    gather = (jax.lax.broadcasted_iota(jnp.int32, (E, N), 1)
              == src_ref[...]).astype(bf16)                              # [E, N]
    scat01 = (jax.lax.broadcasted_iota(jnp.int32, (N, E), 0)
              == dst_ref[...]).astype(bf16)                              # [N, E]
    member = (jax.lax.broadcasted_iota(jnp.int32, (B, N), 0)
              == batch_ref[...])                                         # [B, N]
    deg = jnp.sum(scat01.astype(jnp.float32), axis=1, keepdims=True)     # [N, 1]
    inv_deg = 1.0 / jnp.maximum(deg, 1.0)                                # exact f32

    # ---- x = SiLU(first_layer(x)); GRU hidden initialized to x ----
    h = _silu(_bdot(x_ref[...], fw_ref[...]) + fb_ref[...])              # [N, H]

    # ---- edge network (edge_attr is layer-invariant -> computed once) ----
    eh = _silu(_bdot(ea_ref[...], ew1_ref[...]) + eb1_ref[...])          # [E, W]
    # NOTE: flat layout is in-channel major (d*H + f), matching PyTorch
    # NNConv's .view(E, in, out).
    ewf = (_bdot(eh, ew2_ref[...]) + eb2_ref[...]).astype(bf16)          # [E, H*H]

    rep = rep_ref[...]
    sel = sel_ref[...]
    root = root_ref[...]
    cbias = cbias_ref[...]
    gruw = gruw_ref[...]
    grub = grub_ref[...]

    # TODO(synk): for large E convert to lax.fori_loop (carry=h) so per-layer
    #             [E, H*H] temporaries do not keep live ranges across layers.
    for _ in range(num_layers):
        # NNConv(aggr='mean'): msg[e, f] = sum_d x[src[e], d] * ew[e, d, f]
        x_src = _bdot(gather, h)                                         # [E, H]
        x_rep = _bdot(x_src, rep)                                        # [E, H*H]
        msg = _bdot(x_rep.astype(bf16) * ewf, sel)                       # [E, H]
        aggr = _bdot(scat01, msg) * inv_deg                              # [N, H]
        m = _silu(aggr + _bdot(h, root) + cbias)                         # [N, H]

        # Fused GRU cell: one [N,2H] x [2H,6H] matmul (block-diag weights).
        g = _bdot(jnp.concatenate([m, h], axis=1), gruw) + grub          # [N, 6H]
        gi = g[:, :3 * H]
        gh = g[:, 3 * H:]
        r = _sigmoid(gi[:, :H] + gh[:, :H])
        z = _sigmoid(gi[:, H:2 * H] + gh[:, H:2 * H])
        n = jnp.tanh(gi[:, 2 * H:] + r * gh[:, 2 * H:])
        h = (1.0 - z) * n + z * h

    # ---- Set2Set (processing_steps iterations) ----
    s2sw = s2sw_ref[...]
    s2sb = s2sb_ref[...]
    h_bf = h.astype(bf16)
    q = jnp.zeros((B, H), jnp.float32)
    r_read = jnp.zeros((B, H), jnp.float32)
    c = jnp.zeros((B, H), jnp.float32)
    neg_big = jnp.float32(-1e30)
    for _ in range(s2s_steps):
        # LSTM with input q_star = [q | r_read]; q/h weights pre-summed and
        # q/r halves pre-concatenated -> a single [B,2H] x [2H,4H] matmul.
        q_star = jnp.concatenate([q, r_read], axis=1)                    # [B, 2H]
        gates = _bdot(q_star, s2sw) + s2sb                               # [B, 4H]
        gi_ = _sigmoid(gates[:, :H])
        gf_ = _sigmoid(gates[:, H:2 * H])
        gg_ = jnp.tanh(gates[:, 2 * H:3 * H])
        go_ = _sigmoid(gates[:, 3 * H:])
        c = gf_ * c + gi_ * gg_
        q = go_ * jnp.tanh(c)

        # attention: scores[b, n] = <q[b], h[n]>, masked softmax per graph.
        scores = jax.lax.dot_general(
            q.astype(bf16), h_bf, (((1,), (1,)), ((), ())),
            preferred_element_type=jnp.float32)                          # [B, N]
        scores = jnp.where(member, scores, neg_big)
        mx = jnp.max(scores, axis=1, keepdims=True)
        ex = jnp.where(member, jnp.exp(scores - mx), 0.0)
        denom = jnp.maximum(jnp.sum(ex, axis=1, keepdims=True), 1e-30)   # empty-graph guard
        a = ex / denom                                                   # [B, N]
        r_read = _bdot(a, h_bf)                                          # [B, H]

    # ---- readout MLP on q_star = [q | r_read] (single [2H,H] matmul) ----
    q_star = jnp.concatenate([q, r_read], axis=1)                        # [B, 2H]
    y = _silu(_bdot(q_star, ow1_ref[...]) + ob1_ref[...])                # [B, H]
    o_ref[...] = _bdot(y, ow2_ref[...]) + ob2_ref[...]                   # [B, out]


# ----------------------------------------------------------------------------
# wrapper
# ----------------------------------------------------------------------------
@functools.partial(jax.jit,
                   static_argnames=("num_graphs", "hidden", "num_layers",
                                    "s2s_steps"))
def _gnn_forward_jit(params, x, src, dst, edge_attr, batch,
                     num_graphs, hidden, num_layers, s2s_steps):
    N = x.shape[0]
    E = edge_attr.shape[0]
    H = hidden
    B = num_graphs
    out_ch = params["out_w2"].shape[1]
    bf = lambda a: a.astype(jnp.bfloat16)

    rep, sel = _rep_sel_const(H)   # built once per H, embedded as constants

    args = [
        x, edge_attr,
        src.reshape(E, 1).astype(jnp.int32),
        dst.reshape(1, E).astype(jnp.int32),
        batch.reshape(1, N).astype(jnp.int32),
        rep, sel,
        bf(params["first_w"]), params["first_b"],
        bf(params["enn_w1"]), params["enn_b1"],
        bf(params["enn_w2"]), params["enn_b2"],
        bf(params["conv_root"]), params["conv_bias"],
        bf(params["gru_w"]), params["gru_b"],
        bf(params["s2s_w"]), params["s2s_b"],
        bf(params["out_w1"]), params["out_b1"],
        bf(params["out_w2"]), params["out_b2"],
    ]
    kernel = functools.partial(_gnn_fused_kernel,
                               num_layers=num_layers, s2s_steps=s2s_steps,
                               hidden=H)
    y = pl.pallas_call(
        kernel,
        out_shape=jax.ShapeDtypeStruct((B, out_ch), jnp.float32),
        in_specs=[_vmem() for _ in args],
        out_specs=_vmem(),
        compiler_params=pltpu.CompilerParams(
            vmem_limit_bytes=48 * 1024 * 1024),
    )(*args)
    return y[:, 0]                                                       # squeeze(-1)


def gnn_forward(params, x, src, dst, edge_attr, batch, num_graphs, cfg):
    return _gnn_forward_jit(
        params, x, src, dst, edge_attr, batch,
        num_graphs=num_graphs, hidden=cfg["hidden_channels"],
        num_layers=cfg["num_layers"], s2s_steps=cfg["M"])


# ----------------------------------------------------------------------------
# deterministic parameter initialization (packed / fused layouts)
# ----------------------------------------------------------------------------
def _init_linear(key, din, dout):
    s = 1.0 / jnp.sqrt(jnp.float32(din))
    kw, kb = jax.random.split(key)
    w = s * jax.random.normal(kw, (din, dout), jnp.float32)
    b = s * jax.random.normal(kb, (1, dout), jnp.float32)
    return w, b


def _fold_bn(w, b, gamma, beta, rm, rv, eps=1e-5):
    """Fold an eval-mode BatchNorm1d into the preceding Linear (exact)."""
    scale = gamma / jnp.sqrt(rv + eps)
    return w * scale, (b - rm) * scale + beta


def init_params(key, cfg):
    H = cfg["hidden_channels"]
    W = H * cfg["nn_width_factor"]
    f32 = jnp.float32
    ks = jax.random.split(key, 12)
    p = {}
    p["first_w"], p["first_b"] = _init_linear(ks[0], cfg["input_channels"], H)

    # edge network: Linear(F_e, W) -> BN(W, eval, folded) -> SiLU -> Linear(W, H*H)
    ew1, eb1 = _init_linear(ks[1], cfg["edge_feat_dim"], W)
    p["enn_w1"], p["enn_b1"] = _fold_bn(
        ew1, eb1,
        jnp.ones((1, W), f32), jnp.zeros((1, W), f32),
        jnp.zeros((1, W), f32), jnp.ones((1, W), f32))
    p["enn_w2"], p["enn_b2"] = _init_linear(ks[2], W, H * H)

    s = 1.0 / jnp.sqrt(jnp.float32(H))
    p["conv_root"] = s * jax.random.normal(ks[3], (H, H), f32)
    p["conv_bias"] = jnp.zeros((1, H), f32)

    # GRU cell weights packed block-diagonally: [m|h] @ gru_w -> (gi | gh).
    wi = s * jax.random.normal(ks[4], (H, 3 * H), f32)
    wh = s * jax.random.normal(ks[5], (H, 3 * H), f32)
    bi = s * jax.random.normal(ks[6], (1, 3 * H), f32)
    bh = s * jax.random.normal(ks[7], (1, 3 * H), f32)
    gru_w = jnp.zeros((2 * H, 6 * H), f32)
    gru_w = gru_w.at[:H, :3 * H].set(wi)
    gru_w = gru_w.at[H:, 3 * H:].set(wh)
    p["gru_w"] = gru_w
    p["gru_b"] = jnp.concatenate([bi, bh], axis=1)

    # Set2Set LSTM: gates (i|f|g|o); q-part of W_ih pre-summed with W_hh
    # (valid since q == h each step) and q/r halves concatenated -> [2H, 4H].
    swq = s * jax.random.normal(ks[8], (H, 4 * H), f32)
    swr = s * jax.random.normal(ks[9], (H, 4 * H), f32)
    p["s2s_w"] = jnp.concatenate([swq, swr], axis=0)
    p["s2s_b"] = s * jax.random.normal(ks[10], (1, 4 * H), f32)

    # readout: Linear(2H, H) -> BN(H, eval, folded) -> SiLU -> Linear(H, out)
    k1, k2 = jax.random.split(ks[11])
    ow1, ob1 = _init_linear(k1, 2 * H, H)
    p["out_w1"], p["out_b1"] = _fold_bn(
        ow1, ob1,
        jnp.ones((1, H), f32), jnp.zeros((1, H), f32),
        jnp.zeros((1, H), f32), jnp.ones((1, H), f32))
    p["out_w2"], p["out_b2"] = _init_linear(k2, H, cfg["output_channels"])
    return p


# ----------------------------------------------------------------------------
# main
# ----------------------------------------------------------------------------
if __name__ == "__main__":
    cfg = dict(input_channels=11, hidden_channels=32, output_channels=1,
               num_layers=4, M=3, edge_feat_dim=4, nn_width_factor=2)

    key = jax.random.PRNGKey(0)
    kp, kx, ke = jax.random.split(key, 3)
    params = init_params(kp, cfg)

    # graph: 2 graphs with 6 nodes each, bidirectional ring edges.
    nodes0 = jnp.arange(6, dtype=jnp.int32)
    src0 = jnp.concatenate([nodes0, (nodes0 + 1) % 6])
    dst0 = jnp.concatenate([(nodes0 + 1) % 6, nodes0])
    src = jnp.concatenate([src0, src0 + 6]).astype(jnp.int32)
    dst = jnp.concatenate([dst0, dst0 + 6]).astype(jnp.int32)
    N = 12
    E = int(src.shape[0])
    batch = jnp.concatenate([jnp.zeros(6, jnp.int32), jnp.ones(6, jnp.int32)])
    num_graphs = 2

    x = jax.random.normal(kx, (N, cfg["input_channels"]), jnp.float32)
    edge_attr = jax.random.normal(ke, (E, cfg["edge_feat_dim"]), jnp.float32)

    out = gnn_forward(params, x, src, dst, edge_attr, batch, num_graphs, cfg)
    out = jax.block_until_ready(out)
    assert out.shape == (num_graphs,)
    assert bool(jnp.all(jnp.isfinite(out)))
    print("KERNEL_OK")
</pallas_src>

<mosaic_0001>
module attributes {stable_mosaic.version = 11 : i64} {
  func.func @_gnn_fused_kernel(%arg0: memref<12x11xf32, #tpu.memory_space<vmem>>, %arg1: memref<24x4xf32, #tpu.memory_space<vmem>>, %arg2: memref<24x1xi32, #tpu.memory_space<vmem>>, %arg3: memref<1x24xi32, #tpu.memory_space<vmem>>, %arg4: memref<1x12xi32, #tpu.memory_space<vmem>>, %arg5: memref<32x1024xbf16, #tpu.memory_space<vmem>>, %arg6: memref<1024x32xbf16, #tpu.memory_space<vmem>>, %arg7: memref<11x32xbf16, #tpu.memory_space<vmem>>, %arg8: memref<1x32xf32, #tpu.memory_space<vmem>>, %arg9: memref<4x64xbf16, #tpu.memory_space<vmem>>, %arg10: memref<1x64xf32, #tpu.memory_space<vmem>>, %arg11: memref<64x1024xbf16, #tpu.memory_space<vmem>>, %arg12: memref<1x1024xf32, #tpu.memory_space<vmem>>, %arg13: memref<32x32xbf16, #tpu.memory_space<vmem>>, %arg14: memref<1x32xf32, #tpu.memory_space<vmem>>, %arg15: memref<64x192xbf16, #tpu.memory_space<vmem>>, %arg16: memref<1x192xf32, #tpu.memory_space<vmem>>, %arg17: memref<64x128xbf16, #tpu.memory_space<vmem>>, %arg18: memref<1x128xf32, #tpu.memory_space<vmem>>, %arg19: memref<64x32xbf16, #tpu.memory_space<vmem>>, %arg20: memref<1x32xf32, #tpu.memory_space<vmem>>, %arg21: memref<32x1xbf16, #tpu.memory_space<vmem>>, %arg22: memref<1x1xf32, #tpu.memory_space<vmem>>, %arg23: memref<2x1xf32, #tpu.memory_space<vmem>>) attributes {dimension_semantics = [], scalar_prefetch = 0 : i64, scratch_operands = 0 : i64, tpu.core_type = #tpu.core_type<tc>} {
    %0 = tpu.iota {dimensions = array<i32: 1>} : vector<24x12xi32>
    %c0 = arith.constant 0 : index
    %c0_0 = arith.constant 0 : index
    %1 = vector.load %arg2[%c0, %c0_0] : memref<24x1xi32, #tpu.memory_space<vmem>>, vector<24x1xi32>
    %2 = vector.broadcast %1 : vector<24x1xi32> to vector<24x12xi32>
    %3 = arith.cmpi eq, %0, %2 : vector<24x12xi32>
    %4 = arith.extui %3 : vector<24x12xi1> to vector<24x12xi32>
    %5 = arith.sitofp %4 : vector<24x12xi32> to vector<24x12xf32>
    %6 = arith.truncf %5 : vector<24x12xf32> to vector<24x12xbf16>
    %7 = tpu.iota {dimensions = array<i32: 0>} : vector<12x24xi32>
    %c0_1 = arith.constant 0 : index
    %c0_2 = arith.constant 0 : index
    %8 = vector.load %arg3[%c0_1, %c0_2] : memref<1x24xi32, #tpu.memory_space<vmem>>, vector<1x24xi32>
    %9 = vector.broadcast %8 : vector<1x24xi32> to vector<12x24xi32>
    %10 = arith.cmpi eq, %7, %9 : vector<12x24xi32>
    %11 = arith.extui %10 : vector<12x24xi1> to vector<12x24xi32>
    %12 = arith.sitofp %11 : vector<12x24xi32> to vector<12x24xf32>
    %13 = arith.truncf %12 : vector<12x24xf32> to vector<12x24xbf16>
    %14 = tpu.iota {dimensions = array<i32: 0>} : vector<2x12xi32>
    %c0_3 = arith.constant 0 : index
    %c0_4 = arith.constant 0 : index
    %15 = vector.load %arg4[%c0_3, %c0_4] : memref<1x12xi32, #tpu.memory_space<vmem>>, vector<1x12xi32>
    %16 = vector.broadcast %15 : vector<1x12xi32> to vector<2x12xi32>
    %17 = arith.cmpi eq, %14, %16 : vector<2x12xi32>
    %18 = arith.extf %13 : vector<12x24xbf16> to vector<12x24xf32>
    %cst = arith.constant dense<0.000000e+00> : vector<12xf32>
    %19 = vector.multi_reduction <add>, %18, %cst [1] : vector<12x24xf32> to vector<12xf32>
    %20 = vector.shape_cast %19 : vector<12xf32> to vector<12x1xf32>
    %cst_5 = arith.constant 1.000000e+00 : f32
    %21 = vector.broadcast %cst_5 : f32 to vector<12x1xf32>
    %22 = arith.maximumf %20, %21 : vector<12x1xf32>
    %cst_6 = arith.constant 1.000000e+00 : f32
    %23 = vector.broadcast %cst_6 : f32 to vector<12x1xf32>
    %24 = arith.divf %23, %22 : vector<12x1xf32>
    %c0_7 = arith.constant 0 : index
    %c0_8 = arith.constant 0 : index
    %25 = vector.load %arg0[%c0_7, %c0_8] : memref<12x11xf32, #tpu.memory_space<vmem>>, vector<12x11xf32>
    %c0_9 = arith.constant 0 : index
    %c0_10 = arith.constant 0 : index
    %26 = vector.load %arg7[%c0_9, %c0_10] : memref<11x32xbf16, #tpu.memory_space<vmem>>, vector<11x32xbf16>
    %27 = arith.truncf %25 : vector<12x11xf32> to vector<12x11xbf16>
    %cst_11 = arith.constant dense<0.000000e+00> : vector<12x32xf32>
    %28 = tpu.matmul %27, %26, %cst_11 {dimension_numbers = #tpu.dot_dimension_numbers<[1], [0], [0], [1], [0, 0, 1, 1], [], []>} : vector<12x11xbf16>, vector<11x32xbf16>, vector<12x32xf32> -> vector<12x32xf32>
    %c0_12 = arith.constant 0 : index
    %c0_13 = arith.constant 0 : index
    %29 = vector.load %arg8[%c0_12, %c0_13] : memref<1x32xf32, #tpu.memory_space<vmem>>, vector<1x32xf32>
    %30 = vector.broadcast %29 : vector<1x32xf32> to vector<12x32xf32>
    %31 = arith.addf %28, %30 : vector<12x32xf32>
    %cst_14 = arith.constant 5.000000e-01 : f32
    %32 = vector.broadcast %cst_14 : f32 to vector<12x32xf32>
    %33 = arith.mulf %32, %31 : vector<12x32xf32>
    %34 = math.tanh %33 : vector<12x32xf32>
    %cst_15 = arith.constant 1.000000e+00 : f32
    %35 = vector.broadcast %cst_15 : f32 to vector<12x32xf32>
    %36 = arith.addf %34, %35 : vector<12x32xf32>
    %cst_16 = arith.constant 5.000000e-01 : f32
    %37 = vector.broadcast %cst_16 : f32 to vector<12x32xf32>
    %38 = arith.mulf %37, %36 : vector<12x32xf32>
    %39 = arith.mulf %31, %38 : vector<12x32xf32>
    %c0_17 = arith.constant 0 : index
    %c0_18 = arith.constant 0 : index
    %40 = vector.load %arg1[%c0_17, %c0_18] : memref<24x4xf32, #tpu.memory_space<vmem>>, vector<24x4xf32>
    %c0_19 = arith.constant 0 : index
    %c0_20 = arith.constant 0 : index
    %41 = vector.load %arg9[%c0_19, %c0_20] : memref<4x64xbf16, #tpu.memory_space<vmem>>, vector<4x64xbf16>
    %42 = arith.truncf %40 : vector<24x4xf32> to vector<24x4xbf16>
    %cst_21 = arith.constant dense<0.000000e+00> : vector<24x64xf32>
    %43 = tpu.matmul %42, %41, %cst_21 {dimension_numbers = #tpu.dot_dimension_numbers<[1], [0], [0], [1], [0, 0, 1, 1], [], []>} : vector<24x4xbf16>, vector<4x64xbf16>, vector<24x64xf32> -> vector<24x64xf32>
    %c0_22 = arith.constant 0 : index
    %c0_23 = arith.constant 0 : index
    %44 = vector.load %arg10[%c0_22, %c0_23] : memref<1x64xf32, #tpu.memory_space<vmem>>, vector<1x64xf32>
    %45 = vector.broadcast %44 : vector<1x64xf32> to vector<24x64xf32>
    %46 = arith.addf %43, %45 : vector<24x64xf32>
    %cst_24 = arith.constant 5.000000e-01 : f32
    %47 = vector.broadcast %cst_24 : f32 to vector<24x64xf32>
    %48 = arith.mulf %47, %46 : vector<24x64xf32>
    %49 = math.tanh %48 : vector<24x64xf32>
    %cst_25 = arith.constant 1.000000e+00 : f32
    %50 = vector.broadcast %cst_25 : f32 to vector<24x64xf32>
    %51 = arith.addf %49, %50 : vector<24x64xf32>
    %cst_26 = arith.constant 5.000000e-01 : f32
    %52 = vector.broadcast %cst_26 : f32 to vector<24x64xf32>
    %53 = arith.mulf %52, %51 : vector<24x64xf32>
    %54 = arith.mulf %46, %53 : vector<24x64xf32>
    %c0_27 = arith.constant 0 : index
    %c0_28 = arith.constant 0 : index
    %55 = vector.load %arg11[%c0_27, %c0_28] : memref<64x1024xbf16, #tpu.memory_space<vmem>>, vector<64x1024xbf16>
    %56 = arith.truncf %54 : vector<24x64xf32> to vector<24x64xbf16>
    %cst_29 = arith.constant dense<0.000000e+00> : vector<24x1024xf32>
    %57 = tpu.matmul %56, %55, %cst_29 {dimension_numbers = #tpu.dot_dimension_numbers<[1], [0], [0], [1], [0, 0, 1, 1], [], []>} : vector<24x64xbf16>, vector<64x1024xbf16>, vector<24x1024xf32> -> vector<24x1024xf32>
    %c0_30 = arith.constant 0 : index
    %c0_31 = arith.constant 0 : index
    %58 = vector.load %arg12[%c0_30, %c0_31] : memref<1x1024xf32, #tpu.memory_space<vmem>>, vector<1x1024xf32>
    %59 = vector.broadcast %58 : vector<1x1024xf32> to vector<24x1024xf32>
    %60 = arith.addf %57, %59 : vector<24x1024xf32>
    %61 = arith.truncf %60 : vector<24x1024xf32> to vector<24x1024xbf16>
    %c0_32 = arith.constant 0 : index
    %c0_33 = arith.constant 0 : index
    %62 = vector.load %arg5[%c0_32, %c0_33] : memref<32x1024xbf16, #tpu.memory_space<vmem>>, vector<32x1024xbf16>
    %c0_34 = arith.constant 0 : index
    %c0_35 = arith.constant 0 : index
    %63 = vector.load %arg6[%c0_34, %c0_35] : memref<1024x32xbf16, #tpu.memory_space<vmem>>, vector<1024x32xbf16>
    %c0_36 = arith.constant 0 : index
    %c0_37 = arith.constant 0 : index
    %64 = vector.load %arg13[%c0_36, %c0_37] : memref<32x32xbf16, #tpu.memory_space<vmem>>, vector<32x32xbf16>
    %c0_38 = arith.constant 0 : index
    %c0_39 = arith.constant 0 : index
    %65 = vector.load %arg14[%c0_38, %c0_39] : memref<1x32xf32, #tpu.memory_space<vmem>>, vector<1x32xf32>
    %c0_40 = arith.constant 0 : index
    %c0_41 = arith.constant 0 : index
    %66 = vector.load %arg15[%c0_40, %c0_41] : memref<64x192xbf16, #tpu.memory_space<vmem>>, vector<64x192xbf16>
    %c0_42 = arith.constant 0 : index
    %c0_43 = arith.constant 0 : index
    %67 = vector.load %arg16[%c0_42, %c0_43] : memref<1x192xf32, #tpu.memory_space<vmem>>, vector<1x192xf32>
    %68 = arith.truncf %39 : vector<12x32xf32> to vector<12x32xbf16>
    %cst_44 = arith.constant dense<0.000000e+00> : vector<24x32xf32>
    %69 = tpu.matmul %6, %68, %cst_44 {dimension_numbers = #tpu.dot_dimension_numbers<[1], [0], [0], [1], [0, 0, 1, 1], [], []>} : vector<24x12xbf16>, vector<12x32xbf16>, vector<24x32xf32> -> vector<24x32xf32>
    %70 = arith.truncf %69 : vector<24x32xf32> to vector<24x32xbf16>
    %cst_45 = arith.constant dense<0.000000e+00> : vector<24x1024xf32>
    %71 = tpu.matmul %70, %62, %cst_45 {dimension_numbers = #tpu.dot_dimension_numbers<[1], [0], [0], [1], [0, 0, 1, 1], [], []>} : vector<24x32xbf16>, vector<32x1024xbf16>, vector<24x1024xf32> -> vector<24x1024xf32>
    %72 = arith.truncf %71 : vector<24x1024xf32> to vector<24x1024xbf16>
    %73 = arith.mulf %72, %61 : vector<24x1024xbf16>
    %cst_46 = arith.constant dense<0.000000e+00> : vector<24x32xf32>
    %74 = tpu.matmul %73, %63, %cst_46 {dimension_numbers = #tpu.dot_dimension_numbers<[1], [0], [0], [1], [0, 0, 1, 1], [], []>} : vector<24x1024xbf16>, vector<1024x32xbf16>, vector<24x32xf32> -> vector<24x32xf32>
    %75 = arith.truncf %74 : vector<24x32xf32> to vector<24x32xbf16>
    %cst_47 = arith.constant dense<0.000000e+00> : vector<12x32xf32>
    %76 = tpu.matmul %13, %75, %cst_47 {dimension_numbers = #tpu.dot_dimension_numbers<[1], [0], [0], [1], [0, 0, 1, 1], [], []>} : vector<12x24xbf16>, vector<24x32xbf16>, vector<12x32xf32> -> vector<12x32xf32>
    %77 = vector.broadcast %24 : vector<12x1xf32> to vector<12x32xf32>
    %78 = arith.mulf %76, %77 : vector<12x32xf32>
    %79 = arith.truncf %39 : vector<12x32xf32> to vector<12x32xbf16>
    %cst_48 = arith.constant dense<0.000000e+00> : vector<12x32xf32>
    %80 = tpu.matmul %79, %64, %cst_48 {dimension_numbers = #tpu.dot_dimension_numbers<[1], [0], [0], [1], [0, 0, 1, 1], [], []>} : vector<12x32xbf16>, vector<32x32xbf16>, vector<12x32xf32> -> vector<12x32xf32>
    %81 = arith.addf %78, %80 : vector<12x32xf32>
    %82 = vector.broadcast %65 : vector<1x32xf32> to vector<12x32xf32>
    %83 = arith.addf %81, %82 : vector<12x32xf32>
    %cst_49 = arith.constant 5.000000e-01 : f32
    %84 = vector.broadcast %cst_49 : f32 to vector<12x32xf32>
    %85 = arith.mulf %84, %83 : vector<12x32xf32>
    %86 = math.tanh %85 : vector<12x32xf32>
    %cst_50 = arith.constant 1.000000e+00 : f32
    %87 = vector.broadcast %cst_50 : f32 to vector<12x32xf32>
    %88 = arith.addf %86, %87 : vector<12x32xf32>
    %cst_51 = arith.constant 5.000000e-01 : f32
    %89 = vector.broadcast %cst_51 : f32 to vector<12x32xf32>
    %90 = arith.mulf %89, %88 : vector<12x32xf32>
    %91 = arith.mulf %83, %90 : vector<12x32xf32>
    %92 = tpu.concatenate %91, %39 in 1 : vector<12x32xf32>, vector<12x32xf32> -> vector<12x64xf32>
    %93 = arith.truncf %92 : vector<12x64xf32> to vector<12x64xbf16>
    %cst_52 = arith.constant dense<0.000000e+00> : vector<12x192xf32>
    %94 = tpu.matmul %93, %66, %cst_52 {dimension_numbers = #tpu.dot_dimension_numbers<[1], [0], [0], [1], [0, 0, 1, 1], [], []>} : vector<12x64xbf16>, vector<64x192xbf16>, vector<12x192xf32> -> vector<12x192xf32>
    %95 = vector.broadcast %67 : vector<1x192xf32> to vector<12x192xf32>
    %96 = arith.addf %94, %95 : vector<12x192xf32>
    %97 = vector.extract_strided_slice %96 {offsets = [0, 0], sizes = [12, 96], strides = [1, 1]} : vector<12x192xf32> to vector<12x96xf32>
    %98 = vector.extract_strided_slice %96 {offsets = [0, 96], sizes = [12, 96], strides = [1, 1]} : vector<12x192xf32> to vector<12x96xf32>
    %99 = vector.extract_strided_slice %97 {offsets = [0, 0], sizes = [12, 32], strides = [1, 1]} : vector<12x96xf32> to vector<12x32xf32>
    %100 = vector.extract_strided_slice %98 {offsets = [0, 0], sizes = [12, 32], strides = [1, 1]} : vector<12x96xf32> to vector<12x32xf32>
    %101 = arith.addf %99, %100 : vector<12x32xf32>
    %cst_53 = arith.constant 5.000000e-01 : f32
    %102 = vector.broadcast %cst_53 : f32 to vector<12x32xf32>
    %103 = arith.mulf %102, %101 : vector<12x32xf32>
    %104 = math.tanh %103 : vector<12x32xf32>
    %cst_54 = arith.constant 1.000000e+00 : f32
    %105 = vector.broadcast %cst_54 : f32 to vector<12x32xf32>
    %106 = arith.addf %104, %105 : vector<12x32xf32>
    %cst_55 = arith.constant 5.000000e-01 : f32
    %107 = vector.broadcast %cst_55 : f32 to vector<12x32xf32>
    %108 = arith.mulf %107, %106 : vector<12x32xf32>
    %109 = vector.extract_strided_slice %97 {offsets = [0, 32], sizes = [12, 32], strides = [1, 1]} : vector<12x96xf32> to vector<12x32xf32>
    %110 = vector.extract_strided_slice %98 {offsets = [0, 32], sizes = [12, 32], strides = [1, 1]} : vector<12x96xf32> to vector<12x32xf32>
    %111 = arith.addf %109, %110 : vector<12x32xf32>
    %cst_56 = arith.constant 5.000000e-01 : f32
    %112 = vector.broadcast %cst_56 : f32 to vector<12x32xf32>
    %113 = arith.mulf %112, %111 : vector<12x32xf32>
    %114 = math.tanh %113 : vector<12x32xf32>
    %cst_57 = arith.constant 1.000000e+00 : f32
    %115 = vector.broadcast %cst_57 : f32 to vector<12x32xf32>
    %116 = arith.addf %114, %115 : vector<12x32xf32>
    %cst_58 = arith.constant 5.000000e-01 : f32
    %117 = vector.broadcast %cst_58 : f32 to vector<12x32xf32>
    %118 = arith.mulf %117, %116 : vector<12x32xf32>
    %119 = vector.extract_strided_slice %97 {offsets = [0, 64], sizes = [12, 32], strides = [1, 1]} : vector<12x96xf32> to vector<12x32xf32>
    %120 = vector.extract_strided_slice %98 {offsets = [0, 64], sizes = [12, 32], strides = [1, 1]} : vector<12x96xf32> to vector<12x32xf32>
    %121 = arith.mulf %108, %120 : vector<12x32xf32>
    %122 = arith.addf %119, %121 : vector<12x32xf32>
    %123 = math.tanh %122 : vector<12x32xf32>
    %cst_59 = arith.constant 1.000000e+00 : f32
    %124 = vector.broadcast %cst_59 : f32 to vector<12x32xf32>
    %125 = arith.subf %124, %118 : vector<12x32xf32>
    %126 = arith.mulf %125, %123 : vector<12x32xf32>
    %127 = arith.mulf %118, %39 : vector<12x32xf32>
    %128 = arith.addf %126, %127 : vector<12x32xf32>
    %129 = arith.truncf %128 : vector<12x32xf32> to vector<12x32xbf16>
    %cst_60 = arith.constant dense<0.000000e+00> : vector<24x32xf32>
    %130 = tpu.matmul %6, %129, %cst_60 {dimension_numbers = #tpu.dot_dimension_numbers<[1], [0], [0], [1], [0, 0, 1, 1], [], []>} : vector<24x12xbf16>, vector<12x32xbf16>, vector<24x32xf32> -> vector<24x32xf32>
    %131 = arith.truncf %130 : vector<24x32xf32> to vector<24x32xbf16>
    %cst_61 = arith.constant dense<0.000000e+00> : vector<24x1024xf32>
    %132 = tpu.matmul %131, %62, %cst_61 {dimension_numbers = #tpu.dot_dimension_numbers<[1], [0], [0], [1], [0, 0, 1, 1], [], []>} : vector<24x32xbf16>, vector<32x1024xbf16>, vector<24x1024xf32> -> vector<24x1024xf32>
    %133 = arith.truncf %132 : vector<24x1024xf32> to vector<24x1024xbf16>
    %134 = arith.mulf %133, %61 : vector<24x1024xbf16>
    %cst_62 = arith.constant dense<0.000000e+00> : vector<24x32xf32>
    %135 = tpu.matmul %134, %63, %cst_62 {dimension_numbers = #tpu.dot_dimension_numbers<[1], [0], [0], [1], [0, 0, 1, 1], [], []>} : vector<24x1024xbf16>, vector<1024x32xbf16>, vector<24x32xf32> -> vector<24x32xf32>
    %136 = arith.truncf %135 : vector<24x32xf32> to vector<24x32xbf16>
    %cst_63 = arith.constant dense<0.000000e+00> : vector<12x32xf32>
    %137 = tpu.matmul %13, %136, %cst_63 {dimension_numbers = #tpu.dot_dimension_numbers<[1], [0], [0], [1], [0, 0, 1, 1], [], []>} : vector<12x24xbf16>, vector<24x32xbf16>, vector<12x32xf32> -> vector<12x32xf32>
    %138 = vector.broadcast %24 : vector<12x1xf32> to vector<12x32xf32>
    %139 = arith.mulf %137, %138 : vector<12x32xf32>
    %140 = arith.truncf %128 : vector<12x32xf32> to vector<12x32xbf16>
    %cst_64 = arith.constant dense<0.000000e+00> : vector<12x32xf32>
    %141 = tpu.matmul %140, %64, %cst_64 {dimension_numbers = #tpu.dot_dimension_numbers<[1], [0], [0], [1], [0, 0, 1, 1], [], []>} : vector<12x32xbf16>, vector<32x32xbf16>, vector<12x32xf32> -> vector<12x32xf32>
    %142 = arith.addf %139, %141 : vector<12x32xf32>
    %143 = vector.broadcast %65 : vector<1x32xf32> to vector<12x32xf32>
    %144 = arith.addf %142, %143 : vector<12x32xf32>
    %cst_65 = arith.constant 5.000000e-01 : f32
    %145 = vector.broadcast %cst_65 : f32 to vector<12x32xf32>
    %146 = arith.mulf %145, %144 : vector<12x32xf32>
    %147 = math.tanh %146 : vector<12x32xf32>
    %cst_66 = arith.constant 1.000000e+00 : f32
    %148 = vector.broadcast %cst_66 : f32 to vector<12x32xf32>
    %149 = arith.addf %147, %148 : vector<12x32xf32>
    %cst_67 = arith.constant 5.000000e-01 : f32
    %150 = vector.broadcast %cst_67 : f32 to vector<12x32xf32>
    %151 = arith.mulf %150, %149 : vector<12x32xf32>
    %152 = arith.mulf %144, %151 : vector<12x32xf32>
    %153 = tpu.concatenate %152, %128 in 1 : vector<12x32xf32>, vector<12x32xf32> -> vector<12x64xf32>
    %154 = arith.truncf %153 : vector<12x64xf32> to vector<12x64xbf16>
    %cst_68 = arith.constant dense<0.000000e+00> : vector<12x192xf32>
    %155 = tpu.matmul %154, %66, %cst_68 {dimension_numbers = #tpu.dot_dimension_numbers<[1], [0], [0], [1], [0, 0, 1, 1], [], []>} : vector<12x64xbf16>, vector<64x192xbf16>, vector<12x192xf32> -> vector<12x192xf32>
    %156 = vector.broadcast %67 : vector<1x192xf32> to vector<12x192xf32>
    %157 = arith.addf %155, %156 : vector<12x192xf32>
    %158 = vector.extract_strided_slice %157 {offsets = [0, 0], sizes = [12, 96], strides = [1, 1]} : vector<12x192xf32> to vector<12x96xf32>
    %159 = vector.extract_strided_slice %157 {offsets = [0, 96], sizes = [12, 96], strides = [1, 1]} : vector<12x192xf32> to vector<12x96xf32>
    %160 = vector.extract_strided_slice %158 {offsets = [0, 0], sizes = [12, 32], strides = [1, 1]} : vector<12x96xf32> to vector<12x32xf32>
    %161 = vector.extract_strided_slice %159 {offsets = [0, 0], sizes = [12, 32], strides = [1, 1]} : vector<12x96xf32> to vector<12x32xf32>
    %162 = arith.addf %160, %161 : vector<12x32xf32>
    %cst_69 = arith.constant 5.000000e-01 : f32
    %163 = vector.broadcast %cst_69 : f32 to vector<12x32xf32>
    %164 = arith.mulf %163, %162 : vector<12x32xf32>
    %165 = math.tanh %164 : vector<12x32xf32>
    %cst_70 = arith.constant 1.000000e+00 : f32
    %166 = vector.broadcast %cst_70 : f32 to vector<12x32xf32>
    %167 = arith.addf %165, %166 : vector<12x32xf32>
    %cst_71 = arith.constant 5.000000e-01 : f32
    %168 = vector.broadcast %cst_71 : f32 to vector<12x32xf32>
    %169 = arith.mulf %168, %167 : vector<12x32xf32>
    %170 = vector.extract_strided_slice %158 {offsets = [0, 32], sizes = [12, 32], strides = [1, 1]} : vector<12x96xf32> to vector<12x32xf32>
    %171 = vector.extract_strided_slice %159 {offsets = [0, 32], sizes = [12, 32], strides = [1, 1]} : vector<12x96xf32> to vector<12x32xf32>
    %172 = arith.addf %170, %171 : vector<12x32xf32>
    %cst_72 = arith.constant 5.000000e-01 : f32
    %173 = vector.broadcast %cst_72 : f32 to vector<12x32xf32>
    %174 = arith.mulf %173, %172 : vector<12x32xf32>
    %175 = math.tanh %174 : vector<12x32xf32>
    %cst_73 = arith.constant 1.000000e+00 : f32
    %176 = vector.broadcast %cst_73 : f32 to vector<12x32xf32>
    %177 = arith.addf %175, %176 : vector<12x32xf32>
    %cst_74 = arith.constant 5.000000e-01 : f32
    %178 = vector.broadcast %cst_74 : f32 to vector<12x32xf32>
    %179 = arith.mulf %178, %177 : vector<12x32xf32>
    %180 = vector.extract_strided_slice %158 {offsets = [0, 64], sizes = [12, 32], strides = [1, 1]} : vector<12x96xf32> to vector<12x32xf32>
    %181 = vector.extract_strided_slice %159 {offsets = [0, 64], sizes = [12, 32], strides = [1, 1]} : vector<12x96xf32> to vector<12x32xf32>
    %182 = arith.mulf %169, %181 : vector<12x32xf32>
    %183 = arith.addf %180, %182 : vector<12x32xf32>
    %184 = math.tanh %183 : vector<12x32xf32>
    %cst_75 = arith.constant 1.000000e+00 : f32
    %185 = vector.broadcast %cst_75 : f32 to vector<12x32xf32>
    %186 = arith.subf %185, %179 : vector<12x32xf32>
    %187 = arith.mulf %186, %184 : vector<12x32xf32>
    %188 = arith.mulf %179, %128 : vector<12x32xf32>
    %189 = arith.addf %187, %188 : vector<12x32xf32>
    %190 = arith.truncf %189 : vector<12x32xf32> to vector<12x32xbf16>
    %cst_76 = arith.constant dense<0.000000e+00> : vector<24x32xf32>
    %191 = tpu.matmul %6, %190, %cst_76 {dimension_numbers = #tpu.dot_dimension_numbers<[1], [0], [0], [1], [0, 0, 1, 1], [], []>} : vector<24x12xbf16>, vector<12x32xbf16>, vector<24x32xf32> -> vector<24x32xf32>
    %192 = arith.truncf %191 : vector<24x32xf32> to vector<24x32xbf16>
    %cst_77 = arith.constant dense<0.000000e+00> : vector<24x1024xf32>
    %193 = tpu.matmul %192, %62, %cst_77 {dimension_numbers = #tpu.dot_dimension_numbers<[1], [0], [0], [1], [0, 0, 1, 1], [], []>} : vector<24x32xbf16>, vector<32x1024xbf16>, vector<24x1024xf32> -> vector<24x1024xf32>
    %194 = arith.truncf %193 : vector<24x1024xf32> to vector<24x1024xbf16>
    %195 = arith.mulf %194, %61 : vector<24x1024xbf16>
    %cst_78 = arith.constant dense<0.000000e+00> : vector<24x32xf32>
    %196 = tpu.matmul %195, %63, %cst_78 {dimension_numbers = #tpu.dot_dimension_numbers<[1], [0], [0], [1], [0, 0, 1, 1], [], []>} : vector<24x1024xbf16>, vector<1024x32xbf16>, vector<24x32xf32> -> vector<24x32xf32>
    %197 = arith.truncf %196 : vector<24x32xf32> to vector<24x32xbf16>
    %cst_79 = arith.constant dense<0.000000e+00> : vector<12x32xf32>
    %198 = tpu.matmul %13, %197, %cst_79 {dimension_numbers = #tpu.dot_dimension_numbers<[1], [0], [0], [1], [0, 0, 1, 1], [], []>} : vector<12x24xbf16>, vector<24x32xbf16>, vector<12x32xf32> -> vector<12x32xf32>
    %199 = vector.broadcast %24 : vector<12x1xf32> to vector<12x32xf32>
    %200 = arith.mulf %198, %199 : vector<12x32xf32>
    %201 = arith.truncf %189 : vector<12x32xf32> to vector<12x32xbf16>
    %cst_80 = arith.constant dense<0.000000e+00> : vector<12x32xf32>
    %202 = tpu.matmul %201, %64, %cst_80 {dimension_numbers = #tpu.dot_dimension_numbers<[1], [0], [0], [1], [0, 0, 1, 1], [], []>} : vector<12x32xbf16>, vector<32x32xbf16>, vector<12x32xf32> -> vector<12x32xf32>
    %203 = arith.addf %200, %202 : vector<12x32xf32>
    %204 = vector.broadcast %65 : vector<1x32xf32> to vector<12x32xf32>
    %205 = arith.addf %203, %204 : vector<12x32xf32>
    %cst_81 = arith.constant 5.000000e-01 : f32
    %206 = vector.broadcast %cst_81 : f32 to vector<12x32xf32>
    %207 = arith.mulf %206, %205 : vector<12x32xf32>
    %208 = math.tanh %207 : vector<12x32xf32>
    %cst_82 = arith.constant 1.000000e+00 : f32
    %209 = vector.broadcast %cst_82 : f32 to vector<12x32xf32>
    %210 = arith.addf %208, %209 : vector<12x32xf32>
    %cst_83 = arith.constant 5.000000e-01 : f32
    %211 = vector.broadcast %cst_83 : f32 to vector<12x32xf32>
    %212 = arith.mulf %211, %210 : vector<12x32xf32>
    %213 = arith.mulf %205, %212 : vector<12x32xf32>
    %214 = tpu.concatenate %213, %189 in 1 : vector<12x32xf32>, vector<12x32xf32> -> vector<12x64xf32>
    %215 = arith.truncf %214 : vector<12x64xf32> to vector<12x64xbf16>
    %cst_84 = arith.constant dense<0.000000e+00> : vector<12x192xf32>
    %216 = tpu.matmul %215, %66, %cst_84 {dimension_numbers = #tpu.dot_dimension_numbers<[1], [0], [0], [1], [0, 0, 1, 1], [], []>} : vector<12x64xbf16>, vector<64x192xbf16>, vector<12x192xf32> -> vector<12x192xf32>
    %217 = vector.broadcast %67 : vector<1x192xf32> to vector<12x192xf32>
    %218 = arith.addf %216, %217 : vector<12x192xf32>
    %219 = vector.extract_strided_slice %218 {offsets = [0, 0], sizes = [12, 96], strides = [1, 1]} : vector<12x192xf32> to vector<12x96xf32>
    %220 = vector.extract_strided_slice %218 {offsets = [0, 96], sizes = [12, 96], strides = [1, 1]} : vector<12x192xf32> to vector<12x96xf32>
    %221 = vector.extract_strided_slice %219 {offsets = [0, 0], sizes = [12, 32], strides = [1, 1]} : vector<12x96xf32> to vector<12x32xf32>
    %222 = vector.extract_strided_slice %220 {offsets = [0, 0], sizes = [12, 32], strides = [1, 1]} : vector<12x96xf32> to vector<12x32xf32>
    %223 = arith.addf %221, %222 : vector<12x32xf32>
    %cst_85 = arith.constant 5.000000e-01 : f32
    %224 = vector.broadcast %cst_85 : f32 to vector<12x32xf32>
    %225 = arith.mulf %224, %223 : vector<12x32xf32>
    %226 = math.tanh %225 : vector<12x32xf32>
    %cst_86 = arith.constant 1.000000e+00 : f32
    %227 = vector.broadcast %cst_86 : f32 to vector<12x32xf32>
    %228 = arith.addf %226, %227 : vector<12x32xf32>
    %cst_87 = arith.constant 5.000000e-01 : f32
    %229 = vector.broadcast %cst_87 : f32 to vector<12x32xf32>
    %230 = arith.mulf %229, %228 : vector<12x32xf32>
    %231 = vector.extract_strided_slice %219 {offsets = [0, 32], sizes = [12, 32], strides = [1, 1]} : vector<12x96xf32> to vector<12x32xf32>
    %232 = vector.extract_strided_slice %220 {offsets = [0, 32], sizes = [12, 32], strides = [1, 1]} : vector<12x96xf32> to vector<12x32xf32>
    %233 = arith.addf %231, %232 : vector<12x32xf32>
    %cst_88 = arith.constant 5.000000e-01 : f32
    %234 = vector.broadcast %cst_88 : f32 to vector<12x32xf32>
    %235 = arith.mulf %234, %233 : vector<12x32xf32>
    %236 = math.tanh %235 : vector<12x32xf32>
    %cst_89 = arith.constant 1.000000e+00 : f32
    %237 = vector.broadcast %cst_89 : f32 to vector<12x32xf32>
    %238 = arith.addf %236, %237 : vector<12x32xf32>
    %cst_90 = arith.constant 5.000000e-01 : f32
    %239 = vector.broadcast %cst_90 : f32 to vector<12x32xf32>
    %240 = arith.mulf %239, %238 : vector<12x32xf32>
    %241 = vector.extract_strided_slice %219 {offsets = [0, 64], sizes = [12, 32], strides = [1, 1]} : vector<12x96xf32> to vector<12x32xf32>
    %242 = vector.extract_strided_slice %220 {offsets = [0, 64], sizes = [12, 32], strides = [1, 1]} : vector<12x96xf32> to vector<12x32xf32>
    %243 = arith.mulf %230, %242 : vector<12x32xf32>
    %244 = arith.addf %241, %243 : vector<12x32xf32>
    %245 = math.tanh %244 : vector<12x32xf32>
    %cst_91 = arith.constant 1.000000e+00 : f32
    %246 = vector.broadcast %cst_91 : f32 to vector<12x32xf32>
    %247 = arith.subf %246, %240 : vector<12x32xf32>
    %248 = arith.mulf %247, %245 : vector<12x32xf32>
    %249 = arith.mulf %240, %189 : vector<12x32xf32>
    %250 = arith.addf %248, %249 : vector<12x32xf32>
    %251 = arith.truncf %250 : vector<12x32xf32> to vector<12x32xbf16>
    %cst_92 = arith.constant dense<0.000000e+00> : vector<24x32xf32>
    %252 = tpu.matmul %6, %251, %cst_92 {dimension_numbers = #tpu.dot_dimension_numbers<[1], [0], [0], [1], [0, 0, 1, 1], [], []>} : vector<24x12xbf16>, vector<12x32xbf16>, vector<24x32xf32> -> vector<24x32xf32>
    %253 = arith.truncf %252 : vector<24x32xf32> to vector<24x32xbf16>
    %cst_93 = arith.constant dense<0.000000e+00> : vector<24x1024xf32>
    %254 = tpu.matmul %253, %62, %cst_93 {dimension_numbers = #tpu.dot_dimension_numbers<[1], [0], [0], [1], [0, 0, 1, 1], [], []>} : vector<24x32xbf16>, vector<32x1024xbf16>, vector<24x1024xf32> -> vector<24x1024xf32>
    %255 = arith.truncf %254 : vector<24x1024xf32> to vector<24x1024xbf16>
    %256 = arith.mulf %255, %61 : vector<24x1024xbf16>
    %cst_94 = arith.constant dense<0.000000e+00> : vector<24x32xf32>
    %257 = tpu.matmul %256, %63, %cst_94 {dimension_numbers = #tpu.dot_dimension_numbers<[1], [0], [0], [1], [0, 0, 1, 1], [], []>} : vector<24x1024xbf16>, vector<1024x32xbf16>, vector<24x32xf32> -> vector<24x32xf32>
    %258 = arith.truncf %257 : vector<24x32xf32> to vector<24x32xbf16>
    %cst_95 = arith.constant dense<0.000000e+00> : vector<12x32xf32>
    %259 = tpu.matmul %13, %258, %cst_95 {dimension_numbers = #tpu.dot_dimension_numbers<[1], [0], [0], [1], [0, 0, 1, 1], [], []>} : vector<12x24xbf16>, vector<24x32xbf16>, vector<12x32xf32> -> vector<12x32xf32>
    %260 = vector.broadcast %24 : vector<12x1xf32> to vector<12x32xf32>
    %261 = arith.mulf %259, %260 : vector<12x32xf32>
    %262 = arith.truncf %250 : vector<12x32xf32> to vector<12x32xbf16>
    %cst_96 = arith.constant dense<0.000000e+00> : vector<12x32xf32>
    %263 = tpu.matmul %262, %64, %cst_96 {dimension_numbers = #tpu.dot_dimension_numbers<[1], [0], [0], [1], [0, 0, 1, 1], [], []>} : vector<12x32xbf16>, vector<32x32xbf16>, vector<12x32xf32> -> vector<12x32xf32>
    %264 = arith.addf %261, %263 : vector<12x32xf32>
    %265 = vector.broadcast %65 : vector<1x32xf32> to vector<12x32xf32>
    %266 = arith.addf %264, %265 : vector<12x32xf32>
    %cst_97 = arith.constant 5.000000e-01 : f32
    %267 = vector.broadcast %cst_97 : f32 to vector<12x32xf32>
    %268 = arith.mulf %267, %266 : vector<12x32xf32>
    %269 = math.tanh %268 : vector<12x32xf32>
    %cst_98 = arith.constant 1.000000e+00 : f32
    %270 = vector.broadcast %cst_98 : f32 to vector<12x32xf32>
    %271 = arith.addf %269, %270 : vector<12x32xf32>
    %cst_99 = arith.constant 5.000000e-01 : f32
    %272 = vector.broadcast %cst_99 : f32 to vector<12x32xf32>
    %273 = arith.mulf %272, %271 : vector<12x32xf32>
    %274 = arith.mulf %266, %273 : vector<12x32xf32>
    %275 = tpu.concatenate %274, %250 in 1 : vector<12x32xf32>, vector<12x32xf32> -> vector<12x64xf32>
    %276 = arith.truncf %275 : vector<12x64xf32> to vector<12x64xbf16>
    %cst_100 = arith.constant dense<0.000000e+00> : vector<12x192xf32>
    %277 = tpu.matmul %276, %66, %cst_100 {dimension_numbers = #tpu.dot_dimension_numbers<[1], [0], [0], [1], [0, 0, 1, 1], [], []>} : vector<12x64xbf16>, vector<64x192xbf16>, vector<12x192xf32> -> vector<12x192xf32>
    %278 = vector.broadcast %67 : vector<1x192xf32> to vector<12x192xf32>
    %279 = arith.addf %277, %278 : vector<12x192xf32>
    %280 = vector.extract_strided_slice %279 {offsets = [0, 0], sizes = [12, 96], strides = [1, 1]} : vector<12x192xf32> to vector<12x96xf32>
    %281 = vector.extract_strided_slice %279 {offsets = [0, 96], sizes = [12, 96], strides = [1, 1]} : vector<12x192xf32> to vector<12x96xf32>
    %282 = vector.extract_strided_slice %280 {offsets = [0, 0], sizes = [12, 32], strides = [1, 1]} : vector<12x96xf32> to vector<12x32xf32>
    %283 = vector.extract_strided_slice %281 {offsets = [0, 0], sizes = [12, 32], strides = [1, 1]} : vector<12x96xf32> to vector<12x32xf32>
    %284 = arith.addf %282, %283 : vector<12x32xf32>
    %cst_101 = arith.constant 5.000000e-01 : f32
    %285 = vector.broadcast %cst_101 : f32 to vector<12x32xf32>
    %286 = arith.mulf %285, %284 : vector<12x32xf32>
    %287 = math.tanh %286 : vector<12x32xf32>
    %cst_102 = arith.constant 1.000000e+00 : f32
    %288 = vector.broadcast %cst_102 : f32 to vector<12x32xf32>
    %289 = arith.addf %287, %288 : vector<12x32xf32>
    %cst_103 = arith.constant 5.000000e-01 : f32
    %290 = vector.broadcast %cst_103 : f32 to vector<12x32xf32>
    %291 = arith.mulf %290, %289 : vector<12x32xf32>
    %292 = vector.extract_strided_slice %280 {offsets = [0, 32], sizes = [12, 32], strides = [1, 1]} : vector<12x96xf32> to vector<12x32xf32>
    %293 = vector.extract_strided_slice %281 {offsets = [0, 32], sizes = [12, 32], strides = [1, 1]} : vector<12x96xf32> to vector<12x32xf32>
    %294 = arith.addf %292, %293 : vector<12x32xf32>
    %cst_104 = arith.constant 5.000000e-01 : f32
    %295 = vector.broadcast %cst_104 : f32 to vector<12x32xf32>
    %296 = arith.mulf %295, %294 : vector<12x32xf32>
    %297 = math.tanh %296 : vector<12x32xf32>
    %cst_105 = arith.constant 1.000000e+00 : f32
    %298 = vector.broadcast %cst_105 : f32 to vector<12x32xf32>
    %299 = arith.addf %297, %298 : vector<12x32xf32>
    %cst_106 = arith.constant 5.000000e-01 : f32
    %300 = vector.broadcast %cst_106 : f32 to vector<12x32xf32>
    %301 = arith.mulf %300, %299 : vector<12x32xf32>
    %302 = vector.extract_strided_slice %280 {offsets = [0, 64], sizes = [12, 32], strides = [1, 1]} : vector<12x96xf32> to vector<12x32xf32>
    %303 = vector.extract_strided_slice %281 {offsets = [0, 64], sizes = [12, 32], strides = [1, 1]} : vector<12x96xf32> to vector<12x32xf32>
    %304 = arith.mulf %291, %303 : vector<12x32xf32>
    %305 = arith.addf %302, %304 : vector<12x32xf32>
    %306 = math.tanh %305 : vector<12x32xf32>
    %cst_107 = arith.constant 1.000000e+00 : f32
    %307 = vector.broadcast %cst_107 : f32 to vector<12x32xf32>
    %308 = arith.subf %307, %301 : vector<12x32xf32>
    %309 = arith.mulf %308, %306 : vector<12x32xf32>
    %310 = arith.mulf %301, %250 : vector<12x32xf32>
    %311 = arith.addf %309, %310 : vector<12x32xf32>
    %c0_108 = arith.constant 0 : index
    %c0_109 = arith.constant 0 : index
    %312 = vector.load %arg17[%c0_108, %c0_109] : memref<64x128xbf16, #tpu.memory_space<vmem>>, vector<64x128xbf16>
    %c0_110 = arith.constant 0 : index
    %c0_111 = arith.constant 0 : index
    %313 = vector.load %arg18[%c0_110, %c0_111] : memref<1x128xf32, #tpu.memory_space<vmem>>, vector<1x128xf32>
    %314 = arith.truncf %311 : vector<12x32xf32> to vector<12x32xbf16>
    %cst_112 = arith.constant 0.000000e+00 : f32
    %315 = vector.broadcast %cst_112 : f32 to vector<2x32xf32>
    %cst_113 = arith.constant 0.000000e+00 : f32
    %316 = vector.broadcast %cst_113 : f32 to vector<2x32xf32>
    %cst_114 = arith.constant 0.000000e+00 : f32
    %317 = vector.broadcast %cst_114 : f32 to vector<2x32xf32>
    %318 = tpu.concatenate %315, %316 in 1 : vector<2x32xf32>, vector<2x32xf32> -> vector<2x64xf32>
    %319 = arith.truncf %318 : vector<2x64xf32> to vector<2x64xbf16>
    %cst_115 = arith.constant dense<0.000000e+00> : vector<2x128xf32>
    %320 = tpu.matmul %319, %312, %cst_115 {dimension_numbers = #tpu.dot_dimension_numbers<[1], [0], [0], [1], [0, 0, 1, 1], [], []>} : vector<2x64xbf16>, vector<64x128xbf16>, vector<2x128xf32> -> vector<2x128xf32>
    %321 = vector.broadcast %313 : vector<1x128xf32> to vector<2x128xf32>
    %322 = arith.addf %320, %321 : vector<2x128xf32>
    %323 = vector.extract_strided_slice %322 {offsets = [0, 0], sizes = [2, 32], strides = [1, 1]} : vector<2x128xf32> to vector<2x32xf32>
    %cst_116 = arith.constant 5.000000e-01 : f32
    %324 = vector.broadcast %cst_116 : f32 to vector<2x32xf32>
    %325 = arith.mulf %324, %323 : vector<2x32xf32>
    %326 = math.tanh %325 : vector<2x32xf32>
    %cst_117 = arith.constant 1.000000e+00 : f32
    %327 = vector.broadcast %cst_117 : f32 to vector<2x32xf32>
    %328 = arith.addf %326, %327 : vector<2x32xf32>
    %cst_118 = arith.constant 5.000000e-01 : f32
    %329 = vector.broadcast %cst_118 : f32 to vector<2x32xf32>
    %330 = arith.mulf %329, %328 : vector<2x32xf32>
    %331 = vector.extract_strided_slice %322 {offsets = [0, 32], sizes = [2, 32], strides = [1, 1]} : vector<2x128xf32> to vector<2x32xf32>
    %cst_119 = arith.constant 5.000000e-01 : f32
    %332 = vector.broadcast %cst_119 : f32 to vector<2x32xf32>
    %333 = arith.mulf %332, %331 : vector<2x32xf32>
    %334 = math.tanh %333 : vector<2x32xf32>
    %cst_120 = arith.constant 1.000000e+00 : f32
    %335 = vector.broadcast %cst_120 : f32 to vector<2x32xf32>
    %336 = arith.addf %334, %335 : vector<2x32xf32>
    %cst_121 = arith.constant 5.000000e-01 : f32
    %337 = vector.broadcast %cst_121 : f32 to vector<2x32xf32>
    %338 = arith.mulf %337, %336 : vector<2x32xf32>
    %339 = vector.extract_strided_slice %322 {offsets = [0, 64], sizes = [2, 32], strides = [1, 1]} : vector<2x128xf32> to vector<2x32xf32>
    %340 = math.tanh %339 : vector<2x32xf32>
    %341 = vector.extract_strided_slice %322 {offsets = [0, 96], sizes = [2, 32], strides = [1, 1]} : vector<2x128xf32> to vector<2x32xf32>
    %cst_122 = arith.constant 5.000000e-01 : f32
    %342 = vector.broadcast %cst_122 : f32 to vector<2x32xf32>
    %343 = arith.mulf %342, %341 : vector<2x32xf32>
    %344 = math.tanh %343 : vector<2x32xf32>
    %cst_123 = arith.constant 1.000000e+00 : f32
    %345 = vector.broadcast %cst_123 : f32 to vector<2x32xf32>
    %346 = arith.addf %344, %345 : vector<2x32xf32>
    %cst_124 = arith.constant 5.000000e-01 : f32
    %347 = vector.broadcast %cst_124 : f32 to vector<2x32xf32>
    %348 = arith.mulf %347, %346 : vector<2x32xf32>
    %349 = arith.mulf %338, %317 : vector<2x32xf32>
    %350 = arith.mulf %330, %340 : vector<2x32xf32>
    %351 = arith.addf %349, %350 : vector<2x32xf32>
    %352 = math.tanh %351 : vector<2x32xf32>
    %353 = arith.mulf %348, %352 : vector<2x32xf32>
    %354 = arith.truncf %353 : vector<2x32xf32> to vector<2x32xbf16>
    %cst_125 = arith.constant dense<0.000000e+00> : vector<2x12xf32>
    %355 = tpu.matmul %354, %314, %cst_125 {dimension_numbers = #tpu.dot_dimension_numbers<[1], [1], [0], [0], [0, 0, 1, 0], [], []>} : vector<2x32xbf16>, vector<12x32xbf16>, vector<2x12xf32> -> vector<2x12xf32>
    %cst_126 = arith.constant -1.000000e+30 : f32
    %356 = vector.broadcast %cst_126 : f32 to vector<2x12xf32>
    %357 = arith.select %17, %355, %356 : vector<2x12xi1>, vector<2x12xf32>
    %cst_127 = arith.constant dense<0xFF800000> : vector<2xf32>
    %358 = vector.multi_reduction <maximumf>, %357, %cst_127 [1] : vector<2x12xf32> to vector<2xf32>
    %359 = vector.shape_cast %358 : vector<2xf32> to vector<2x1xf32>
    %360 = vector.broadcast %359 : vector<2x1xf32> to vector<2x12xf32>
    %361 = arith.subf %357, %360 : vector<2x12xf32>
    %362 = math.exp %361 : vector<2x12xf32>
    %cst_128 = arith.constant 0.000000e+00 : f32
    %363 = vector.broadcast %cst_128 : f32 to vector<2x12xf32>
    %364 = arith.select %17, %362, %363 : vector<2x12xi1>, vector<2x12xf32>
    %cst_129 = arith.constant dense<0.000000e+00> : vector<2xf32>
    %365 = vector.multi_reduction <add>, %364, %cst_129 [1] : vector<2x12xf32> to vector<2xf32>
    %366 = vector.shape_cast %365 : vector<2xf32> to vector<2x1xf32>
    %cst_130 = arith.constant 1.000000e-30 : f32
    %367 = vector.broadcast %cst_130 : f32 to vector<2x1xf32>
    %368 = arith.maximumf %366, %367 : vector<2x1xf32>
    %369 = vector.broadcast %368 : vector<2x1xf32> to vector<2x12xf32>
    %370 = arith.divf %364, %369 : vector<2x12xf32>
    %371 = arith.truncf %370 : vector<2x12xf32> to vector<2x12xbf16>
    %cst_131 = arith.constant dense<0.000000e+00> : vector<2x32xf32>
    %372 = tpu.matmul %371, %314, %cst_131 {dimension_numbers = #tpu.dot_dimension_numbers<[1], [0], [0], [1], [0, 0, 1, 1], [], []>} : vector<2x12xbf16>, vector<12x32xbf16>, vector<2x32xf32> -> vector<2x32xf32>
    %373 = tpu.concatenate %353, %372 in 1 : vector<2x32xf32>, vector<2x32xf32> -> vector<2x64xf32>
    %374 = arith.truncf %373 : vector<2x64xf32> to vector<2x64xbf16>
    %cst_132 = arith.constant dense<0.000000e+00> : vector<2x128xf32>
    %375 = tpu.matmul %374, %312, %cst_132 {dimension_numbers = #tpu.dot_dimension_numbers<[1], [0], [0], [1], [0, 0, 1, 1], [], []>} : vector<2x64xbf16>, vector<64x128xbf16>, vector<2x128xf32> -> vector<2x128xf32>
    %376 = vector.broadcast %313 : vector<1x128xf32> to vector<2x128xf32>
    %377 = arith.addf %375, %376 : vector<2x128xf32>
    %378 = vector.extract_strided_slice %377 {offsets = [0, 0], sizes = [2, 32], strides = [1, 1]} : vector<2x128xf32> to vector<2x32xf32>
    %cst_133 = arith.constant 5.000000e-01 : f32
    %379 = vector.broadcast %cst_133 : f32 to vector<2x32xf32>
    %380 = arith.mulf %379, %378 : vector<2x32xf32>
    %381 = math.tanh %380 : vector<2x32xf32>
    %cst_134 = arith.constant 1.000000e+00 : f32
    %382 = vector.broadcast %cst_134 : f32 to vector<2x32xf32>
    %383 = arith.addf %381, %382 : vector<2x32xf32>
    %cst_135 = arith.constant 5.000000e-01 : f32
    %384 = vector.broadcast %cst_135 : f32 to vector<2x32xf32>
    %385 = arith.mulf %384, %383 : vector<2x32xf32>
    %386 = vector.extract_strided_slice %377 {offsets = [0, 32], sizes = [2, 32], strides = [1, 1]} : vector<2x128xf32> to vector<2x32xf32>
    %cst_136 = arith.constant 5.000000e-01 : f32
    %387 = vector.broadcast %cst_136 : f32 to vector<2x32xf32>
    %388 = arith.mulf %387, %386 : vector<2x32xf32>
    %389 = math.tanh %388 : vector<2x32xf32>
    %cst_137 = arith.constant 1.000000e+00 : f32
    %390 = vector.broadcast %cst_137 : f32 to vector<2x32xf32>
    %391 = arith.addf %389, %390 : vector<2x32xf32>
    %cst_138 = arith.constant 5.000000e-01 : f32
    %392 = vector.broadcast %cst_138 : f32 to vector<2x32xf32>
    %393 = arith.mulf %392, %391 : vector<2x32xf32>
    %394 = vector.extract_strided_slice %377 {offsets = [0, 64], sizes = [2, 32], strides = [1, 1]} : vector<2x128xf32> to vector<2x32xf32>
    %395 = math.tanh %394 : vector<2x32xf32>
    %396 = vector.extract_strided_slice %377 {offsets = [0, 96], sizes = [2, 32], strides = [1, 1]} : vector<2x128xf32> to vector<2x32xf32>
    %cst_139 = arith.constant 5.000000e-01 : f32
    %397 = vector.broadcast %cst_139 : f32 to vector<2x32xf32>
    %398 = arith.mulf %397, %396 : vector<2x32xf32>
    %399 = math.tanh %398 : vector<2x32xf32>
    %cst_140 = arith.constant 1.000000e+00 : f32
    %400 = vector.broadcast %cst_140 : f32 to vector<2x32xf32>
    %401 = arith.addf %399, %400 : vector<2x32xf32>
    %cst_141 = arith.constant 5.000000e-01 : f32
    %402 = vector.broadcast %cst_141 : f32 to vector<2x32xf32>
    %403 = arith.mulf %402, %401 : vector<2x32xf32>
    %404 = arith.mulf %393, %351 : vector<2x32xf32>
    %405 = arith.mulf %385, %395 : vector<2x32xf32>
    %406 = arith.addf %404, %405 : vector<2x32xf32>
    %407 = math.tanh %406 : vector<2x32xf32>
    %408 = arith.mulf %403, %407 : vector<2x32xf32>
    %409 = arith.truncf %408 : vector<2x32xf32> to vector<2x32xbf16>
    %cst_142 = arith.constant dense<0.000000e+00> : vector<2x12xf32>
    %410 = tpu.matmul %409, %314, %cst_142 {dimension_numbers = #tpu.dot_dimension_numbers<[1], [1], [0], [0], [0, 0, 1, 0], [], []>} : vector<2x32xbf16>, vector<12x32xbf16>, vector<2x12xf32> -> vector<2x12xf32>
    %cst_143 = arith.constant -1.000000e+30 : f32
    %411 = vector.broadcast %cst_143 : f32 to vector<2x12xf32>
    %412 = arith.select %17, %410, %411 : vector<2x12xi1>, vector<2x12xf32>
    %cst_144 = arith.constant dense<0xFF800000> : vector<2xf32>
    %413 = vector.multi_reduction <maximumf>, %412, %cst_144 [1] : vector<2x12xf32> to vector<2xf32>
    %414 = vector.shape_cast %413 : vector<2xf32> to vector<2x1xf32>
    %415 = vector.broadcast %414 : vector<2x1xf32> to vector<2x12xf32>
    %416 = arith.subf %412, %415 : vector<2x12xf32>
    %417 = math.exp %416 : vector<2x12xf32>
    %cst_145 = arith.constant 0.000000e+00 : f32
    %418 = vector.broadcast %cst_145 : f32 to vector<2x12xf32>
    %419 = arith.select %17, %417, %418 : vector<2x12xi1>, vector<2x12xf32>
    %cst_146 = arith.constant dense<0.000000e+00> : vector<2xf32>
    %420 = vector.multi_reduction <add>, %419, %cst_146 [1] : vector<2x12xf32> to vector<2xf32>
    %421 = vector.shape_cast %420 : vector<2xf32> to vector<2x1xf32>
    %cst_147 = arith.constant 1.000000e-30 : f32
    %422 = vector.broadcast %cst_147 : f32 to vector<2x1xf32>
    %423 = arith.maximumf %421, %422 : vector<2x1xf32>
    %424 = vector.broadcast %423 : vector<2x1xf32> to vector<2x12xf32>
    %425 = arith.divf %419, %424 : vector<2x12xf32>
    %426 = arith.truncf %425 : vector<2x12xf32> to vector<2x12xbf16>
    %cst_148 = arith.constant dense<0.000000e+00> : vector<2x32xf32>
    %427 = tpu.matmul %426, %314, %cst_148 {dimension_numbers = #tpu.dot_dimension_numbers<[1], [0], [0], [1], [0, 0, 1, 1], [], []>} : vector<2x12xbf16>, vector<12x32xbf16>, vector<2x32xf32> -> vector<2x32xf32>
    %428 = tpu.concatenate %408, %427 in 1 : vector<2x32xf32>, vector<2x32xf32> -> vector<2x64xf32>
    %429 = arith.truncf %428 : vector<2x64xf32> to vector<2x64xbf16>
    %cst_149 = arith.constant dense<0.000000e+00> : vector<2x128xf32>
    %430 = tpu.matmul %429, %312, %cst_149 {dimension_numbers = #tpu.dot_dimension_numbers<[1], [0], [0], [1], [0, 0, 1, 1], [], []>} : vector<2x64xbf16>, vector<64x128xbf16>, vector<2x128xf32> -> vector<2x128xf32>
    %431 = vector.broadcast %313 : vector<1x128xf32> to vector<2x128xf32>
    %432 = arith.addf %430, %431 : vector<2x128xf32>
    %433 = vector.extract_strided_slice %432 {offsets = [0, 0], sizes = [2, 32], strides = [1, 1]} : vector<2x128xf32> to vector<2x32xf32>
    %cst_150 = arith.constant 5.000000e-01 : f32
    %434 = vector.broadcast %cst_150 : f32 to vector<2x32xf32>
    %435 = arith.mulf %434, %433 : vector<2x32xf32>
    %436 = math.tanh %435 : vector<2x32xf32>
    %cst_151 = arith.constant 1.000000e+00 : f32
    %437 = vector.broadcast %cst_151 : f32 to vector<2x32xf32>
    %438 = arith.addf %436, %437 : vector<2x32xf32>
    %cst_152 = arith.constant 5.000000e-01 : f32
    %439 = vector.broadcast %cst_152 : f32 to vector<2x32xf32>
    %440 = arith.mulf %439, %438 : vector<2x32xf32>
    %441 = vector.extract_strided_slice %432 {offsets = [0, 32], sizes = [2, 32], strides = [1, 1]} : vector<2x128xf32> to vector<2x32xf32>
    %cst_153 = arith.constant 5.000000e-01 : f32
    %442 = vector.broadcast %cst_153 : f32 to vector<2x32xf32>
    %443 = arith.mulf %442, %441 : vector<2x32xf32>
    %444 = math.tanh %443 : vector<2x32xf32>
    %cst_154 = arith.constant 1.000000e+00 : f32
    %445 = vector.broadcast %cst_154 : f32 to vector<2x32xf32>
    %446 = arith.addf %444, %445 : vector<2x32xf32>
    %cst_155 = arith.constant 5.000000e-01 : f32
    %447 = vector.broadcast %cst_155 : f32 to vector<2x32xf32>
    %448 = arith.mulf %447, %446 : vector<2x32xf32>
    %449 = vector.extract_strided_slice %432 {offsets = [0, 64], sizes = [2, 32], strides = [1, 1]} : vector<2x128xf32> to vector<2x32xf32>
    %450 = math.tanh %449 : vector<2x32xf32>
    %451 = vector.extract_strided_slice %432 {offsets = [0, 96], sizes = [2, 32], strides = [1, 1]} : vector<2x128xf32> to vector<2x32xf32>
    %cst_156 = arith.constant 5.000000e-01 : f32
    %452 = vector.broadcast %cst_156 : f32 to vector<2x32xf32>
    %453 = arith.mulf %452, %451 : vector<2x32xf32>
    %454 = math.tanh %453 : vector<2x32xf32>
    %cst_157 = arith.constant 1.000000e+00 : f32
    %455 = vector.broadcast %cst_157 : f32 to vector<2x32xf32>
    %456 = arith.addf %454, %455 : vector<2x32xf32>
    %cst_158 = arith.constant 5.000000e-01 : f32
    %457 = vector.broadcast %cst_158 : f32 to vector<2x32xf32>
    %458 = arith.mulf %457, %456 : vector<2x32xf32>
    %459 = arith.mulf %448, %406 : vector<2x32xf32>
    %460 = arith.mulf %440, %450 : vector<2x32xf32>
    %461 = arith.addf %459, %460 : vector<2x32xf32>
    %462 = math.tanh %461 : vector<2x32xf32>
    %463 = arith.mulf %458, %462 : vector<2x32xf32>
    %464 = arith.truncf %463 : vector<2x32xf32> to vector<2x32xbf16>
    %cst_159 = arith.constant dense<0.000000e+00> : vector<2x12xf32>
    %465 = tpu.matmul %464, %314, %cst_159 {dimension_numbers = #tpu.dot_dimension_numbers<[1], [1], [0], [0], [0, 0, 1, 0], [], []>} : vector<2x32xbf16>, vector<12x32xbf16>, vector<2x12xf32> -> vector<2x12xf32>
    %cst_160 = arith.constant -1.000000e+30 : f32
    %466 = vector.broadcast %cst_160 : f32 to vector<2x12xf32>
    %467 = arith.select %17, %465, %466 : vector<2x12xi1>, vector<2x12xf32>
    %cst_161 = arith.constant dense<0xFF800000> : vector<2xf32>
    %468 = vector.multi_reduction <maximumf>, %467, %cst_161 [1] : vector<2x12xf32> to vector<2xf32>
    %469 = vector.shape_cast %468 : vector<2xf32> to vector<2x1xf32>
    %470 = vector.broadcast %469 : vector<2x1xf32> to vector<2x12xf32>
    %471 = arith.subf %467, %470 : vector<2x12xf32>
    %472 = math.exp %471 : vector<2x12xf32>
    %cst_162 = arith.constant 0.000000e+00 : f32
    %473 = vector.broadcast %cst_162 : f32 to vector<2x12xf32>
    %474 = arith.select %17, %472, %473 : vector<2x12xi1>, vector<2x12xf32>
    %cst_163 = arith.constant dense<0.000000e+00> : vector<2xf32>
    %475 = vector.multi_reduction <add>, %474, %cst_163 [1] : vector<2x12xf32> to vector<2xf32>
    %476 = vector.shape_cast %475 : vector<2xf32> to vector<2x1xf32>
    %cst_164 = arith.constant 1.000000e-30 : f32
    %477 = vector.broadcast %cst_164 : f32 to vector<2x1xf32>
    %478 = arith.maximumf %476, %477 : vector<2x1xf32>
    %479 = vector.broadcast %478 : vector<2x1xf32> to vector<2x12xf32>
    %480 = arith.divf %474, %479 : vector<2x12xf32>
    %481 = arith.truncf %480 : vector<2x12xf32> to vector<2x12xbf16>
    %cst_165 = arith.constant dense<0.000000e+00> : vector<2x32xf32>
    %482 = tpu.matmul %481, %314, %cst_165 {dimension_numbers = #tpu.dot_dimension_numbers<[1], [0], [0], [1], [0, 0, 1, 1], [], []>} : vector<2x12xbf16>, vector<12x32xbf16>, vector<2x32xf32> -> vector<2x32xf32>
    %483 = tpu.concatenate %463, %482 in 1 : vector<2x32xf32>, vector<2x32xf32> -> vector<2x64xf32>
    %c0_166 = arith.constant 0 : index
    %c0_167 = arith.constant 0 : index
    %484 = vector.load %arg19[%c0_166, %c0_167] : memref<64x32xbf16, #tpu.memory_space<vmem>>, vector<64x32xbf16>
    %485 = arith.truncf %483 : vector<2x64xf32> to vector<2x64xbf16>
    %cst_168 = arith.constant dense<0.000000e+00> : vector<2x32xf32>
    %486 = tpu.matmul %485, %484, %cst_168 {dimension_numbers = #tpu.dot_dimension_numbers<[1], [0], [0], [1], [0, 0, 1, 1], [], []>} : vector<2x64xbf16>, vector<64x32xbf16>, vector<2x32xf32> -> vector<2x32xf32>
    %c0_169 = arith.constant 0 : index
    %c0_170 = arith.constant 0 : index
    %487 = vector.load %arg20[%c0_169, %c0_170] : memref<1x32xf32, #tpu.memory_space<vmem>>, vector<1x32xf32>
    %488 = vector.broadcast %487 : vector<1x32xf32> to vector<2x32xf32>
    %489 = arith.addf %486, %488 : vector<2x32xf32>
    %cst_171 = arith.constant 5.000000e-01 : f32
    %490 = vector.broadcast %cst_171 : f32 to vector<2x32xf32>
    %491 = arith.mulf %490, %489 : vector<2x32xf32>
    %492 = math.tanh %491 : vector<2x32xf32>
    %cst_172 = arith.constant 1.000000e+00 : f32
    %493 = vector.broadcast %cst_172 : f32 to vector<2x32xf32>
    %494 = arith.addf %492, %493 : vector<2x32xf32>
    %cst_173 = arith.constant 5.000000e-01 : f32
    %495 = vector.broadcast %cst_173 : f32 to vector<2x32xf32>
    %496 = arith.mulf %495, %494 : vector<2x32xf32>
    %497 = arith.mulf %489, %496 : vector<2x32xf32>
    %c0_174 = arith.constant 0 : index
    %c0_175 = arith.constant 0 : index
    %498 = vector.load %arg21[%c0_174, %c0_175] : memref<32x1xbf16, #tpu.memory_space<vmem>>, vector<32x1xbf16>
    %499 = arith.truncf %497 : vector<2x32xf32> to vector<2x32xbf16>
    %cst_176 = arith.constant dense<0.000000e+00> : vector<2x1xf32>
    %500 = tpu.matmul %499, %498, %cst_176 {dimension_numbers = #tpu.dot_dimension_numbers<[1], [0], [0], [1], [0, 0, 1, 1], [], []>} : vector<2x32xbf16>, vector<32x1xbf16>, vector<2x1xf32> -> vector<2x1xf32>
    %c0_177 = arith.constant 0 : index
    %c0_178 = arith.constant 0 : index
    %501 = vector.load %arg22[%c0_177, %c0_178] : memref<1x1xf32, #tpu.memory_space<vmem>>, vector<1x1xf32>
    %502 = vector.broadcast %501 : vector<1x1xf32> to vector<2x1xf32>
    %503 = arith.addf %500, %502 : vector<2x1xf32>
    %c0_179 = arith.constant 0 : index
    %c0_180 = arith.constant 0 : index
    %504 = vector.load %arg23[%c0_179, %c0_180] : memref<2x1xf32, #tpu.memory_space<vmem>>, vector<2x1xf32>
    tpu.vector_store %arg23[%c0_179, %c0_180], %503 {strides = array<i32>} : memref<2x1xf32, #tpu.memory_space<vmem>>, vector<2x1xf32>,
    return
  }
}

</mosaic_0001>

<llo_original>
// kernel: _gnn_forward_jit.1
$region0: #{_gnn_forward_jit.1}
  #allocation0 [shape = 'u32[]', space=smem, size = 0x4, offset = 0x4, fixed_abs, tag = 'smem constant byte address 0x4 - core index']
  #allocation1 [shape = 'u32[72,128]{1,0:T(1,128)}', space=vmem, size = 0x9000, scoped, tag = 'internal scratch']
  #allocation2 [shape = 'f32[1,1]{1,0:T(1,128)S(1)}', space=vmem, size = 0x200, scoped, tag = 'scoped memory for _gnn_forward_jit.1']
  %s0 = inlined_call_operand.vmem [shape: f32[12,11], index: 0, kind: input, shape index: {}]
  %s1 = inlined_call_operand.vmem [shape: f32[24,4], index: 1, kind: input, shape index: {}]
  %s2 = inlined_call_operand.vmem [shape: s32[24,1], index: 2, kind: input, shape index: {}]
  %s3 = inlined_call_operand.vmem [shape: s32[1,24], index: 3, kind: input, shape index: {}]
  %s4 = inlined_call_operand.vmem [shape: s32[1,12], index: 4, kind: input, shape index: {}]
  %s5 = inlined_call_operand.vmem [shape: bf16[32,1024], index: 5, kind: input, shape index: {}]
  %s6 = inlined_call_operand.vmem [shape: bf16[1024,32], index: 6, kind: input, shape index: {}]
  %s7 = inlined_call_operand.vmem [shape: bf16[11,32], index: 7, kind: input, shape index: {}]
  %s8 = inlined_call_operand.vmem [shape: f32[1,32], index: 8, kind: input, shape index: {}]
  %s9 = inlined_call_operand.vmem [shape: bf16[4,64], index: 9, kind: input, shape index: {}]
  %s10 = inlined_call_operand.vmem [shape: f32[1,64], index: 10, kind: input, shape index: {}]
  %s11 = inlined_call_operand.vmem [shape: bf16[64,1024], index: 11, kind: input, shape index: {}]
  %s12 = inlined_call_operand.vmem [shape: f32[1,1024], index: 12, kind: input, shape index: {}]
  %s13 = inlined_call_operand.vmem [shape: bf16[32,32], index: 13, kind: input, shape index: {}]
  %s14 = inlined_call_operand.vmem [shape: f32[1,32], index: 14, kind: input, shape index: {}]
  %s15 = inlined_call_operand.vmem [shape: bf16[64,192], index: 15, kind: input, shape index: {}]
  %s16 = inlined_call_operand.vmem [shape: f32[1,192], index: 16, kind: input, shape index: {}]
  %s17 = inlined_call_operand.vmem [shape: bf16[64,128], index: 17, kind: input, shape index: {}]
  %s18 = inlined_call_operand.vmem [shape: f32[1,128], index: 18, kind: input, shape index: {}]
  %s19 = inlined_call_operand.vmem [shape: bf16[64,32], index: 19, kind: input, shape index: {}]
  %s20 = inlined_call_operand.vmem [shape: f32[1,32], index: 20, kind: input, shape index: {}]
  %s21 = inlined_call_operand.vmem [shape: bf16[32,1], index: 21, kind: input, shape index: {}]
  %s22 = inlined_call_operand.<no memory space> [shape: f32[1,1], index: 22, kind: input, shape index: {}]
  %s23 = inlined_call_operand.vmem [shape: f32[2,1], index: 23, kind: output, shape index: {}]
  %s24 = sld [smem:[#allocation0]]
  $region102: #{_gnn_forward_jit.1} parent=0
    _
  %s26 = ssub.s32 1, %s24
  %s27 = scalar_select 0, %s26, %s24
  %v28 = vstv %s22
  %29 = vst [vmem:[#allocation2] sm:$0x1] %v28
  // Predicated region
  $region2: #{_gnn_forward_jit.1} parent=0 // pred_check
    _
  $region3: #{_gnn_forward_jit.1} parent=0 // pred_check_branch
    %31 = sbr.rel (0) target = $region5
  $region4: #{_gnn_forward_jit.1} parent=0 // pred_region
    _
  $region5: #{_gnn_forward_jit.1} parent=0 // pred_fallthru
    _
  // Predicated region
  $region6: #{_gnn_forward_jit.1} parent=0 // pred_check
    _
  $region7: #{_gnn_forward_jit.1} parent=0 // pred_check_branch
    %33 = sbr.rel (0) target = $region9
  $region8: #{_gnn_forward_jit.1} parent=0 // pred_region
    _
  $region9: #{_gnn_forward_jit.1} parent=0 // pred_fallthru
    _
  // Predicated region
  $region10: #{_gnn_forward_jit.1} parent=0 // pred_check
    _
  $region11: #{_gnn_forward_jit.1} parent=0 // pred_check_branch
    %35 = sbr.rel (0) target = $region13
  $region12: #{_gnn_forward_jit.1} parent=0 // pred_region
    _
  $region13: #{_gnn_forward_jit.1} parent=0 // pred_fallthru
    _
  // Predicated region
  $region14: #{_gnn_forward_jit.1} parent=0 // pred_check
    _
  $region15: #{_gnn_forward_jit.1} parent=0 // pred_check_branch
    %37 = sbr.rel (0) target = $region17
  $region16: #{_gnn_forward_jit.1} parent=0 // pred_region
    _
  $region17: #{_gnn_forward_jit.1} parent=0 // pred_fallthru
    _
  // Predicated region
  $region18: #{_gnn_forward_jit.1} parent=0 // pred_check
    _
  $region19: #{_gnn_forward_jit.1} parent=0 // pred_check_branch
    %39 = sbr.rel (0) target = $region21
  $region20: #{_gnn_forward_jit.1} parent=0 // pred_region
    _
  $region21: #{_gnn_forward_jit.1} parent=0 // pred_fallthru
    _
  // Predicated region
  $region22: #{_gnn_forward_jit.1} parent=0 // pred_check
    _
  $region23: #{_gnn_forward_jit.1} parent=0 // pred_check_branch
    %41 = sbr.rel (0) target = $region25
  $region24: #{_gnn_forward_jit.1} parent=0 // pred_region
    _
  $region25: #{_gnn_forward_jit.1} parent=0 // pred_fallthru
    _
  // Predicated region
  $region26: #{_gnn_forward_jit.1} parent=0 // pred_check
    _
  $region27: #{_gnn_forward_jit.1} parent=0 // pred_check_branch
    %43 = sbr.rel (0) target = $region29
  $region28: #{_gnn_forward_jit.1} parent=0 // pred_region
    _
  $region29: #{_gnn_forward_jit.1} parent=0 // pred_fallthru
    _
  // Predicated region
  $region30: #{_gnn_forward_jit.1} parent=0 // pred_check
    _
  $region31: #{_gnn_forward_jit.1} parent=0 // pred_check_branch
    %45 = sbr.rel (0) target = $region33
  $region32: #{_gnn_forward_jit.1} parent=0 // pred_region
    _
  $region33: #{_gnn_forward_jit.1} parent=0 // pred_fallthru
    _
  // Predicated region
  $region34: #{_gnn_forward_jit.1} parent=0 // pred_check
    _
  $region35: #{_gnn_forward_jit.1} parent=0 // pred_check_branch
    %47 = sbr.rel (0) target = $region37
  $region36: #{_gnn_forward_jit.1} parent=0 // pred_region
    _
  $region37: #{_gnn_forward_jit.1} parent=0 // pred_fallthru
    _
  // Predicated region
  $region38: #{_gnn_forward_jit.1} parent=0 // pred_check
    _
  $region39: #{_gnn_forward_jit.1} parent=0 // pred_check_branch
    %49 = sbr.rel (0) target = $region41
  $region40: #{_gnn_forward_jit.1} parent=0 // pred_region
    _
  $region41: #{_gnn_forward_jit.1} parent=0 // pred_fallthru
    _
  // Predicated region
  $region42: #{_gnn_forward_jit.1} parent=0 // pred_check
    _
  $region43: #{_gnn_forward_jit.1} parent=0 // pred_check_branch
    %51 = sbr.rel (0) target = $region45
  $region44: #{_gnn_forward_jit.1} parent=0 // pred_region
    _
  $region45: #{_gnn_forward_jit.1} parent=0 // pred_fallthru
    _
  // Predicated region
  $region46: #{_gnn_forward_jit.1} parent=0 // pred_check
    _
  $region47: #{_gnn_forward_jit.1} parent=0 // pred_check_branch
    %53 = sbr.rel (0) target = $region49
  $region48: #{_gnn_forward_jit.1} parent=0 // pred_region
    _
  $region49: #{_gnn_forward_jit.1} parent=0 // pred_fallthru
    _
  // Predicated region
  $region50: #{_gnn_forward_jit.1} parent=0 // pred_check
    _
  $region51: #{_gnn_forward_jit.1} parent=0 // pred_check_branch
    %55 = sbr.rel (0) target = $region53
  $region52: #{_gnn_forward_jit.1} parent=0 // pred_region
    _
  $region53: #{_gnn_forward_jit.1} parent=0 // pred_fallthru
    _
  // Predicated region
  $region54: #{_gnn_forward_jit.1} parent=0 // pred_check
    _
  $region55: #{_gnn_forward_jit.1} parent=0 // pred_check_branch
    %57 = sbr.rel (0) target = $region57
  $region56: #{_gnn_forward_jit.1} parent=0 // pred_region
    _
  $region57: #{_gnn_forward_jit.1} parent=0 // pred_fallthru
    _
  // Predicated region
  $region58: #{_gnn_forward_jit.1} parent=0 // pred_check
    _
  $region59: #{_gnn_forward_jit.1} parent=0 // pred_check_branch
    %59 = sbr.rel (0) target = $region61
  $region60: #{_gnn_forward_jit.1} parent=0 // pred_region
    _
  $region61: #{_gnn_forward_jit.1} parent=0 // pred_fallthru
    _
  // Predicated region
  $region62: #{_gnn_forward_jit.1} parent=0 // pred_check
    _
  $region63: #{_gnn_forward_jit.1} parent=0 // pred_check_branch
    %61 = sbr.rel (0) target = $region65
  $region64: #{_gnn_forward_jit.1} parent=0 // pred_region
    _
  $region65: #{_gnn_forward_jit.1} parent=0 // pred_fallthru
    _
  // Predicated region
  $region66: #{_gnn_forward_jit.1} parent=0 // pred_check
    _
  $region67: #{_gnn_forward_jit.1} parent=0 // pred_check_branch
    %63 = sbr.rel (0) target = $region69
  $region68: #{_gnn_forward_jit.1} parent=0 // pred_region
    _
  $region69: #{_gnn_forward_jit.1} parent=0 // pred_fallthru
    _
  // Predicated region
  $region70: #{_gnn_forward_jit.1} parent=0 // pred_check
    _
  $region71: #{_gnn_forward_jit.1} parent=0 // pred_check_branch
    %65 = sbr.rel (0) target = $region73
  $region72: #{_gnn_forward_jit.1} parent=0 // pred_region
    _
  $region73: #{_gnn_forward_jit.1} parent=0 // pred_fallthru
    _
  // Predicated region
  $region74: #{_gnn_forward_jit.1} parent=0 // pred_check
    _
  $region75: #{_gnn_forward_jit.1} parent=0 // pred_check_branch
    %67 = sbr.rel (0) target = $region77
  $region76: #{_gnn_forward_jit.1} parent=0 // pred_region
    _
  $region77: #{_gnn_forward_jit.1} parent=0 // pred_fallthru
    _
  // Predicated region
  $region78: #{_gnn_forward_jit.1} parent=0 // pred_check
    _
  $region79: #{_gnn_forward_jit.1} parent=0 // pred_check_branch
    %69 = sbr.rel (0) target = $region81
  $region80: #{_gnn_forward_jit.1} parent=0 // pred_region
    _
  $region81: #{_gnn_forward_jit.1} parent=0 // pred_fallthru
    _
  // Predicated region
  $region82: #{_gnn_forward_jit.1} parent=0 // pred_check
    _
  $region83: #{_gnn_forward_jit.1} parent=0 // pred_check_branch
    %71 = sbr.rel (0) target = $region85
  $region84: #{_gnn_forward_jit.1} parent=0 // pred_region
    _
  $region85: #{_gnn_forward_jit.1} parent=0 // pred_fallthru
    _
  // Predicated region
  $region86: #{_gnn_forward_jit.1} parent=0 // pred_check
    _
  $region87: #{_gnn_forward_jit.1} parent=0 // pred_check_branch
    %73 = sbr.rel (0) target = $region89
  $region88: #{_gnn_forward_jit.1} parent=0 // pred_region
    _
  $region89: #{_gnn_forward_jit.1} parent=0 // pred_fallthru
    _
  // Predicated region
  $region90: #{_gnn_forward_jit.1} parent=0 // pred_check
    _
  $region91: #{_gnn_forward_jit.1} parent=0 // pred_check_branch
    %75 = sbr.rel (0) target = $region93
  $region92: #{_gnn_forward_jit.1} parent=0 // pred_region
    _
  $region93: #{_gnn_forward_jit.1} parent=0 // pred_fallthru
    _
  %v77 = vlaneseq
  %v78 = vand.u32 %v77, 127
  %v79 = vld [vmem:[%s2] sm:$0xff]
  %v80 = vld [vmem:[%s2 + $0x8] sm:$0xff]
  %v81 = vld [vmem:[%s2 + $0x10] sm:$0xff]
  %82 = vset.pattern.permute.xlu0 0
  %83 = vperm.xlu0 %82, %v79
  %v84 = vpop.permute.xlu0 %83
  %85 = vset.pattern.permute.xlu0 0
  %86 = vperm.xlu0 %85, %v80
  %v87 = vpop.permute.xlu0 %86
  %88 = vset.pattern.permute.xlu0 0
  %89 = vperm.xlu0 %88, %v81
  %v90 = vpop.permute.xlu0 %89
  %vm91 = vcmp.eq.s32.totalorder %v78, %v84
  %vm92 = vcmp.eq.s32.totalorder %v78, %v87
  %vm93 = vcmp.eq.s32.totalorder %v78, %v90
  %v94 = vsel %vm91, 1, 0
  %v95 = vsel %vm92, 1, 0
  %v96 = vsel %vm93, 1, 0
  %v97 = vcvt.s32.f32 %v94
  %v98 = vcvt.s32.f32 %v95
  %v99 = vcvt.s32.f32 %v96
  %v100 = vpack.c.bf16 %v98, %v97
  %v101 = vpack.c.bf16 %v99, %v99
  %v102 = vlaneseq
  %v103 = vshrl.u32 %v102, 7
  %v104 = vadd.s32 %v103, 8
  %v105 = vld [vmem:[%s3] sm:$0x1]
  %v106 = vperm.slane %v105, 0
  %vm107 = vcmp.eq.s32.totalorder %v103, %v106
  %vm108 = vcmp.eq.s32.totalorder %v104, %v106
  %v109 = vsel %vm107, 1, 0
  %v110 = vsel %vm108, 1, 0
  %v111 = vcvt.s32.f32 %v109
  %v112 = vcvt.s32.f32 %v110
  %v113 = vpack.c.bf16 %v112, %v111
  %v114 = vld [vmem:[%s4] sm:$0x1]
  %v115 = vperm.slane %v114, 0
  %vm116 = vcmp.eq.s32.totalorder %v103, %v115
  %v117 = vunpack.c.l.bf16 %v113
  %v118 = vunpack.c.h.bf16 %v113
  %vm119 = vcmask 195584
  %v120 = vsel %vm119, %v117, 0.0
  %121 = vadd.xlane.f32.xlu0 %v120
  %v122 = vpop.xlane.xlu0 %121
  %vm123 = vcmask 191488
  %v124 = vsel %vm123, %v118, 0.0
  %125 = vadd.xlane.f32.xlu0 %v124
  %v126 = vpop.xlane.xlu0 %125
  %v127 = vmax.f32 %v122, 1.0
  %v128 = vmax.f32 %v126, 1.0
  %v129 = vrcp.pop %v127
  %v130 = vmul.f32 %v127, %v129
  %v131 = vsub.f32 1.0, %v130
  %v132 = vmul.f32 %v129, %v131
  %v133 = vadd.f32 %v129, %v132
  %vm134 = vweird.f32 %v127
  %vm135 = vweird.f32 %v129
  %vm136 = vmor %vm134, %vm135
  %v137 = vsel %vm136, %v129, %v133
  %v138 = vand.u32 2147483647, %v127
  %vm139 = vcmp.eq.f32.partialorder %v138, 8.507059e+37
  %v140 = vand.u32 %v127, 2147483648
  %v141 = vor.u32 1.1754944e-38, %v140
  %v142 = vsel %vm139, %v141, %v137
  %v143 = vmul.f32 1.0, %v142
  %v144 = vrcp.pop %v128
  %v145 = vmul.f32 %v128, %v144
  %v146 = vsub.f32 1.0, %v145
  %v147 = vmul.f32 %v144, %v146
  %v148 = vadd.f32 %v144, %v147
  %vm149 = vweird.f32 %v128
  %vm150 = vweird.f32 %v144
  %vm151 = vmor %vm149, %vm150
  %v152 = vsel %vm151, %v144, %v148
  %v153 = vand.u32 2147483647, %v128
  %vm154 = vcmp.eq.f32.partialorder %v153, 8.507059e+37
  %v155 = vand.u32 %v128, 2147483648
  %v156 = vor.u32 1.1754944e-38, %v155
  %v157 = vsel %vm154, %v156, %v152
  %v158 = vmul.f32 1.0, %v157
  %v159 = vld [vmem:[%s0] sm:$0xff]
  %v160 = vld [vmem:[%s0 + $0x8] sm:$0xf]
  %v161 = vld [vmem:[%s7] sm:$0xf]
  %v162 = vld [vmem:[%s7 + $0x4] sm:$0x3]
  %v163 = vpack.c.bf16 %v160, %v159
  %v164 = vld [vmem:[%s8] sm:$0x1]
  %v166 = vperm.slane %v164, 0
  %v170 = vunpack.c.l.b16 %v161
  %v171 = vunpack.c.l.b16 %v162
  %v172 = vpack.c.b16 %v171, %v170
  %vm173 = vcmask 89088
  %v175 = vsel %vm173, %v163, 0
  %vm177 = vcmask 1044480
  %vm178 = vcmask 1045504
  %v179 = vsel %vm177, 4294967295, 65535
  %v180 = vsel %vm178, %v179, 0
  %v182 = vand.u32 %v172, %v180
  %184 = vmatpush.bf16.msra.mxu0 0
  %185 = vmatpush.bf16.msra.mxu0 0
  %186 = vmatpush.bf16.msra.mxu0 0
  %187 = vmatpush.bf16.msra.mxu0 0
  %188 = vmatpush.bf16.msra.mxu0 0
  %189 = vmatpush.bf16.msra.mxu0 0
  %190 = vmatpush.bf16.msra.mxu0 0
  %191 = vmatpush.bf16.msra.mxu0 %v182
  %192 = vmatmul.bf16.gmra.mxu0 %v175
  %v193 = vpop.f32.mrf.mxu0
  %v194 = vadd.f32 %v166, %v193
  %v195 = vpop.f32.mrf.mxu0
  %v196 = vadd.f32 %v166, %v195
  %197 = vdwg.mxu0
  %v198 = vmul.f32 %v194, 0.5
  %v199 = vmul.f32 %v196, 0.5
  %v200 = vtanh.pop %v198
  %v201 = vtanh.pop %v199
  %v202 = vadd.f32 %v200, 1.0
  %v203 = vadd.f32 %v201, 1.0
  %v204 = vmul.f32 %v202, 0.5
  %v205 = vmul.f32 %v203, 0.5
  %v206 = vmul.f32 %v194, %v204
  %v207 = vmul.f32 %v196, %v205
  %v208 = vld [vmem:[%s1] sm:$0xff]
  %v209 = vld [vmem:[%s1 + $0x8] sm:$0xff]
  %v210 = vld [vmem:[%s1 + $0x10] sm:$0xff]
  %v211 = vld [vmem:[%s9] sm:$0x3]
  %v212 = vpack.c.bf16 %v209, %v208
  %v213 = vpack.c.bf16 %v210, %v210
  %v214 = vld [vmem:[%s10] sm:$0x1]
  %v216 = vperm.slane %v214, 0
  %vm218 = vcmask 31744
  %v220 = vsel %vm218, %v212, 0
  %v223 = vsel %vm218, %v213, 0
  %vm225 = vcmask 1041408
  %v227 = vsel %vm225, %v211, 0
  %229 = vmatpush.bf16.msra.mxu0 0
  %230 = vmatpush.bf16.msra.mxu0 0
  %231 = vmatpush.bf16.msra.mxu0 0
  %232 = vmatpush.bf16.msra.mxu0 0
  %233 = vmatpush.bf16.msra.mxu0 0
  %234 = vmatpush.bf16.msra.mxu0 0
  %235 = vmatpush.bf16.msra.mxu0 0
  %236 = vmatpush.bf16.msra.mxu0 %v227
  %237 = vmatmul.bf16.gmra.mxu0 %v220
  %v238 = vpop.f32.mrf.mxu0
  %v239 = vadd.f32 %v216, %v238
  %v240 = vpop.f32.mrf.mxu0
  %v241 = vadd.f32 %v216, %v240
  %242 = vmatmul.bf16.gmra.mxu0 %v223
  %v243 = vpop.f32.mrf.mxu0
  %v244 = vadd.f32 %v216, %v243
  %v245 = vpop.f32.mrf.mxu0
  %246 = vdwg.mxu0
  %v247 = vmul.f32 %v239, 0.5
  %v248 = vmul.f32 %v241, 0.5
  %v249 = vmul.f32 %v244, 0.5
  %v250 = vtanh.pop %v247
  %v251 = vtanh.pop %v248
  %v252 = vtanh.pop %v249
  %v253 = vadd.f32 %v250, 1.0
  %v254 = vadd.f32 %v251, 1.0
  %v255 = vadd.f32 %v252, 1.0
  %v256 = vmul.f32 %v253, 0.5
  %v257 = vmul.f32 %v254, 0.5
  %v258 = vmul.f32 %v255, 0.5
  %v259 = vmul.f32 %v239, %v256
  %v260 = vmul.f32 %v241, %v257
  %v261 = vmul.f32 %v244, %v258
  %v262 = vld [vmem:[%s11] sm:$0xff]
  %v263 = vld [vmem:[%s11 + $0x8] sm:$0xff]
  %v264 = vld [vmem:[%s11 + $0x10] sm:$0xff]
  %v265 = vld [vmem:[%s11 + $0x18] sm:$0xff]
  %v266 = vld [vmem:[%s11 + $0x20] sm:$0xff]
  %v267 = vld [vmem:[%s11 + $0x28] sm:$0xff]
  %v268 = vld [vmem:[%s11 + $0x30] sm:$0xff]
  %v269 = vld [vmem:[%s11 + $0x38] sm:$0xff]
  %v270 = vld [vmem:[%s11 + $0x40] sm:$0xff]
  %v271 = vld [vmem:[%s11 + $0x48] sm:$0xff]
  %v272 = vld [vmem:[%s11 + $0x50] sm:$0xff]
  %v273 = vld [vmem:[%s11 + $0x58] sm:$0xff]
  %v274 = vld [vmem:[%s11 + $0x60] sm:$0xff]
  %v275 = vld [vmem:[%s11 + $0x68] sm:$0xff]
  %v276 = vld [vmem:[%s11 + $0x70] sm:$0xff]
  %v277 = vld [vmem:[%s11 + $0x78] sm:$0xff]
  %v278 = vld [vmem:[%s11 + $0x80] sm:$0xff]
  %v279 = vld [vmem:[%s11 + $0x88] sm:$0xff]
  %v280 = vld [vmem:[%s11 + $0x90] sm:$0xff]
  %v281 = vld [vmem:[%s11 + $0x98] sm:$0xff]
  %v282 = vld [vmem:[%s11 + $0xa0] sm:$0xff]
  %v283 = vld [vmem:[%s11 + $0xa8] sm:$0xff]
  %v284 = vld [vmem:[%s11 + $0xb0] sm:$0xff]
  %v285 = vld [vmem:[%s11 + $0xb8] sm:$0xff]
  %v286 = vld [vmem:[%s11 + $0xc0] sm:$0xff]
  %v287 = vld [vmem:[%s11 + $0xc8] sm:$0xff]
  %v288 = vld [vmem:[%s11 + $0xd0] sm:$0xff]
  %v289 = vld [vmem:[%s11 + $0xd8] sm:$0xff]
  %v290 = vld [vmem:[%s11 + $0xe0] sm:$0xff]
  %v291 = vld [vmem:[%s11 + $0xe8] sm:$0xff]
  %v292 = vld [vmem:[%s11 + $0xf0] sm:$0xff]
  %v293 = vld [vmem:[%s11 + $0xf8] sm:$0xff]
  %v294 = vpack.c.bf16 %v260, %v259
  %v295 = vpack.c.bf16 %v261, %v261
  %v296 = vld [vmem:[%s12] sm:$0xff]
  %v298 = vperm.slane %v296, 0
  %v299 = vperm.slane %v296, 1
  %v300 = vperm.slane %v296, 2
  %v301 = vperm.slane %v296, 3
  %v302 = vperm.slane %v296, 4
  %v303 = vperm.slane %v296, 5
  %v304 = vperm.slane %v296, 6
  %v305 = vperm.slane %v296, 7
  %v346 = vunpack.c.l.b16 %v262
  %v347 = vunpack.c.h.b16 %v262
  %v348 = vunpack.c.l.b16 %v263
  %v349 = vunpack.c.h.b16 %v263
  %v350 = vunpack.c.l.b16 %v264
  %v351 = vunpack.c.h.b16 %v264
  %v352 = vunpack.c.l.b16 %v265
  %v353 = vunpack.c.h.b16 %v265
  %v354 = vunpack.c.l.b16 %v266
  %v355 = vunpack.c.h.b16 %v266
  %v356 = vunpack.c.l.b16 %v267
  %v357 = vunpack.c.h.b16 %v267
  %v358 = vunpack.c.l.b16 %v268
  %v359 = vunpack.c.h.b16 %v268
  %v360 = vunpack.c.l.b16 %v269
  %v361 = vunpack.c.h.b16 %v269
  %v362 = vunpack.c.l.b16 %v270
  %v363 = vunpack.c.h.b16 %v270
  %v364 = vunpack.c.l.b16 %v271
  %v365 = vunpack.c.h.b16 %v271
  %v366 = vunpack.c.l.b16 %v272
  %v367 = vunpack.c.h.b16 %v272
  %v368 = vunpack.c.l.b16 %v273
  %v369 = vunpack.c.h.b16 %v273
  %v370 = vunpack.c.l.b16 %v274
  %v371 = vunpack.c.h.b16 %v274
  %v372 = vunpack.c.l.b16 %v275
  %v373 = vunpack.c.h.b16 %v275
  %v374 = vunpack.c.l.b16 %v276
  %v375 = vunpack.c.h.b16 %v276
  %v376 = vunpack.c.l.b16 %v277
  %v377 = vunpack.c.h.b16 %v277
  %v378 = vunpack.c.l.b16 %v278
  %v379 = vunpack.c.h.b16 %v278
  %v380 = vunpack.c.l.b16 %v279
  %v381 = vunpack.c.h.b16 %v279
  %v382 = vunpack.c.l.b16 %v280
  %v383 = vunpack.c.h.b16 %v280
  %v384 = vunpack.c.l.b16 %v281
  %v385 = vunpack.c.h.b16 %v281
  %v386 = vunpack.c.l.b16 %v282
  %v387 = vunpack.c.h.b16 %v282
  %v388 = vunpack.c.l.b16 %v283
  %v389 = vunpack.c.h.b16 %v283
  %v390 = vunpack.c.l.b16 %v284
  %v391 = vunpack.c.h.b16 %v284
  %v392 = vunpack.c.l.b16 %v285
  %v393 = vunpack.c.h.b16 %v285
  %v394 = vunpack.c.l.b16 %v286
  %v395 = vunpack.c.h.b16 %v286
  %v396 = vunpack.c.l.b16 %v287
  %v397 = vunpack.c.h.b16 %v287
  %v398 = vunpack.c.l.b16 %v288
  %v399 = vunpack.c.h.b16 %v288
  %v400 = vunpack.c.l.b16 %v289
  %v401 = vunpack.c.h.b16 %v289
  %v402 = vunpack.c.l.b16 %v290
  %v403 = vunpack.c.h.b16 %v290
  %v404 = vunpack.c.l.b16 %v291
  %v405 = vunpack.c.h.b16 %v291
  %v406 = vunpack.c.l.b16 %v292
  %v407 = vunpack.c.h.b16 %v292
  %v408 = vunpack.c.l.b16 %v293
  %v409 = vunpack.c.h.b16 %v293
  %v410 = vpack.c.b16 %v354, %v346
  %v411 = vpack.c.b16 %v355, %v347
  %v412 = vpack.c.b16 %v356, %v348
  %v413 = vpack.c.b16 %v357, %v349
  %v414 = vpack.c.b16 %v358, %v350
  %v415 = vpack.c.b16 %v359, %v351
  %v416 = vpack.c.b16 %v360, %v352
  %v417 = vpack.c.b16 %v361, %v353
  %v418 = vpack.c.b16 %v370, %v362
  %v419 = vpack.c.b16 %v371, %v363
  %v420 = vpack.c.b16 %v372, %v364
  %v421 = vpack.c.b16 %v373, %v365
  %v422 = vpack.c.b16 %v374, %v366
  %v423 = vpack.c.b16 %v375, %v367
  %v424 = vpack.c.b16 %v376, %v368
  %v425 = vpack.c.b16 %v377, %v369
  %v426 = vpack.c.b16 %v386, %v378
  %v427 = vpack.c.b16 %v387, %v379
  %v428 = vpack.c.b16 %v388, %v380
  %v429 = vpack.c.b16 %v389, %v381
  %v430 = vpack.c.b16 %v390, %v382
  %v431 = vpack.c.b16 %v391, %v383
  %v432 = vpack.c.b16 %v392, %v384
  %v433 = vpack.c.b16 %v393, %v385
  %v434 = vpack.c.b16 %v402, %v394
  %v435 = vpack.c.b16 %v403, %v395
  %v436 = vpack.c.b16 %v404, %v396
  %v437 = vpack.c.b16 %v405, %v397
  %v438 = vpack.c.b16 %v406, %v398
  %v439 = vpack.c.b16 %v407, %v399
  %v440 = vpack.c.b16 %v408, %v400
  %v441 = vpack.c.b16 %v409, %v401
  %vm474 = vcmask 523264
  %v476 = vsel %vm474, %v294, 0
  %v479 = vsel %vm474, %v295, 0
  %481 = vmatpush.bf16.msra.mxu0 0
  %482 = vmatpush.bf16.msra.mxu0 0
  %483 = vmatpush.bf16.msra.mxu0 0
  %484 = vmatpush.bf16.msra.mxu0 0
  %485 = vmatpush.bf16.msra.mxu0 %v434
  %486 = vmatpush.bf16.msra.mxu0 %v426
  %487 = vmatpush.bf16.msra.mxu0 %v418
  %488 = vmatpush.bf16.msra.mxu0 %v410
  %489 = vmatmul.bf16.gmra.mxu0 %v476
  %v490 = vpop.f32.mrf.mxu0
  %v491 = vadd.f32 %v298, %v490
  %v492 = vpop.f32.mrf.mxu0
  %v493 = vadd.f32 %v298, %v492
  %494 = vmatmul.bf16.gmra.mxu0 %v479
  %v495 = vpop.f32.mrf.mxu0
  %v496 = vadd.f32 %v298, %v495
  %v497 = vpop.f32.mrf.mxu0
  %498 = vdwg.mxu0
  %499 = vmatpush.bf16.msra.mxu0 0
  %500 = vmatpush.bf16.msra.mxu0 0
  %501 = vmatpush.bf16.msra.mxu0 0
  %502 = vmatpush.bf16.msra.mxu0 0
  %503 = vmatpush.bf16.msra.mxu0 %v435
  %504 = vmatpush.bf16.msra.mxu0 %v427
  %505 = vmatpush.bf16.msra.mxu0 %v419
  %506 = vmatpush.bf16.msra.mxu0 %v411
  %507 = vmatmul.bf16.gmra.mxu0 %v476
  %v508 = vpop.f32.mrf.mxu0
  %v509 = vadd.f32 %v299, %v508
  %v510 = vpop.f32.mrf.mxu0
  %v511 = vadd.f32 %v299, %v510
  %512 = vmatmul.bf16.gmra.mxu0 %v479
  %v513 = vpop.f32.mrf.mxu0
  %v514 = vadd.f32 %v299, %v513
  %v515 = vpop.f32.mrf.mxu0
  %516 = vdwg.mxu0
  %517 = vmatpush.bf16.msra.mxu0 0
  %518 = vmatpush.bf16.msra.mxu0 0
  %519 = vmatpush.bf16.msra.mxu0 0
  %520 = vmatpush.bf16.msra.mxu0 0
  %521 = vmatpush.bf16.msra.mxu0 %v436
  %522 = vmatpush.bf16.msra.mxu0 %v428
  %523 = vmatpush.bf16.msra.mxu0 %v420
  %524 = vmatpush.bf16.msra.mxu0 %v412
  %525 = vmatmul.bf16.gmra.mxu0 %v476
  %v526 = vpop.f32.mrf.mxu0
  %v527 = vadd.f32 %v300, %v526
  %v528 = vpop.f32.mrf.mxu0
  %v529 = vadd.f32 %v300, %v528
  %530 = vmatmul.bf16.gmra.mxu0 %v479
  %v531 = vpop.f32.mrf.mxu0
  %v532 = vadd.f32 %v300, %v531
  %v533 = vpop.f32.mrf.mxu0
  %534 = vdwg.mxu0
  %535 = vmatpush.bf16.msra.mxu0 0
  %536 = vmatpush.bf16.msra.mxu0 0
  %537 = vmatpush.bf16.msra.mxu0 0
  %538 = vmatpush.bf16.msra.mxu0 0
  %539 = vmatpush.bf16.msra.mxu0 %v437
  %540 = vmatpush.bf16.msra.mxu0 %v429
  %541 = vmatpush.bf16.msra.mxu0 %v421
  %542 = vmatpush.bf16.msra.mxu0 %v413
  %543 = vmatmul.bf16.gmra.mxu0 %v476
  %v544 = vpop.f32.mrf.mxu0
  %v545 = vadd.f32 %v301, %v544
  %v546 = vpop.f32.mrf.mxu0
  %v547 = vadd.f32 %v301, %v546
  %548 = vmatmul.bf16.gmra.mxu0 %v479
  %v549 = vpop.f32.mrf.mxu0
  %v550 = vadd.f32 %v301, %v549
  %v551 = vpop.f32.mrf.mxu0
  %552 = vdwg.mxu0
  %553 = vmatpush.bf16.msra.mxu0 0
  %554 = vmatpush.bf16.msra.mxu0 0
  %555 = vmatpush.bf16.msra.mxu0 0
  %556 = vmatpush.bf16.msra.mxu0 0
  %557 = vmatpush.bf16.msra.mxu0 %v438
  %558 = vmatpush.bf16.msra.mxu0 %v430
  %559 = vmatpush.bf16.msra.mxu0 %v422
  %560 = vmatpush.bf16.msra.mxu0 %v414
  %561 = vmatmul.bf16.gmra.mxu0 %v476
  %v562 = vpop.f32.mrf.mxu0
  %v563 = vadd.f32 %v302, %v562
  %v564 = vpop.f32.mrf.mxu0
  %v565 = vadd.f32 %v302, %v564
  %566 = vmatmul.bf16.gmra.mxu0 %v479
  %v567 = vpop.f32.mrf.mxu0
  %v568 = vadd.f32 %v302, %v567
  %v569 = vpop.f32.mrf.mxu0
  %570 = vdwg.mxu0
  %571 = vmatpush.bf16.msra.mxu0 0
  %572 = vmatpush.bf16.msra.mxu0 0
  %573 = vmatpush.bf16.msra.mxu0 0
  %574 = vmatpush.bf16.msra.mxu0 0
  %575 = vmatpush.bf16.msra.mxu0 %v439
  %576 = vmatpush.bf16.msra.mxu0 %v431
  %577 = vmatpush.bf16.msra.mxu0 %v423
  %578 = vmatpush.bf16.msra.mxu0 %v415
  %579 = vmatmul.bf16.gmra.mxu0 %v476
  %v580 = vpop.f32.mrf.mxu0
  %v581 = vadd.f32 %v303, %v580
  %v582 = vpop.f32.mrf.mxu0
  %v583 = vadd.f32 %v303, %v582
  %584 = vmatmul.bf16.gmra.mxu0 %v479
  %v585 = vpop.f32.mrf.mxu0
  %v586 = vadd.f32 %v303, %v585
  %v587 = vpop.f32.mrf.mxu0
  %588 = vdwg.mxu0
  %589 = vmatpush.bf16.msra.mxu0 0
  %590 = vmatpush.bf16.msra.mxu0 0
  %591 = vmatpush.bf16.msra.mxu0 0
  %592 = vmatpush.bf16.msra.mxu0 0
  %593 = vmatpush.bf16.msra.mxu0 %v440
  %594 = vmatpush.bf16.msra.mxu0 %v432
  %595 = vmatpush.bf16.msra.mxu0 %v424
  %596 = vmatpush.bf16.msra.mxu0 %v416
  %597 = vmatmul.bf16.gmra.mxu0 %v476
  %v598 = vpop.f32.mrf.mxu0
  %v599 = vadd.f32 %v304, %v598
  %v600 = vpop.f32.mrf.mxu0
  %v601 = vadd.f32 %v304, %v600
  %602 = vmatmul.bf16.gmra.mxu0 %v479
  %v603 = vpop.f32.mrf.mxu0
  %v604 = vadd.f32 %v304, %v603
  %v605 = vpop.f32.mrf.mxu0
  %606 = vdwg.mxu0
  %607 = vmatpush.bf16.msra.mxu0 0
  %608 = vmatpush.bf16.msra.mxu0 0
  %609 = vmatpush.bf16.msra.mxu0 0
  %610 = vmatpush.bf16.msra.mxu0 0
  %611 = vmatpush.bf16.msra.mxu0 %v441
  %612 = vmatpush.bf16.msra.mxu0 %v433
  %613 = vmatpush.bf16.msra.mxu0 %v425
  %614 = vmatpush.bf16.msra.mxu0 %v417
  %615 = vmatmul.bf16.gmra.mxu0 %v476
  %v616 = vpop.f32.mrf.mxu0
  %v617 = vadd.f32 %v305, %v616
  %v618 = vpop.f32.mrf.mxu0
  %v619 = vadd.f32 %v305, %v618
  %620 = vmatmul.bf16.gmra.mxu0 %v479
  %v621 = vpop.f32.mrf.mxu0
  %v622 = vadd.f32 %v305, %v621
  %v623 = vpop.f32.mrf.mxu0
  %624 = vdwg.mxu0
  %v625 = vpack.c.bf16 %v509, %v491
  %v626 = vpack.c.bf16 %v545, %v527
  %v627 = vpack.c.bf16 %v581, %v563
  %v628 = vpack.c.bf16 %v617, %v599
  %v629 = vpack.c.bf16 %v511, %v493
  %v630 = vpack.c.bf16 %v547, %v529
  %v631 = vpack.c.bf16 %v583, %v565
  %v632 = vpack.c.bf16 %v619, %v601
  %v633 = vpack.c.bf16 %v514, %v496
  %v634 = vpack.c.bf16 %v550, %v532
  %v635 = vpack.c.bf16 %v586, %v568
  %v636 = vpack.c.bf16 %v622, %v604
  %v637 = vld [vmem:[%s5] sm:$0xff]
  %v638 = vld [vmem:[%s5 + $0x8] sm:$0xff]
  %v639 = vld [vmem:[%s5 + $0x10] sm:$0xff]
  %v640 = vld [vmem:[%s5 + $0x18] sm:$0xff]
  %v641 = vld [vmem:[%s5 + $0x20] sm:$0xff]
  %v642 = vld [vmem:[%s5 + $0x28] sm:$0xff]
  %v643 = vld [vmem:[%s5 + $0x30] sm:$0xff]
  %v644 = vld [vmem:[%s5 + $0x38] sm:$0xff]
  %v645 = vld [vmem:[%s5 + $0x40] sm:$0xff]
  %v646 = vld [vmem:[%s5 + $0x48] sm:$0xff]
  %v647 = vld [vmem:[%s5 + $0x50] sm:$0xff]
  %v648 = vld [vmem:[%s5 + $0x58] sm:$0xff]
  %v649 = vld [vmem:[%s5 + $0x60] sm:$0xff]
  %v650 = vld [vmem:[%s5 + $0x68] sm:$0xff]
  %v651 = vld [vmem:[%s5 + $0x70] sm:$0xff]
  %v652 = vld [vmem:[%s5 + $0x78] sm:$0xff]
  %v653 = vld [vmem:[%s6] sm:$0xf]
  %v654 = vld [vmem:[%s6 + $0x4] sm:$0xf]
  %v655 = vld [vmem:[%s6 + $0x8] sm:$0xf]
  %v656 = vld [vmem:[%s6 + $0xc] sm:$0xf]
  %v657 = vld [vmem:[%s6 + $0x10] sm:$0xf]
  %v658 = vld [vmem:[%s6 + $0x14] sm:$0xf]
  %v659 = vld [vmem:[%s6 + $0x18] sm:$0xf]
  %v660 = vld [vmem:[%s6 + $0x1c] sm:$0xf]
  %v661 = vld [vmem:[%s6 + $0x20] sm:$0xf]
  %v662 = vld [vmem:[%s6 + $0x24] sm:$0xf]
  %v663 = vld [vmem:[%s6 + $0x28] sm:$0xf]
  %v664 = vld [vmem:[%s6 + $0x2c] sm:$0xf]
  %v665 = vld [vmem:[%s6 + $0x30] sm:$0xf]
  %v666 = vld [vmem:[%s6 + $0x34] sm:$0xf]
  %v667 = vld [vmem:[%s6 + $0x38] sm:$0xf]
  %v668 = vld [vmem:[%s6 + $0x3c] sm:$0xf]
  %v669 = vld [vmem:[%s6 + $0x40] sm:$0xf]
  %v670 = vld [vmem:[%s6 + $0x44] sm:$0xf]
  %v671 = vld [vmem:[%s6 + $0x48] sm:$0xf]
  %v672 = vld [vmem:[%s6 + $0x4c] sm:$0xf]
  %v673 = vld [vmem:[%s6 + $0x50] sm:$0xf]
  %v674 = vld [vmem:[%s6 + $0x54] sm:$0xf]
  %v675 = vld [vmem:[%s6 + $0x58] sm:$0xf]
  %v676 = vld [vmem:[%s6 + $0x5c] sm:$0xf]
  %v677 = vld [vmem:[%s6 + $0x60] sm:$0xf]
  %v678 = vld [vmem:[%s6 + $0x64] sm:$0xf]
  %v679 = vld [vmem:[%s6 + $0x68] sm:$0xf]
  %v680 = vld [vmem:[%s6 + $0x6c] sm:$0xf]
  %v681 = vld [vmem:[%s6 + $0x70] sm:$0xf]
  %v682 = vld [vmem:[%s6 + $0x74] sm:$0xf]
  %v683 = vld [vmem:[%s6 + $0x78] sm:$0xf]
  %v684 = vld [vmem:[%s6 + $0x7c] sm:$0xf]
  %v685 = vld [vmem:[%s6 + $0x80] sm:$0xf]
  %v686 = vld [vmem:[%s6 + $0x84] sm:$0xf]
  %v687 = vld [vmem:[%s6 + $0x88] sm:$0xf]
  %v688 = vld [vmem:[%s6 + $0x8c] sm:$0xf]
  %v689 = vld [vmem:[%s6 + $0x90] sm:$0xf]
  %v690 = vld [vmem:[%s6 + $0x94] sm:$0xf]
  %v691 = vld [vmem:[%s6 + $0x98] sm:$0xf]
  %v692 = vld [vmem:[%s6 + $0x9c] sm:$0xf]
  %v693 = vld [vmem:[%s6 + $0xa0] sm:$0xf]
  %v694 = vld [vmem:[%s6 + $0xa4] sm:$0xf]
  %v695 = vld [vmem:[%s6 + $0xa8] sm:$0xf]
  %v696 = vld [vmem:[%s6 + $0xac] sm:$0xf]
  %v697 = vld [vmem:[%s6 + $0xb0] sm:$0xf]
  %v698 = vld [vmem:[%s6 + $0xb4] sm:$0xf]
  %v699 = vld [vmem:[%s6 + $0xb8] sm:$0xf]
  %v700 = vld [vmem:[%s6 + $0xbc] sm:$0xf]
  %v701 = vld [vmem:[%s6 + $0xc0] sm:$0xf]
  %v702 = vld [vmem:[%s6 + $0xc4] sm:$0xf]
  %v703 = vld [vmem:[%s6 + $0xc8] sm:$0xf]
  %v704 = vld [vmem:[%s6 + $0xcc] sm:$0xf]
  %v705 = vld [vmem:[%s6 + $0xd0] sm:$0xf]
  %v706 = vld [vmem:[%s6 + $0xd4] sm:$0xf]
  %v707 = vld [vmem:[%s6 + $0xd8] sm:$0xf]
  %v708 = vld [vmem:[%s6 + $0xdc] sm:$0xf]
  %v709 = vld [vmem:[%s6 + $0xe0] sm:$0xf]
  %v710 = vld [vmem:[%s6 + $0xe4] sm:$0xf]
  %v711 = vld [vmem:[%s6 + $0xe8] sm:$0xf]
  %v712 = vld [vmem:[%s6 + $0xec] sm:$0xf]
  %v713 = vld [vmem:[%s6 + $0xf0] sm:$0xf]
  %v714 = vld [vmem:[%s6 + $0xf4] sm:$0xf]
  %v715 = vld [vmem:[%s6 + $0xf8] sm:$0xf]
  %v716 = vld [vmem:[%s6 + $0xfc] sm:$0xf]
  %v717 = vld [vmem:[%s6 + $0x100] sm:$0xf]
  %v718 = vld [vmem:[%s6 + $0x104] sm:$0xf]
  %v719 = vld [vmem:[%s6 + $0x108] sm:$0xf]
  %v720 = vld [vmem:[%s6 + $0x10c] sm:$0xf]
  %v721 = vld [vmem:[%s6 + $0x110] sm:$0xf]
  %v722 = vld [vmem:[%s6 + $0x114] sm:$0xf]
  %v723 = vld [vmem:[%s6 + $0x118] sm:$0xf]
  %v724 = vld [vmem:[%s6 + $0x11c] sm:$0xf]
  %v725 = vld [vmem:[%s6 + $0x120] sm:$0xf]
  %v726 = vld [vmem:[%s6 + $0x124] sm:$0xf]
  %v727 = vld [vmem:[%s6 + $0x128] sm:$0xf]
  %v728 = vld [vmem:[%s6 + $0x12c] sm:$0xf]
  %v729 = vld [vmem:[%s6 + $0x130] sm:$0xf]
  %v730 = vld [vmem:[%s6 + $0x134] sm:$0xf]
  %v731 = vld [vmem:[%s6 + $0x138] sm:$0xf]
  %v732 = vld [vmem:[%s6 + $0x13c] sm:$0xf]
  %v733 = vld [vmem:[%s6 + $0x140] sm:$0xf]
  %v734 = vld [vmem:[%s6 + $0x144] sm:$0xf]
  %v735 = vld [vmem:[%s6 + $0x148] sm:$0xf]
  %v736 = vld [vmem:[%s6 + $0x14c] sm:$0xf]
  %v737 = vld [vmem:[%s6 + $0x150] sm:$0xf]
  %v738 = vld [vmem:[%s6 + $0x154] sm:$0xf]
  %v739 = vld [vmem:[%s6 + $0x158] sm:$0xf]
  %v740 = vld [vmem:[%s6 + $0x15c] sm:$0xf]
  %v741 = vld [vmem:[%s6 + $0x160] sm:$0xf]
  %v742 = vld [vmem:[%s6 + $0x164] sm:$0xf]
  %v743 = vld [vmem:[%s6 + $0x168] sm:$0xf]
  %v744 = vld [vmem:[%s6 + $0x16c] sm:$0xf]
  %v745 = vld [vmem:[%s6 + $0x170] sm:$0xf]
  %v746 = vld [vmem:[%s6 + $0x174] sm:$0xf]
  %v747 = vld [vmem:[%s6 + $0x178] sm:$0xf]
  %v748 = vld [vmem:[%s6 + $0x17c] sm:$0xf]
  %v749 = vld [vmem:[%s6 + $0x180] sm:$0xf]
  %v750 = vld [vmem:[%s6 + $0x184] sm:$0xf]
  %v751 = vld [vmem:[%s6 + $0x188] sm:$0xf]
  %v752 = vld [vmem:[%s6 + $0x18c] sm:$0xf]
  %v753 = vld [vmem:[%s6 + $0x190] sm:$0xf]
  %v754 = vld [vmem:[%s6 + $0x194] sm:$0xf]
  %v755 = vld [vmem:[%s6 + $0x198] sm:$0xf]
  %v756 = vld [vmem:[%s6 + $0x19c] sm:$0xf]
  %v757 = vld [vmem:[%s6 + $0x1a0] sm:$0xf]
  %v758 = vld [vmem:[%s6 + $0x1a4] sm:$0xf]
  %v759 = vld [vmem:[%s6 + $0x1a8] sm:$0xf]
  %v760 = vld [vmem:[%s6 + $0x1ac] sm:$0xf]
  %v761 = vld [vmem:[%s6 + $0x1b0] sm:$0xf]
  %v762 = vld [vmem:[%s6 + $0x1b4] sm:$0xf]
  %v763 = vld [vmem:[%s6 + $0x1b8] sm:$0xf]
  %v764 = vld [vmem:[%s6 + $0x1bc] sm:$0xf]
  %v765 = vld [vmem:[%s6 + $0x1c0] sm:$0xf]
  %v766 = vld [vmem:[%s6 + $0x1c4] sm:$0xf]
  %v767 = vld [vmem:[%s6 + $0x1c8] sm:$0xf]
  %v768 = vld [vmem:[%s6 + $0x1cc] sm:$0xf]
  %v769 = vld [vmem:[%s6 + $0x1d0] sm:$0xf]
  %v770 = vld [vmem:[%s6 + $0x1d4] sm:$0xf]
  %v771 = vld [vmem:[%s6 + $0x1d8] sm:$0xf]
  %v772 = vld [vmem:[%s6 + $0x1dc] sm:$0xf]
  %v773 = vld [vmem:[%s6 + $0x1e0] sm:$0xf]
  %v774 = vld [vmem:[%s6 + $0x1e4] sm:$0xf]
  %v775 = vld [vmem:[%s6 + $0x1e8] sm:$0xf]
  %v776 = vld [vmem:[%s6 + $0x1ec] sm:$0xf]
  %v777 = vld [vmem:[%s6 + $0x1f0] sm:$0xf]
  %v778 = vld [vmem:[%s6 + $0x1f4] sm:$0xf]
  %v779 = vld [vmem:[%s6 + $0x1f8] sm:$0xf]
  %v780 = vld [vmem:[%s6 + $0x1fc] sm:$0xf]
  %v781 = vld [vmem:[%s13] sm:$0xf]
  %v782 = vld [vmem:[%s13 + $0x4] sm:$0xf]
  %v783 = vld [vmem:[%s13 + $0x8] sm:$0xf]
  %v784 = vld [vmem:[%s13 + $0xc] sm:$0xf]
  %v785 = vld [vmem:[%s14] sm:$0x1]
  %v786 = vld [vmem:[%s15] sm:$0xff]
  %v787 = vld [vmem:[%s15 + $0x8] sm:$0xff]
  %v788 = vld [vmem:[%s15 + $0x10] sm:$0xff]
  %v789 = vld [vmem:[%s15 + $0x18] sm:$0xff]
  %v790 = vld [vmem:[%s15 + $0x20] sm:$0xff]
  %v791 = vld [vmem:[%s15 + $0x28] sm:$0xff]
  %v792 = vld [vmem:[%s15 + $0x30] sm:$0xff]
  %v793 = vld [vmem:[%s15 + $0x38] sm:$0xff]
  %v794 = vld [vmem:[%s16] sm:$0x3]
  %v795 = vpack.c.bf16 %v207, %v206
  %vm796 = vcmask 97280
  %v798 = vsel %vm796, %v100, 0
  %v801 = vsel %vm796, %v101, 0
  %v804 = vsel %vm178, %v795, 0
  %806 = vmatpush.bf16.msra.mxu0 0
  %807 = vmatpush.bf16.msra.mxu0 0
  %808 = vmatpush.bf16.msra.mxu0 0
  %809 = vmatpush.bf16.msra.mxu0 0
  %810 = vmatpush.bf16.msra.mxu0 0
  %811 = vmatpush.bf16.msra.mxu0 0
  %812 = vmatpush.bf16.msra.mxu0 0
  %813 = vmatpush.bf16.msra.mxu0 %v804
  %814 = vmatmul.bf16.gmra.mxu0 %v798
  %v815 = vpop.f32.mrf.mxu0
  %v816 = vadd.f32 0.0, %v815
  %v817 = vpop.f32.mrf.mxu0
  %v818 = vadd.f32 0.0, %v817
  %819 = vmatmul.bf16.gmra.mxu0 %v801
  %v820 = vpop.f32.mrf.mxu0
  %v821 = vadd.f32 0.0, %v820
  %v822 = vpop.f32.mrf.mxu0
  %823 = vdwg.mxu0
  %v824 = vpack.c.bf16 %v818, %v816
  %v825 = vpack.c.bf16 %v821, %v821
  %v842 = vunpack.c.l.b16 %v637
  %v843 = vunpack.c.h.b16 %v637
  %v844 = vunpack.c.l.b16 %v638
  %v845 = vunpack.c.h.b16 %v638
  %v846 = vunpack.c.l.b16 %v639
  %v847 = vunpack.c.h.b16 %v639
  %v848 = vunpack.c.l.b16 %v640
  %v849 = vunpack.c.h.b16 %v640
  %v850 = vunpack.c.l.b16 %v641
  %v851 = vunpack.c.h.b16 %v641
  %v852 = vunpack.c.l.b16 %v642
  %v853 = vunpack.c.h.b16 %v642
  %v854 = vunpack.c.l.b16 %v643
  %v855 = vunpack.c.h.b16 %v643
  %v856 = vunpack.c.l.b16 %v644
  %v857 = vunpack.c.h.b16 %v644
  %v858 = vunpack.c.l.b16 %v645
  %v859 = vunpack.c.h.b16 %v645
  %v860 = vunpack.c.l.b16 %v646
  %v861 = vunpack.c.h.b16 %v646
  %v862 = vunpack.c.l.b16 %v647
  %v863 = vunpack.c.h.b16 %v647
  %v864 = vunpack.c.l.b16 %v648
  %v865 = vunpack.c.h.b16 %v648
  %v866 = vunpack.c.l.b16 %v649
  %v867 = vunpack.c.h.b16 %v649
  %v868 = vunpack.c.l.b16 %v650
  %v869 = vunpack.c.h.b16 %v650
  %v870 = vunpack.c.l.b16 %v651
  %v871 = vunpack.c.h.b16 %v651
  %v872 = vunpack.c.l.b16 %v652
  %v873 = vunpack.c.h.b16 %v652
  %v874 = vpack.c.b16 %v850, %v842
  %v875 = vpack.c.b16 %v851, %v843
  %v876 = vpack.c.b16 %v852, %v844
  %v877 = vpack.c.b16 %v853, %v845
  %v878 = vpack.c.b16 %v854, %v846
  %v879 = vpack.c.b16 %v855, %v847
  %v880 = vpack.c.b16 %v856, %v848
  %v881 = vpack.c.b16 %v857, %v849
  %v882 = vpack.c.b16 %v866, %v858
  %v883 = vpack.c.b16 %v867, %v859
  %v884 = vpack.c.b16 %v868, %v860
  %v885 = vpack.c.b16 %v869, %v861
  %v886 = vpack.c.b16 %v870, %v862
  %v887 = vpack.c.b16 %v871, %v863
  %v888 = vpack.c.b16 %v872, %v864
  %v889 = vpack.c.b16 %v873, %v865
  %vm906 = vcmask 261120
  %v908 = vsel %vm906, %v824, 0
  %v911 = vsel %vm906, %v825, 0
  %913 = vmatpush.bf16.msra.mxu0 0
  %914 = vmatpush.bf16.msra.mxu0 0
  %915 = vmatpush.bf16.msra.mxu0 0
  %916 = vmatpush.bf16.msra.mxu0 0
  %917 = vmatpush.bf16.msra.mxu0 0
  %918 = vmatpush.bf16.msra.mxu0 0
  %919 = vmatpush.bf16.msra.mxu0 %v882
  %920 = vmatpush.bf16.msra.mxu0 %v874
  %921 = vmatmul.bf16.gmra.mxu0 %v908
  %v922 = vpop.f32.mrf.mxu0
  %v923 = vadd.f32 0.0, %v922
  %v924 = vpop.f32.mrf.mxu0
  %v925 = vadd.f32 0.0, %v924
  %926 = vmatmul.bf16.gmra.mxu0 %v911
  %v927 = vpop.f32.mrf.mxu0
  %v928 = vadd.f32 0.0, %v927
  %v929 = vpop.f32.mrf.mxu0
  %930 = vdwg.mxu0
  %931 = vmatpush.bf16.msra.mxu0 0
  %932 = vmatpush.bf16.msra.mxu0 0
  %933 = vmatpush.bf16.msra.mxu0 0
  %934 = vmatpush.bf16.msra.mxu0 0
  %935 = vmatpush.bf16.msra.mxu0 0
  %936 = vmatpush.bf16.msra.mxu0 0
  %937 = vmatpush.bf16.msra.mxu0 %v883
  %938 = vmatpush.bf16.msra.mxu0 %v875
  %939 = vmatmul.bf16.gmra.mxu0 %v908
  %v940 = vpop.f32.mrf.mxu0
  %v941 = vadd.f32 0.0, %v940
  %v942 = vpop.f32.mrf.mxu0
  %v943 = vadd.f32 0.0, %v942
  %944 = vmatmul.bf16.gmra.mxu0 %v911
  %v945 = vpop.f32.mrf.mxu0
  %v946 = vadd.f32 0.0, %v945
  %v947 = vpop.f32.mrf.mxu0
  %948 = vdwg.mxu0
  %949 = vmatpush.bf16.msra.mxu0 0
  %950 = vmatpush.bf16.msra.mxu0 0
  %951 = vmatpush.bf16.msra.mxu0 0
  %952 = vmatpush.bf16.msra.mxu0 0
  %953 = vmatpush.bf16.msra.mxu0 0
  %954 = vmatpush.bf16.msra.mxu0 0
  %955 = vmatpush.bf16.msra.mxu0 %v884
  %956 = vmatpush.bf16.msra.mxu0 %v876
  %957 = vmatmul.bf16.gmra.mxu0 %v908
  %v958 = vpop.f32.mrf.mxu0
  %v959 = vadd.f32 0.0, %v958
  %v960 = vpop.f32.mrf.mxu0
  %v961 = vadd.f32 0.0, %v960
  %962 = vmatmul.bf16.gmra.mxu0 %v911
  %v963 = vpop.f32.mrf.mxu0
  %v964 = vadd.f32 0.0, %v963
  %v965 = vpop.f32.mrf.mxu0
  %966 = vdwg.mxu0
  %967 = vmatpush.bf16.msra.mxu0 0
  %968 = vmatpush.bf16.msra.mxu0 0
  %969 = vmatpush.bf16.msra.mxu0 0
  %970 = vmatpush.bf16.msra.mxu0 0
  %971 = vmatpush.bf16.msra.mxu0 0
  %972 = vmatpush.bf16.msra.mxu0 0
  %973 = vmatpush.bf16.msra.mxu0 %v885
  %974 = vmatpush.bf16.msra.mxu0 %v877
  %975 = vmatmul.bf16.gmra.mxu0 %v908
  %v976 = vpop.f32.mrf.mxu0
  %v977 = vadd.f32 0.0, %v976
  %v978 = vpop.f32.mrf.mxu0
  %v979 = vadd.f32 0.0, %v978
  %980 = vmatmul.bf16.gmra.mxu0 %v911
  %v981 = vpop.f32.mrf.mxu0
  %v982 = vadd.f32 0.0, %v981
  %v983 = vpop.f32.mrf.mxu0
  %984 = vdwg.mxu0
  %985 = vmatpush.bf16.msra.mxu0 0
  %986 = vmatpush.bf16.msra.mxu0 0
  %987 = vmatpush.bf16.msra.mxu0 0
  %988 = vmatpush.bf16.msra.mxu0 0
  %989 = vmatpush.bf16.msra.mxu0 0
  %990 = vmatpush.bf16.msra.mxu0 0
  %991 = vmatpush.bf16.msra.mxu0 %v886
  %992 = vmatpush.bf16.msra.mxu0 %v878
  %993 = vmatmul.bf16.gmra.mxu0 %v908
  %v994 = vpop.f32.mrf.mxu0
  %v995 = vadd.f32 0.0, %v994
  %v996 = vpop.f32.mrf.mxu0
  %v997 = vadd.f32 0.0, %v996
  %998 = vmatmul.bf16.gmra.mxu0 %v911
  %v999 = vpop.f32.mrf.mxu0
  %v1000 = vadd.f32 0.0, %v999
  %v1001 = vpop.f32.mrf.mxu0
  %1002 = vdwg.mxu0
  %1003 = vmatpush.bf16.msra.mxu0 0
  %1004 = vmatpush.bf16.msra.mxu0 0
  %1005 = vmatpush.bf16.msra.mxu0 0
  %1006 = vmatpush.bf16.msra.mxu0 0
  %1007 = vmatpush.bf16.msra.mxu0 0
  %1008 = vmatpush.bf16.msra.mxu0 0
  %1009 = vmatpush.bf16.msra.mxu0 %v887
  %1010 = vmatpush.bf16.msra.mxu0 %v879
  %1011 = vmatmul.bf16.gmra.mxu0 %v908
  %v1012 = vpop.f32.mrf.mxu0
  %v1013 = vadd.f32 0.0, %v1012
  %v1014 = vpop.f32.mrf.mxu0
  %v1015 = vadd.f32 0.0, %v1014
  %1016 = vmatmul.bf16.gmra.mxu0 %v911
  %v1017 = vpop.f32.mrf.mxu0
  %v1018 = vadd.f32 0.0, %v1017
  %v1019 = vpop.f32.mrf.mxu0
  %1020 = vdwg.mxu0
  %1021 = vmatpush.bf16.msra.mxu0 0
  %1022 = vmatpush.bf16.msra.mxu0 0
  %1023 = vmatpush.bf16.msra.mxu0 0
  %1024 = vmatpush.bf16.msra.mxu0 0
  %1025 = vmatpush.bf16.msra.mxu0 0
  %1026 = vmatpush.bf16.msra.mxu0 0
  %1027 = vmatpush.bf16.msra.mxu0 %v888
  %1028 = vmatpush.bf16.msra.mxu0 %v880
  %1029 = vmatmul.bf16.gmra.mxu0 %v908
  %v1030 = vpop.f32.mrf.mxu0
  %v1031 = vadd.f32 0.0, %v1030
  %v1032 = vpop.f32.mrf.mxu0
  %v1033 = vadd.f32 0.0, %v1032
  %1034 = vmatmul.bf16.gmra.mxu0 %v911
  %v1035 = vpop.f32.mrf.mxu0
  %v1036 = vadd.f32 0.0, %v1035
  %v1037 = vpop.f32.mrf.mxu0
  %1038 = vdwg.mxu0
  %1039 = vmatpush.bf16.msra.mxu0 0
  %1040 = vmatpush.bf16.msra.mxu0 0
  %1041 = vmatpush.bf16.msra.mxu0 0
  %1042 = vmatpush.bf16.msra.mxu0 0
  %1043 = vmatpush.bf16.msra.mxu0 0
  %1044 = vmatpush.bf16.msra.mxu0 0
  %1045 = vmatpush.bf16.msra.mxu0 %v889
  %1046 = vmatpush.bf16.msra.mxu0 %v881
  %1047 = vmatmul.bf16.gmra.mxu0 %v908
  %v1048 = vpop.f32.mrf.mxu0
  %v1049 = vadd.f32 0.0, %v1048
  %v1050 = vpop.f32.mrf.mxu0
  %v1051 = vadd.f32 0.0, %v1050
  %1052 = vmatmul.bf16.gmra.mxu0 %v911
  %v1053 = vpop.f32.mrf.mxu0
  %v1054 = vadd.f32 0.0, %v1053
  %v1055 = vpop.f32.mrf.mxu0
  %1056 = vdwg.mxu0
  %v1057 = vpack.c.bf16 %v941, %v923
  %v1058 = vpack.c.bf16 %v977, %v959
  %v1059 = vpack.c.bf16 %v1013, %v995
  %v1060 = vpack.c.bf16 %v1049, %v1031
  %v1061 = vpack.c.bf16 %v943, %v925
  %v1062 = vpack.c.bf16 %v979, %v961
  %v1063 = vpack.c.bf16 %v1015, %v997
  %v1064 = vpack.c.bf16 %v1051, %v1033
  %v1065 = vpack.c.bf16 %v946, %v928
  %v1066 = vpack.c.bf16 %v982, %v964
  %v1067 = vpack.c.bf16 %v1018, %v1000
  %v1068 = vpack.c.bf16 %v1054, %v1036
  %v1069 = vunpack.c.l.bf16 %v1057
  %v1070 = vunpack.c.h.bf16 %v1057
  %v1071 = vunpack.c.l.bf16 %v1058
  %v1072 = vunpack.c.h.bf16 %v1058
  %v1073 = vunpack.c.l.bf16 %v1059
  %v1074 = vunpack.c.h.bf16 %v1059
  %v1075 = vunpack.c.l.bf16 %v1060
  %v1076 = vunpack.c.h.bf16 %v1060
  %v1077 = vunpack.c.l.bf16 %v1061
  %v1078 = vunpack.c.h.bf16 %v1061
  %v1079 = vunpack.c.l.bf16 %v1062
  %v1080 = vunpack.c.h.bf16 %v1062
  %v1081 = vunpack.c.l.bf16 %v1063
  %v1082 = vunpack.c.h.bf16 %v1063
  %v1083 = vunpack.c.l.bf16 %v1064
  %v1084 = vunpack.c.h.bf16 %v1064
  %v1085 = vunpack.c.l.bf16 %v1065
  %v1086 = vunpack.c.h.bf16 %v1065
  %v1087 = vunpack.c.l.bf16 %v1066
  %v1088 = vunpack.c.h.bf16 %v1066
  %v1089 = vunpack.c.l.bf16 %v1067
  %v1090 = vunpack.c.h.bf16 %v1067
  %v1091 = vunpack.c.l.bf16 %v1068
  %v1092 = vunpack.c.h.bf16 %v1068
  %v1093 = vunpack.c.l.bf16 %v625
  %v1094 = vunpack.c.h.bf16 %v625
  %v1095 = vunpack.c.l.bf16 %v626
  %v1096 = vunpack.c.h.bf16 %v626
  %v1097 = vunpack.c.l.bf16 %v627
  %v1098 = vunpack.c.h.bf16 %v627
  %v1099 = vunpack.c.l.bf16 %v628
  %v1100 = vunpack.c.h.bf16 %v628
  %v1101 = vunpack.c.l.bf16 %v629
  %v1102 = vunpack.c.h.bf16 %v629
  %v1103 = vunpack.c.l.bf16 %v630
  %v1104 = vunpack.c.h.bf16 %v630
  %v1105 = vunpack.c.l.bf16 %v631
  %v1106 = vunpack.c.h.bf16 %v631
  %v1107 = vunpack.c.l.bf16 %v632
  %v1108 = vunpack.c.h.bf16 %v632
  %v1109 = vunpack.c.l.bf16 %v633
  %v1110 = vunpack.c.h.bf16 %v633
  %v1111 = vunpack.c.l.bf16 %v634
  %v1112 = vunpack.c.h.bf16 %v634
  %v1113 = vunpack.c.l.bf16 %v635
  %v1114 = vunpack.c.h.bf16 %v635
  %v1115 = vunpack.c.l.bf16 %v636
  %v1116 = vunpack.c.h.bf16 %v636
  %v1117 = vmul.f32 %v1069, %v1093
  %v1118 = vmul.f32 %v1070, %v1094
  %v1119 = vmul.f32 %v1071, %v1095
  %v1120 = vmul.f32 %v1072, %v1096
  %v1121 = vmul.f32 %v1073, %v1097
  %v1122 = vmul.f32 %v1074, %v1098
  %v1123 = vmul.f32 %v1075, %v1099
  %v1124 = vmul.f32 %v1076, %v1100
  %v1125 = vmul.f32 %v1077, %v1101
  %v1126 = vmul.f32 %v1078, %v1102
  %v1127 = vmul.f32 %v1079, %v1103
  %v1128 = vmul.f32 %v1080, %v1104
  %v1129 = vmul.f32 %v1081, %v1105
  %v1130 = vmul.f32 %v1082, %v1106
  %v1131 = vmul.f32 %v1083, %v1107
  %v1132 = vmul.f32 %v1084, %v1108
  %v1133 = vmul.f32 %v1085, %v1109
  %v1134 = vmul.f32 %v1086, %v1110
  %v1135 = vmul.f32 %v1087, %v1111
  %v1136 = vmul.f32 %v1088, %v1112
  %v1137 = vmul.f32 %v1089, %v1113
  %v1138 = vmul.f32 %v1090, %v1114
  %v1139 = vmul.f32 %v1091, %v1115
  %v1140 = vmul.f32 %v1092, %v1116
  %v1141 = vpack.c.bf16 %v1125, %v1117
  %v1142 = vpack.c.bf16 %v1126, %v1118
  %v1143 = vpack.c.bf16 %v1127, %v1119
  %v1144 = vpack.c.bf16 %v1128, %v1120
  %v1145 = vpack.c.bf16 %v1129, %v1121
  %v1146 = vpack.c.bf16 %v1130, %v1122
  %v1147 = vpack.c.bf16 %v1131, %v1123
  %v1148 = vpack.c.bf16 %v1132, %v1124
  %v1149 = vpack.c.bf16 %v1133, %v1133
  %v1150 = vpack.c.bf16 %v1134, %v1134
  %v1151 = vpack.c.bf16 %v1135, %v1135
  %v1152 = vpack.c.bf16 %v1136, %v1136
  %v1153 = vpack.c.bf16 %v1137, %v1137
  %v1154 = vpack.c.bf16 %v1138, %v1138
  %v1155 = vpack.c.bf16 %v1139, %v1139
  %v1156 = vpack.c.bf16 %v1140, %v1140
  %v1285 = vunpack.c.l.b16 %v653
  %v1286 = vunpack.c.l.b16 %v654
  %v1287 = vunpack.c.l.b16 %v655
  %v1288 = vunpack.c.l.b16 %v656
  %v1289 = vunpack.c.l.b16 %v657
  %v1290 = vunpack.c.l.b16 %v658
  %v1291 = vunpack.c.l.b16 %v659
  %v1292 = vunpack.c.l.b16 %v660
  %v1293 = vunpack.c.l.b16 %v661
  %v1294 = vunpack.c.l.b16 %v662
  %v1295 = vunpack.c.l.b16 %v663
  %v1296 = vunpack.c.l.b16 %v664
  %v1297 = vunpack.c.l.b16 %v665
  %v1298 = vunpack.c.l.b16 %v666
  %v1299 = vunpack.c.l.b16 %v667
  %v1300 = vunpack.c.l.b16 %v668
  %v1301 = vunpack.c.l.b16 %v669
  %v1302 = vunpack.c.l.b16 %v670
  %v1303 = vunpack.c.l.b16 %v671
  %v1304 = vunpack.c.l.b16 %v672
  %v1305 = vunpack.c.l.b16 %v673
  %v1306 = vunpack.c.l.b16 %v674
  %v1307 = vunpack.c.l.b16 %v675
  %v1308 = vunpack.c.l.b16 %v676
  %v1309 = vunpack.c.l.b16 %v677
  %v1310 = vunpack.c.l.b16 %v678
  %v1311 = vunpack.c.l.b16 %v679
  %v1312 = vunpack.c.l.b16 %v680
  %v1313 = vunpack.c.l.b16 %v681
  %v1314 = vunpack.c.l.b16 %v682
  %v1315 = vunpack.c.l.b16 %v683
  %v1316 = vunpack.c.l.b16 %v684
  %v1317 = vunpack.c.l.b16 %v685
  %v1318 = vunpack.c.l.b16 %v686
  %v1319 = vunpack.c.l.b16 %v687
  %v1320 = vunpack.c.l.b16 %v688
  %v1321 = vunpack.c.l.b16 %v689
  %v1322 = vunpack.c.l.b16 %v690
  %v1323 = vunpack.c.l.b16 %v691
  %v1324 = vunpack.c.l.b16 %v692
  %v1325 = vunpack.c.l.b16 %v693
  %v1326 = vunpack.c.l.b16 %v694
  %v1327 = vunpack.c.l.b16 %v695
  %v1328 = vunpack.c.l.b16 %v696
  %v1329 = vunpack.c.l.b16 %v697
  %v1330 = vunpack.c.l.b16 %v698
  %v1331 = vunpack.c.l.b16 %v699
  %v1332 = vunpack.c.l.b16 %v700
  %v1333 = vunpack.c.l.b16 %v701
  %v1334 = vunpack.c.l.b16 %v702
  %v1335 = vunpack.c.l.b16 %v703
  %v1336 = vunpack.c.l.b16 %v704
  %v1337 = vunpack.c.l.b16 %v705
  %v1338 = vunpack.c.l.b16 %v706
  %v1339 = vunpack.c.l.b16 %v707
  %v1340 = vunpack.c.l.b16 %v708
  %v1341 = vunpack.c.l.b16 %v709
  %v1342 = vunpack.c.l.b16 %v710
  %v1343 = vunpack.c.l.b16 %v711
  %v1344 = vunpack.c.l.b16 %v712
  %v1345 = vunpack.c.l.b16 %v713
  %v1346 = vunpack.c.l.b16 %v714
  %v1347 = vunpack.c.l.b16 %v715
  %v1348 = vunpack.c.l.b16 %v716
  %v1349 = vunpack.c.l.b16 %v717
  %v1350 = vunpack.c.l.b16 %v718
  %v1351 = vunpack.c.l.b16 %v719
  %v1352 = vunpack.c.l.b16 %v720
  %v1353 = vunpack.c.l.b16 %v721
  %v1354 = vunpack.c.l.b16 %v722
  %v1355 = vunpack.c.l.b16 %v723
  %v1356 = vunpack.c.l.b16 %v724
  %v1357 = vunpack.c.l.b16 %v725
  %v1358 = vunpack.c.l.b16 %v726
  %v1359 = vunpack.c.l.b16 %v727
  %v1360 = vunpack.c.l.b16 %v728
  %v1361 = vunpack.c.l.b16 %v729
  %v1362 = vunpack.c.l.b16 %v730
  %v1363 = vunpack.c.l.b16 %v731
  %v1364 = vunpack.c.l.b16 %v732
  %v1365 = vunpack.c.l.b16 %v733
  %v1366 = vunpack.c.l.b16 %v734
  %v1367 = vunpack.c.l.b16 %v735
  %v1368 = vunpack.c.l.b16 %v736
  %v1369 = vunpack.c.l.b16 %v737
  %v1370 = vunpack.c.l.b16 %v738
  %v1371 = vunpack.c.l.b16 %v739
  %v1372 = vunpack.c.l.b16 %v740
  %v1373 = vunpack.c.l.b16 %v741
  %v1374 = vunpack.c.l.b16 %v742
  %v1375 = vunpack.c.l.b16 %v743
  %v1376 = vunpack.c.l.b16 %v744
  %v1377 = vunpack.c.l.b16 %v745
  %v1378 = vunpack.c.l.b16 %v746
  %v1379 = vunpack.c.l.b16 %v747
  %v1380 = vunpack.c.l.b16 %v748
  %v1381 = vunpack.c.l.b16 %v749
  %v1382 = vunpack.c.l.b16 %v750
  %v1383 = vunpack.c.l.b16 %v751
  %v1384 = vunpack.c.l.b16 %v752
  %v1385 = vunpack.c.l.b16 %v753
  %v1386 = vunpack.c.l.b16 %v754
  %v1387 = vunpack.c.l.b16 %v755
  %v1388 = vunpack.c.l.b16 %v756
  %v1389 = vunpack.c.l.b16 %v757
  %v1390 = vunpack.c.l.b16 %v758
  %v1391 = vunpack.c.l.b16 %v759
  %v1392 = vunpack.c.l.b16 %v760
  %v1393 = vunpack.c.l.b16 %v761
  %v1394 = vunpack.c.l.b16 %v762
  %v1395 = vunpack.c.l.b16 %v763
  %v1396 = vunpack.c.l.b16 %v764
  %v1397 = vunpack.c.l.b16 %v765
  %v1398 = vunpack.c.l.b16 %v766
  %v1399 = vunpack.c.l.b16 %v767
  %v1400 = vunpack.c.l.b16 %v768
  %v1401 = vunpack.c.l.b16 %v769
  %v1402 = vunpack.c.l.b16 %v770
  %v1403 = vunpack.c.l.b16 %v771
  %v1404 = vunpack.c.l.b16 %v772
  %v1405 = vunpack.c.l.b16 %v773
  %v1406 = vunpack.c.l.b16 %v774
  %v1407 = vunpack.c.l.b16 %v775
  %v1408 = vunpack.c.l.b16 %v776
  %v1409 = vunpack.c.l.b16 %v777
  %v1410 = vunpack.c.l.b16 %v778
  %v1411 = vunpack.c.l.b16 %v779
  %v1412 = vunpack.c.l.b16 %v780
  %v1413 = vpack.c.b16 %v1286, %v1285
  %v1414 = vpack.c.b16 %v1288, %v1287
  %v1415 = vpack.c.b16 %v1290, %v1289
  %v1416 = vpack.c.b16 %v1292, %v1291
  %v1417 = vpack.c.b16 %v1294, %v1293
  %v1418 = vpack.c.b16 %v1296, %v1295
  %v1419 = vpack.c.b16 %v1298, %v1297
  %v1420 = vpack.c.b16 %v1300, %v1299
  %v1421 = vpack.c.b16 %v1302, %v1301
  %v1422 = vpack.c.b16 %v1304, %v1303
  %v1423 = vpack.c.b16 %v1306, %v1305
  %v1424 = vpack.c.b16 %v1308, %v1307
  %v1425 = vpack.c.b16 %v1310, %v1309
  %v1426 = vpack.c.b16 %v1312, %v1311
  %v1427 = vpack.c.b16 %v1314, %v1313
  %v1428 = vpack.c.b16 %v1316, %v1315
  %v1429 = vpack.c.b16 %v1318, %v1317
  %v1430 = vpack.c.b16 %v1320, %v1319
  %v1431 = vpack.c.b16 %v1322, %v1321
  %v1432 = vpack.c.b16 %v1324, %v1323
  %v1433 = vpack.c.b16 %v1326, %v1325
  %v1434 = vpack.c.b16 %v1328, %v1327
  %v1435 = vpack.c.b16 %v1330, %v1329
  %v1436 = vpack.c.b16 %v1332, %v1331
  %v1437 = vpack.c.b16 %v1334, %v1333
  %v1438 = vpack.c.b16 %v1336, %v1335
  %v1439 = vpack.c.b16 %v1338, %v1337
  %v1440 = vpack.c.b16 %v1340, %v1339
  %v1441 = vpack.c.b16 %v1342, %v1341
  %v1442 = vpack.c.b16 %v1344, %v1343
  %v1443 = vpack.c.b16 %v1346, %v1345
  %v1444 = vpack.c.b16 %v1348, %v1347
  %v1445 = vpack.c.b16 %v1350, %v1349
  %v1446 = vpack.c.b16 %v1352, %v1351
  %v1447 = vpack.c.b16 %v1354, %v1353
  %v1448 = vpack.c.b16 %v1356, %v1355
  %v1449 = vpack.c.b16 %v1358, %v1357
  %v1450 = vpack.c.b16 %v1360, %v1359
  %v1451 = vpack.c.b16 %v1362, %v1361
  %v1452 = vpack.c.b16 %v1364, %v1363
  %v1453 = vpack.c.b16 %v1366, %v1365
  %v1454 = vpack.c.b16 %v1368, %v1367
  %v1455 = vpack.c.b16 %v1370, %v1369
  %v1456 = vpack.c.b16 %v1372, %v1371
  %v1457 = vpack.c.b16 %v1374, %v1373
  %v1458 = vpack.c.b16 %v1376, %v1375
  %v1459 = vpack.c.b16 %v1378, %v1377
  %v1460 = vpack.c.b16 %v1380, %v1379
  %v1461 = vpack.c.b16 %v1382, %v1381
  %v1462 = vpack.c.b16 %v1384, %v1383
  %v1463 = vpack.c.b16 %v1386, %v1385
  %v1464 = vpack.c.b16 %v1388, %v1387
  %v1465 = vpack.c.b16 %v1390, %v1389
  %v1466 = vpack.c.b16 %v1392, %v1391
  %v1467 = vpack.c.b16 %v1394, %v1393
  %v1468 = vpack.c.b16 %v1396, %v1395
  %v1469 = vpack.c.b16 %v1398, %v1397
  %v1470 = vpack.c.b16 %v1400, %v1399
  %v1471 = vpack.c.b16 %v1402, %v1401
  %v1472 = vpack.c.b16 %v1404, %v1403
  %v1473 = vpack.c.b16 %v1406, %v1405
  %v1474 = vpack.c.b16 %v1408, %v1407
  %v1475 = vpack.c.b16 %v1410, %v1409
  %v1476 = vpack.c.b16 %v1412, %v1411
  %1541 = vmatpush.bf16.msra.mxu0 %v1420
  %1542 = vmatpush.bf16.msra.mxu0 %v1419
  %1543 = vmatpush.bf16.msra.mxu0 %v1418
  %1544 = vmatpush.bf16.msra.mxu0 %v1417
  %1545 = vmatpush.bf16.msra.mxu0 %v1416
  %1546 = vmatpush.bf16.msra.mxu0 %v1415
  %1547 = vmatpush.bf16.msra.mxu0 %v1414
  %1548 = vmatpush.bf16.msra.mxu0 %v1413
  %1549 = vmatmul.bf16.gmra.mxu0 %v1141
  %v1550 = vpop.f32.mrf.mxu0
  %v1551 = vadd.f32 0.0, %v1550
  %v1552 = vpop.f32.mrf.mxu0
  %v1553 = vadd.f32 0.0, %v1552
  %1554 = vmatmul.bf16.gmra.mxu0 %v1149
  %v1555 = vpop.f32.mrf.mxu0
  %v1556 = vadd.f32 0.0, %v1555
  %v1557 = vpop.f32.mrf.mxu0
  %1558 = vdwg.mxu0
  %1559 = vmatpush.bf16.msra.mxu0 %v1428
  %1560 = vmatpush.bf16.msra.mxu0 %v1427
  %1561 = vmatpush.bf16.msra.mxu0 %v1426
  %1562 = vmatpush.bf16.msra.mxu0 %v1425
  %1563 = vmatpush.bf16.msra.mxu0 %v1424
  %1564 = vmatpush.bf16.msra.mxu0 %v1423
  %1565 = vmatpush.bf16.msra.mxu0 %v1422
  %1566 = vmatpush.bf16.msra.mxu0 %v1421
  %1567 = vmatmul.bf16.gmra.mxu0 %v1142
  %v1568 = vpop.f32.mrf.mxu0
  %v1569 = vadd.f32 %v1551, %v1568
  %v1570 = vpop.f32.mrf.mxu0
  %v1571 = vadd.f32 %v1553, %v1570
  %1572 = vmatmul.bf16.gmra.mxu0 %v1150
  %v1573 = vpop.f32.mrf.mxu0
  %v1574 = vadd.f32 %v1556, %v1573
  %v1575 = vpop.f32.mrf.mxu0
  %1576 = vdwg.mxu0
  %1577 = vmatpush.bf16.msra.mxu0 %v1436
  %1578 = vmatpush.bf16.msra.mxu0 %v1435
  %1579 = vmatpush.bf16.msra.mxu0 %v1434
  %1580 = vmatpush.bf16.msra.mxu0 %v1433
  %1581 = vmatpush.bf16.msra.mxu0 %v1432
  %1582 = vmatpush.bf16.msra.mxu0 %v1431
  %1583 = vmatpush.bf16.msra.mxu0 %v1430
  %1584 = vmatpush.bf16.msra.mxu0 %v1429
  %1585 = vmatmul.bf16.gmra.mxu0 %v1143
  %v1586 = vpop.f32.mrf.mxu0
  %v1587 = vadd.f32 %v1569, %v1586
  %v1588 = vpop.f32.mrf.mxu0
  %v1589 = vadd.f32 %v1571, %v1588
  %1590 = vmatmul.bf16.gmra.mxu0 %v1151
  %v1591 = vpop.f32.mrf.mxu0
  %v1592 = vadd.f32 %v1574, %v1591
  %v1593 = vpop.f32.mrf.mxu0
  %1594 = vdwg.mxu0
  %1595 = vmatpush.bf16.msra.mxu0 %v1444
  %1596 = vmatpush.bf16.msra.mxu0 %v1443
  %1597 = vmatpush.bf16.msra.mxu0 %v1442
  %1598 = vmatpush.bf16.msra.mxu0 %v1441
  %1599 = vmatpush.bf16.msra.mxu0 %v1440
  %1600 = vmatpush.bf16.msra.mxu0 %v1439
  %1601 = vmatpush.bf16.msra.mxu0 %v1438
  %1602 = vmatpush.bf16.msra.mxu0 %v1437
  %1603 = vmatmul.bf16.gmra.mxu0 %v1144
  %v1604 = vpop.f32.mrf.mxu0
  %v1605 = vadd.f32 %v1587, %v1604
  %v1606 = vpop.f32.mrf.mxu0
  %v1607 = vadd.f32 %v1589, %v1606
  %1608 = vmatmul.bf16.gmra.mxu0 %v1152
  %v1609 = vpop.f32.mrf.mxu0
  %v1610 = vadd.f32 %v1592, %v1609
  %v1611 = vpop.f32.mrf.mxu0
  %1612 = vdwg.mxu0
  %1613 = vmatpush.bf16.msra.mxu0 %v1452
  %1614 = vmatpush.bf16.msra.mxu0 %v1451
  %1615 = vmatpush.bf16.msra.mxu0 %v1450
  %1616 = vmatpush.bf16.msra.mxu0 %v1449
  %1617 = vmatpush.bf16.msra.mxu0 %v1448
  %1618 = vmatpush.bf16.msra.mxu0 %v1447
  %1619 = vmatpush.bf16.msra.mxu0 %v1446
  %1620 = vmatpush.bf16.msra.mxu0 %v1445
  %1621 = vmatmul.bf16.gmra.mxu0 %v1145
  %v1622 = vpop.f32.mrf.mxu0
  %v1623 = vadd.f32 %v1605, %v1622
  %v1624 = vpop.f32.mrf.mxu0
  %v1625 = vadd.f32 %v1607, %v1624
  %1626 = vmatmul.bf16.gmra.mxu0 %v1153
  %v1627 = vpop.f32.mrf.mxu0
  %v1628 = vadd.f32 %v1610, %v1627
  %v1629 = vpop.f32.mrf.mxu0
  %1630 = vdwg.mxu0
  %1631 = vmatpush.bf16.msra.mxu0 %v1460
  %1632 = vmatpush.bf16.msra.mxu0 %v1459
  %1633 = vmatpush.bf16.msra.mxu0 %v1458
  %1634 = vmatpush.bf16.msra.mxu0 %v1457
  %1635 = vmatpush.bf16.msra.mxu0 %v1456
  %1636 = vmatpush.bf16.msra.mxu0 %v1455
  %1637 = vmatpush.bf16.msra.mxu0 %v1454
  %1638 = vmatpush.bf16.msra.mxu0 %v1453
  %1639 = vmatmul.bf16.gmra.mxu0 %v1146
  %v1640 = vpop.f32.mrf.mxu0
  %v1641 = vadd.f32 %v1623, %v1640
  %v1642 = vpop.f32.mrf.mxu0
  %v1643 = vadd.f32 %v1625, %v1642
  %1644 = vmatmul.bf16.gmra.mxu0 %v1154
  %v1645 = vpop.f32.mrf.mxu0
  %v1646 = vadd.f32 %v1628, %v1645
  %v1647 = vpop.f32.mrf.mxu0
  %1648 = vdwg.mxu0
  %1649 = vmatpush.bf16.msra.mxu0 %v1468
  %1650 = vmatpush.bf16.msra.mxu0 %v1467
  %1651 = vmatpush.bf16.msra.mxu0 %v1466
  %1652 = vmatpush.bf16.msra.mxu0 %v1465
  %1653 = vmatpush.bf16.msra.mxu0 %v1464
  %1654 = vmatpush.bf16.msra.mxu0 %v1463
  %1655 = vmatpush.bf16.msra.mxu0 %v1462
  %1656 = vmatpush.bf16.msra.mxu0 %v1461
  %1657 = vmatmul.bf16.gmra.mxu0 %v1147
  %v1658 = vpop.f32.mrf.mxu0
  %v1659 = vadd.f32 %v1641, %v1658
  %v1660 = vpop.f32.mrf.mxu0
  %v1661 = vadd.f32 %v1643, %v1660
  %1662 = vmatmul.bf16.gmra.mxu0 %v1155
  %v1663 = vpop.f32.mrf.mxu0
  %v1664 = vadd.f32 %v1646, %v1663
  %v1665 = vpop.f32.mrf.mxu0
  %1666 = vdwg.mxu0
  %1667 = vmatpush.bf16.msra.mxu0 %v1476
  %1668 = vmatpush.bf16.msra.mxu0 %v1475
  %1669 = vmatpush.bf16.msra.mxu0 %v1474
  %1670 = vmatpush.bf16.msra.mxu0 %v1473
  %1671 = vmatpush.bf16.msra.mxu0 %v1472
  %1672 = vmatpush.bf16.msra.mxu0 %v1471
  %1673 = vmatpush.bf16.msra.mxu0 %v1470
  %1674 = vmatpush.bf16.msra.mxu0 %v1469
  %1675 = vmatmul.bf16.gmra.mxu0 %v1148
  %v1676 = vpop.f32.mrf.mxu0
  %v1677 = vadd.f32 %v1659, %v1676
  %v1678 = vpop.f32.mrf.mxu0
  %v1679 = vadd.f32 %v1661, %v1678
  %1680 = vmatmul.bf16.gmra.mxu0 %v1156
  %v1681 = vpop.f32.mrf.mxu0
  %v1682 = vadd.f32 %v1664, %v1681
  %v1683 = vpop.f32.mrf.mxu0
  %1684 = vdwg.mxu0
  %v1685 = vpack.c.bf16 %v1679, %v1677
  %v1686 = vpack.c.bf16 %v1682, %v1682
  %v1688 = vsel %vm119, %v113, 0
  %vm1690 = vcmask 1043456
  %v1692 = vsel %vm1690, %v1686, 0
  %1694 = vmatpush.bf16.msra.mxu0 0
  %1695 = vmatpush.bf16.msra.mxu0 0
  %1696 = vmatpush.bf16.msra.mxu0 0
  %1697 = vmatpush.bf16.msra.mxu0 0
  %1698 = vmatpush.bf16.msra.mxu0 0
  %1699 = vmatpush.bf16.msra.mxu0 0
  %1700 = vmatpush.bf16.msra.mxu0 %v1692
  %1701 = vmatpush.bf16.msra.mxu0 %v1685
  %1702 = vmatmul.bf16.gmra.mxu0 %v1688
  %v1703 = vpop.f32.mrf.mxu0
  %v1704 = vadd.f32 0.0, %v1703
  %v1705 = vpop.f32.mrf.mxu0
  %v1706 = vadd.f32 0.0, %v1705
  %1707 = vdwg.mxu0
  %v1708 = vmul.f32 %v1704, %v143
  %v1709 = vmul.f32 %v1706, %v158
  %v1714 = vunpack.c.l.b16 %v781
  %v1715 = vunpack.c.l.b16 %v782
  %v1716 = vunpack.c.l.b16 %v783
  %v1717 = vunpack.c.l.b16 %v784
  %v1718 = vpack.c.b16 %v1715, %v1714
  %v1719 = vpack.c.b16 %v1717, %v1716
  %v1722 = vsel %vm906, %v795, 0
  %1724 = vmatpush.bf16.msra.mxu0 0
  %1725 = vmatpush.bf16.msra.mxu0 0
  %1726 = vmatpush.bf16.msra.mxu0 0
  %1727 = vmatpush.bf16.msra.mxu0 0
  %1728 = vmatpush.bf16.msra.mxu0 0
  %1729 = vmatpush.bf16.msra.mxu0 0
  %1730 = vmatpush.bf16.msra.mxu0 %v1719
  %1731 = vmatpush.bf16.msra.mxu0 %v1718
  %1732 = vmatmul.bf16.gmra.mxu0 %v1722
  %v1733 = vpop.f32.mrf.mxu0
  %v1734 = vadd.f32 0.0, %v1733
  %v1735 = vpop.f32.mrf.mxu0
  %v1736 = vadd.f32 0.0, %v1735
  %1737 = vdwg.mxu0
  %v1738 = vadd.f32 %v1708, %v1734
  %v1739 = vadd.f32 %v1709, %v1736
  %v1741 = vperm.slane %v785, 0
  %v1743 = vadd.f32 %v1738, %v1741
  %v1744 = vadd.f32 %v1739, %v1741
  %v1745 = vmul.f32 %v1743, 0.5
  %v1746 = vmul.f32 %v1744, 0.5
  %v1747 = vtanh.pop %v1745
  %v1748 = vtanh.pop %v1746
  %v1749 = vadd.f32 %v1747, 1.0
  %v1750 = vadd.f32 %v1748, 1.0
  %v1751 = vmul.f32 %v1749, 0.5
  %v1752 = vmul.f32 %v1750, 0.5
  %v1753 = vmul.f32 %v1743, %v1751
  %v1754 = vmul.f32 %v1744, %v1752
  %1757 = vrot.lane.b32.xlu0 %v206, 32
  %v1758 = vpop.permute.xlu0 %1757
  %1759 = vrot.lane.b32.xlu0 %v207, 32
  %v1760 = vpop.permute.xlu0 %1759
  %v1763 = vsel %vm906, %v1753, %v1758
  %v1764 = vsel %vm906, %v1754, %v1760
  %v1765 = vpack.c.bf16 %v1764, %v1763
  %v1767 = vperm.slane %v794, 0
  %v1768 = vperm.slane %v794, 1
  %v1779 = vunpack.c.l.b16 %v786
  %v1780 = vunpack.c.h.b16 %v786
  %v1781 = vunpack.c.l.b16 %v787
  %v1782 = vunpack.c.h.b16 %v787
  %v1783 = vunpack.c.l.b16 %v788
  %v1784 = vunpack.c.h.b16 %v788
  %v1785 = vunpack.c.l.b16 %v789
  %v1786 = vunpack.c.h.b16 %v789
  %v1787 = vunpack.c.l.b16 %v790
  %v1788 = vunpack.c.h.b16 %v790
  %v1789 = vunpack.c.l.b16 %v791
  %v1790 = vunpack.c.h.b16 %v791
  %v1791 = vunpack.c.l.b16 %v792
  %v1792 = vunpack.c.h.b16 %v792
  %v1793 = vunpack.c.l.b16 %v793
  %v1794 = vunpack.c.h.b16 %v793
  %v1795 = vpack.c.b16 %v1781, %v1779
  %v1796 = vpack.c.b16 %v1782, %v1780
  %v1797 = vpack.c.b16 %v1785, %v1783
  %v1798 = vpack.c.b16 %v1786, %v1784
  %v1799 = vpack.c.b16 %v1789, %v1787
  %v1800 = vpack.c.b16 %v1790, %v1788
  %v1801 = vpack.c.b16 %v1793, %v1791
  %v1802 = vpack.c.b16 %v1794, %v1792
  %v1812 = vsel %vm474, %v1765, 0
  %1814 = vmatpush.bf16.msra.mxu0 0
  %1815 = vmatpush.bf16.msra.mxu0 0
  %1816 = vmatpush.bf16.msra.mxu0 0
  %1817 = vmatpush.bf16.msra.mxu0 0
  %1818 = vmatpush.bf16.msra.mxu0 %v1801
  %1819 = vmatpush.bf16.msra.mxu0 %v1799
  %1820 = vmatpush.bf16.msra.mxu0 %v1797
  %1821 = vmatpush.bf16.msra.mxu0 %v1795
  %1822 = vmatmul.bf16.gmra.mxu0 %v1812
  %v1823 = vpop.f32.mrf.mxu0
  %v1824 = vadd.f32 %v1767, %v1823
  %v1825 = vpop.f32.mrf.mxu0
  %v1826 = vadd.f32 %v1767, %v1825
  %1827 = vdwg.mxu0
  %1828 = vmatpush.bf16.msra.mxu0 0
  %1829 = vmatpush.bf16.msra.mxu0 0
  %1830 = vmatpush.bf16.msra.mxu0 0
  %1831 = vmatpush.bf16.msra.mxu0 0
  %1832 = vmatpush.bf16.msra.mxu0 %v1802
  %1833 = vmatpush.bf16.msra.mxu0 %v1800
  %1834 = vmatpush.bf16.msra.mxu0 %v1798
  %1835 = vmatpush.bf16.msra.mxu0 %v1796
  %1836 = vmatmul.bf16.gmra.mxu0 %v1812
  %v1837 = vpop.f32.mrf.mxu0
  %v1838 = vadd.f32 %v1768, %v1837
  %v1839 = vpop.f32.mrf.mxu0
  %v1840 = vadd.f32 %v1768, %v1839
  %1841 = vdwg.mxu0
  %1844 = vrot.lane.b32.xlu0 %v1824, 32
  %v1845 = vpop.permute.xlu0 %1844
  %1846 = vrot.lane.b32.xlu0 %v1826, 32
  %v1847 = vpop.permute.xlu0 %1846
  %v1850 = vadd.f32 %v1824, %v1845
  %v1851 = vadd.f32 %v1826, %v1847
  %v1852 = vmul.f32 %v1850, 0.5
  %v1853 = vmul.f32 %v1851, 0.5
  %v1854 = vtanh.pop %v1852
  %v1855 = vtanh.pop %v1853
  %v1856 = vadd.f32 %v1854, 1.0
  %v1857 = vadd.f32 %v1855, 1.0
  %v1858 = vmul.f32 %v1856, 0.5
  %v1859 = vmul.f32 %v1857, 0.5
  %1862 = vrot.lane.b32.xlu0 %v1838, 32
  %v1863 = vpop.permute.xlu0 %1862
  %1864 = vrot.lane.b32.xlu0 %v1840, 32
  %v1865 = vpop.permute.xlu0 %1864
  %v1868 = vadd.f32 %v1824, %v1863
  %v1869 = vadd.f32 %v1826, %v1865
  %v1870 = vmul.f32 %v1868, 0.5
  %v1871 = vmul.f32 %v1869, 0.5
  %v1872 = vtanh.pop %v1870
  %v1873 = vtanh.pop %v1871
  %v1874 = vadd.f32 %v1872, 1.0
  %v1875 = vadd.f32 %v1873, 1.0
  %v1876 = vmul.f32 %v1874, 0.5
  %v1877 = vmul.f32 %v1875, 0.5
  %1878 = vrot.lane.b32.xlu0 %v1838, 96
  %v1879 = vpop.permute.xlu0 %1878
  %1880 = vrot.lane.b32.xlu0 %v1840, 96
  %v1881 = vpop.permute.xlu0 %1880
  %v1884 = vmul.f32 %v1858, %v1879
  %v1885 = vmul.f32 %v1859, %v1881
  %1888 = vrot.lane.b32.xlu0 %v1884, 64
  %v1889 = vpop.permute.xlu0 %1888
  %1890 = vrot.lane.b32.xlu0 %v1885, 64
  %v1891 = vpop.permute.xlu0 %1890
  %v1894 = vadd.f32 %v1824, %v1889
  %v1895 = vadd.f32 %v1826, %v1891
  %v1896 = vtanh.pop %v1894
  %v1897 = vtanh.pop %v1895
  %v1898 = vsub.f32 1.0, %v1876
  %v1899 = vsub.f32 1.0, %v1877
  %1902 = vrot.lane.b32.xlu0 %v1896, 96
  %v1903 = vpop.permute.xlu0 %1902
  %1904 = vrot.lane.b32.xlu0 %v1897, 96
  %v1905 = vpop.permute.xlu0 %1904
  %v1908 = vmul.f32 %v1898, %v1903
  %v1909 = vmul.f32 %v1899, %v1905
  %v1910 = vmul.f32 %v1876, %v1758
  %v1911 = vmul.f32 %v1877, %v1760
  %v1912 = vadd.f32 %v1908, %v1910
  %v1913 = vadd.f32 %v1909, %v1911
  %v1914 = vpack.c.bf16 %v1913, %v1912
  %1916 = vrot.lane.b32.xlu0 %v1914, 96
  %v1917 = vpop.permute.xlu0 %1916
  %v1919 = vsel %vm178, %v1917, 0
  %1921 = vmatpush.bf16.msra.mxu0 0
  %1922 = vmatpush.bf16.msra.mxu0 0
  %1923 = vmatpush.bf16.msra.mxu0 0
  %1924 = vmatpush.bf16.msra.mxu0 0
  %1925 = vmatpush.bf16.msra.mxu0 0
  %1926 = vmatpush.bf16.msra.mxu0 0
  %1927 = vmatpush.bf16.msra.mxu0 0
  %1928 = vmatpush.bf16.msra.mxu0 %v1919
  %1929 = vmatmul.bf16.gmra.mxu0 %v798
  %v1930 = vpop.f32.mrf.mxu0
  %v1931 = vadd.f32 0.0, %v1930
  %v1932 = vpop.f32.mrf.mxu0
  %v1933 = vadd.f32 0.0, %v1932
  %1934 = vmatmul.bf16.gmra.mxu0 %v801
  %v1935 = vpop.f32.mrf.mxu0
  %v1936 = vadd.f32 0.0, %v1935
  %v1937 = vpop.f32.mrf.mxu0
  %1938 = vdwg.mxu0
  %v1939 = vpack.c.bf16 %v1933, %v1931
  %v1940 = vpack.c.bf16 %v1936, %v1936
  %v1942 = vsel %vm906, %v1939, 0
  %v1945 = vsel %vm906, %v1940, 0
  %1947 = vmatpush.bf16.msra.mxu0 0
  %1948 = vmatpush.bf16.msra.mxu0 0
  %1949 = vmatpush.bf16.msra.mxu0 0
  %1950 = vmatpush.bf16.msra.mxu0 0
  %1951 = vmatpush.bf16.msra.mxu0 0
  %1952 = vmatpush.bf16.msra.mxu0 0
  %1953 = vmatpush.bf16.msra.mxu0 %v882
  %1954 = vmatpush.bf16.msra.mxu0 %v874
  %1955 = vmatmul.bf16.gmra.mxu0 %v1942
  %v1956 = vpop.f32.mrf.mxu0
  %v1957 = vadd.f32 0.0, %v1956
  %v1958 = vpop.f32.mrf.mxu0
  %v1959 = vadd.f32 0.0, %v1958
  %1960 = vmatmul.bf16.gmra.mxu0 %v1945
  %v1961 = vpop.f32.mrf.mxu0
  %v1962 = vadd.f32 0.0, %v1961
  %v1963 = vpop.f32.mrf.mxu0
  %1964 = vdwg.mxu0
  %1965 = vmatpush.bf16.msra.mxu0 0
  %1966 = vmatpush.bf16.msra.mxu0 0
  %1967 = vmatpush.bf16.msra.mxu0 0
  %1968 = vmatpush.bf16.msra.mxu0 0
  %1969 = vmatpush.bf16.msra.mxu0 0
  %1970 = vmatpush.bf16.msra.mxu0 0
  %1971 = vmatpush.bf16.msra.mxu0 %v883
  %1972 = vmatpush.bf16.msra.mxu0 %v875
  %1973 = vmatmul.bf16.gmra.mxu0 %v1942
  %v1974 = vpop.f32.mrf.mxu0
  %v1975 = vadd.f32 0.0, %v1974
  %v1976 = vpop.f32.mrf.mxu0
  %v1977 = vadd.f32 0.0, %v1976
  %1978 = vmatmul.bf16.gmra.mxu0 %v1945
  %v1979 = vpop.f32.mrf.mxu0
  %v1980 = vadd.f32 0.0, %v1979
  %v1981 = vpop.f32.mrf.mxu0
  %1982 = vdwg.mxu0
  %1983 = vmatpush.bf16.msra.mxu0 0
  %1984 = vmatpush.bf16.msra.mxu0 0
  %1985 = vmatpush.bf16.msra.mxu0 0
  %1986 = vmatpush.bf16.msra.mxu0 0
  %1987 = vmatpush.bf16.msra.mxu0 0
  %1988 = vmatpush.bf16.msra.mxu0 0
  %1989 = vmatpush.bf16.msra.mxu0 %v884
  %1990 = vmatpush.bf16.msra.mxu0 %v876
  %1991 = vmatmul.bf16.gmra.mxu0 %v1942
  %v1992 = vpop.f32.mrf.mxu0
  %v1993 = vadd.f32 0.0, %v1992
  %v1994 = vpop.f32.mrf.mxu0
  %v1995 = vadd.f32 0.0, %v1994
  %1996 = vmatmul.bf16.gmra.mxu0 %v1945
  %v1997 = vpop.f32.mrf.mxu0
  %v1998 = vadd.f32 0.0, %v1997
  %v1999 = vpop.f32.mrf.mxu0
  %2000 = vdwg.mxu0
  %2001 = vmatpush.bf16.msra.mxu0 0
  %2002 = vmatpush.bf16.msra.mxu0 0
  %2003 = vmatpush.bf16.msra.mxu0 0
  %2004 = vmatpush.bf16.msra.mxu0 0
  %2005 = vmatpush.bf16.msra.mxu0 0
  %2006 = vmatpush.bf16.msra.mxu0 0
  %2007 = vmatpush.bf16.msra.mxu0 %v885
  %2008 = vmatpush.bf16.msra.mxu0 %v877
  %2009 = vmatmul.bf16.gmra.mxu0 %v1942
  %v2010 = vpop.f32.mrf.mxu0
  %v2011 = vadd.f32 0.0, %v2010
  %v2012 = vpop.f32.mrf.mxu0
  %v2013 = vadd.f32 0.0, %v2012
  %2014 = vmatmul.bf16.gmra.mxu0 %v1945
  %v2015 = vpop.f32.mrf.mxu0
  %v2016 = vadd.f32 0.0, %v2015
  %v2017 = vpop.f32.mrf.mxu0
  %2018 = vdwg.mxu0
  %2019 = vmatpush.bf16.msra.mxu0 0
  %2020 = vmatpush.bf16.msra.mxu0 0
  %2021 = vmatpush.bf16.msra.mxu0 0
  %2022 = vmatpush.bf16.msra.mxu0 0
  %2023 = vmatpush.bf16.msra.mxu0 0
  %2024 = vmatpush.bf16.msra.mxu0 0
  %2025 = vmatpush.bf16.msra.mxu0 %v886
  %2026 = vmatpush.bf16.msra.mxu0 %v878
  %2027 = vmatmul.bf16.gmra.mxu0 %v1942
  %v2028 = vpop.f32.mrf.mxu0
  %v2029 = vadd.f32 0.0, %v2028
  %v2030 = vpop.f32.mrf.mxu0
  %v2031 = vadd.f32 0.0, %v2030
  %2032 = vmatmul.bf16.gmra.mxu0 %v1945
  %v2033 = vpop.f32.mrf.mxu0
  %v2034 = vadd.f32 0.0, %v2033
  %v2035 = vpop.f32.mrf.mxu0
  %2036 = vdwg.mxu0
  %2037 = vmatpush.bf16.msra.mxu0 0
  %2038 = vmatpush.bf16.msra.mxu0 0
  %2039 = vmatpush.bf16.msra.mxu0 0
  %2040 = vmatpush.bf16.msra.mxu0 0
  %2041 = vmatpush.bf16.msra.mxu0 0
  %2042 = vmatpush.bf16.msra.mxu0 0
  %2043 = vmatpush.bf16.msra.mxu0 %v887
  %2044 = vmatpush.bf16.msra.mxu0 %v879
  %2045 = vmatmul.bf16.gmra.mxu0 %v1942
  %v2046 = vpop.f32.mrf.mxu0
  %v2047 = vadd.f32 0.0, %v2046
  %v2048 = vpop.f32.mrf.mxu0
  %v2049 = vadd.f32 0.0, %v2048
  %2050 = vmatmul.bf16.gmra.mxu0 %v1945
  %v2051 = vpop.f32.mrf.mxu0
  %v2052 = vadd.f32 0.0, %v2051
  %v2053 = vpop.f32.mrf.mxu0
  %2054 = vdwg.mxu0
  %2055 = vmatpush.bf16.msra.mxu0 0
  %2056 = vmatpush.bf16.msra.mxu0 0
  %2057 = vmatpush.bf16.msra.mxu0 0
  %2058 = vmatpush.bf16.msra.mxu0 0
  %2059 = vmatpush.bf16.msra.mxu0 0
  %2060 = vmatpush.bf16.msra.mxu0 0
  %2061 = vmatpush.bf16.msra.mxu0 %v888
  %2062 = vmatpush.bf16.msra.mxu0 %v880
  %2063 = vmatmul.bf16.gmra.mxu0 %v1942
  %v2064 = vpop.f32.mrf.mxu0
  %v2065 = vadd.f32 0.0, %v2064
  %v2066 = vpop.f32.mrf.mxu0
  %v2067 = vadd.f32 0.0, %v2066
  %2068 = vmatmul.bf16.gmra.mxu0 %v1945
  %v2069 = vpop.f32.mrf.mxu0
  %v2070 = vadd.f32 0.0, %v2069
  %v2071 = vpop.f32.mrf.mxu0
  %2072 = vdwg.mxu0
  %2073 = vmatpush.bf16.msra.mxu0 0
  %2074 = vmatpush.bf16.msra.mxu0 0
  %2075 = vmatpush.bf16.msra.mxu0 0
  %2076 = vmatpush.bf16.msra.mxu0 0
  %2077 = vmatpush.bf16.msra.mxu0 0
  %2078 = vmatpush.bf16.msra.mxu0 0
  %2079 = vmatpush.bf16.msra.mxu0 %v889
  %2080 = vmatpush.bf16.msra.mxu0 %v881
  %2081 = vmatmul.bf16.gmra.mxu0 %v1942
  %v2082 = vpop.f32.mrf.mxu0
  %v2083 = vadd.f32 0.0, %v2082
  %v2084 = vpop.f32.mrf.mxu0
  %v2085 = vadd.f32 0.0, %v2084
  %2086 = vmatmul.bf16.gmra.mxu0 %v1945
  %v2087 = vpop.f32.mrf.mxu0
  %v2088 = vadd.f32 0.0, %v2087
  %v2089 = vpop.f32.mrf.mxu0
  %2090 = vdwg.mxu0
  %v2091 = vpack.c.bf16 %v1975, %v1957
  %v2092 = vpack.c.bf16 %v2011, %v1993
  %v2093 = vpack.c.bf16 %v2047, %v2029
  %v2094 = vpack.c.bf16 %v2083, %v2065
  %v2095 = vpack.c.bf16 %v1977, %v1959
  %v2096 = vpack.c.bf16 %v2013, %v1995
  %v2097 = vpack.c.bf16 %v2049, %v2031
  %v2098 = vpack.c.bf16 %v2085, %v2067
  %v2099 = vpack.c.bf16 %v1980, %v1962
  %v2100 = vpack.c.bf16 %v2016, %v1998
  %v2101 = vpack.c.bf16 %v2052, %v2034
  %v2102 = vpack.c.bf16 %v2088, %v2070
  %v2103 = vunpack.c.l.bf16 %v2091
  %v2104 = vunpack.c.h.bf16 %v2091
  %v2105 = vunpack.c.l.bf16 %v2092
  %v2106 = vunpack.c.h.bf16 %v2092
  %v2107 = vunpack.c.l.bf16 %v2093
  %v2108 = vunpack.c.h.bf16 %v2093
  %v2109 = vunpack.c.l.bf16 %v2094
  %v2110 = vunpack.c.h.bf16 %v2094
  %v2111 = vunpack.c.l.bf16 %v2095
  %v2112 = vunpack.c.h.bf16 %v2095
  %v2113 = vunpack.c.l.bf16 %v2096
  %v2114 = vunpack.c.h.bf16 %v2096
  %v2115 = vunpack.c.l.bf16 %v2097
  %v2116 = vunpack.c.h.bf16 %v2097
  %v2117 = vunpack.c.l.bf16 %v2098
  %v2118 = vunpack.c.h.bf16 %v2098
  %v2119 = vunpack.c.l.bf16 %v2099
  %v2120 = vunpack.c.h.bf16 %v2099
  %v2121 = vunpack.c.l.bf16 %v2100
  %v2122 = vunpack.c.h.bf16 %v2100
  %v2123 = vunpack.c.l.bf16 %v2101
  %v2124 = vunpack.c.h.bf16 %v2101
  %v2125 = vunpack.c.l.bf16 %v2102
  %v2126 = vunpack.c.h.bf16 %v2102
  %v2127 = vmul.f32 %v2103, %v1093
  %v2128 = vmul.f32 %v2104, %v1094
  %v2129 = vmul.f32 %v2105, %v1095
  %v2130 = vmul.f32 %v2106, %v1096
  %v2131 = vmul.f32 %v2107, %v1097
  %v2132 = vmul.f32 %v2108, %v1098
  %v2133 = vmul.f32 %v2109, %v1099
  %v2134 = vmul.f32 %v2110, %v1100
  %v2135 = vmul.f32 %v2111, %v1101
  %v2136 = vmul.f32 %v2112, %v1102
  %v2137 = vmul.f32 %v2113, %v1103
  %v2138 = vmul.f32 %v2114, %v1104
  %v2139 = vmul.f32 %v2115, %v1105
  %v2140 = vmul.f32 %v2116, %v1106
  %v2141 = vmul.f32 %v2117, %v1107
  %v2142 = vmul.f32 %v2118, %v1108
  %v2143 = vmul.f32 %v2119, %v1109
  %v2144 = vmul.f32 %v2120, %v1110
  %v2145 = vmul.f32 %v2121, %v1111
  %v2146 = vmul.f32 %v2122, %v1112
  %v2147 = vmul.f32 %v2123, %v1113
  %v2148 = vmul.f32 %v2124, %v1114
  %v2149 = vmul.f32 %v2125, %v1115
  %v2150 = vmul.f32 %v2126, %v1116
  %v2151 = vpack.c.bf16 %v2135, %v2127
  %v2152 = vpack.c.bf16 %v2136, %v2128
  %v2153 = vpack.c.bf16 %v2137, %v2129
  %v2154 = vpack.c.bf16 %v2138, %v2130
  %v2155 = vpack.c.bf16 %v2139, %v2131
  %v2156 = vpack.c.bf16 %v2140, %v2132
  %v2157 = vpack.c.bf16 %v2141, %v2133
  %v2158 = vpack.c.bf16 %v2142, %v2134
  %v2159 = vpack.c.bf16 %v2143, %v2143
  %v2160 = vpack.c.bf16 %v2144, %v2144
  %v2161 = vpack.c.bf16 %v2145, %v2145
  %v2162 = vpack.c.bf16 %v2146, %v2146
  %v2163 = vpack.c.bf16 %v2147, %v2147
  %v2164 = vpack.c.bf16 %v2148, %v2148
  %v2165 = vpack.c.bf16 %v2149, %v2149
  %v2166 = vpack.c.bf16 %v2150, %v2150
  %2167 = vmatpush.bf16.msra.mxu0 %v1420
  %2168 = vmatpush.bf16.msra.mxu0 %v1419
  %2169 = vmatpush.bf16.msra.mxu0 %v1418
  %2170 = vmatpush.bf16.msra.mxu0 %v1417
  %2171 = vmatpush.bf16.msra.mxu0 %v1416
  %2172 = vmatpush.bf16.msra.mxu0 %v1415
  %2173 = vmatpush.bf16.msra.mxu0 %v1414
  %2174 = vmatpush.bf16.msra.mxu0 %v1413
  %2175 = vmatmul.bf16.gmra.mxu0 %v2151
  %v2176 = vpop.f32.mrf.mxu0
  %v2177 = vadd.f32 0.0, %v2176
  %v2178 = vpop.f32.mrf.mxu0
  %v2179 = vadd.f32 0.0, %v2178
  %2180 = vmatmul.bf16.gmra.mxu0 %v2159
  %v2181 = vpop.f32.mrf.mxu0
  %v2182 = vadd.f32 0.0, %v2181
  %v2183 = vpop.f32.mrf.mxu0
  %2184 = vdwg.mxu0
  %2185 = vmatpush.bf16.msra.mxu0 %v1428
  %2186 = vmatpush.bf16.msra.mxu0 %v1427
  %2187 = vmatpush.bf16.msra.mxu0 %v1426
  %2188 = vmatpush.bf16.msra.mxu0 %v1425
  %2189 = vmatpush.bf16.msra.mxu0 %v1424
  %2190 = vmatpush.bf16.msra.mxu0 %v1423
  %2191 = vmatpush.bf16.msra.mxu0 %v1422
  %2192 = vmatpush.bf16.msra.mxu0 %v1421
  %2193 = vmatmul.bf16.gmra.mxu0 %v2152
  %v2194 = vpop.f32.mrf.mxu0
  %v2195 = vadd.f32 %v2177, %v2194
  %v2196 = vpop.f32.mrf.mxu0
  %v2197 = vadd.f32 %v2179, %v2196
  %2198 = vmatmul.bf16.gmra.mxu0 %v2160
  %v2199 = vpop.f32.mrf.mxu0
  %v2200 = vadd.f32 %v2182, %v2199
  %v2201 = vpop.f32.mrf.mxu0
  %2202 = vdwg.mxu0
  %2203 = vmatpush.bf16.msra.mxu0 %v1436
  %2204 = vmatpush.bf16.msra.mxu0 %v1435
  %2205 = vmatpush.bf16.msra.mxu0 %v1434
  %2206 = vmatpush.bf16.msra.mxu0 %v1433
  %2207 = vmatpush.bf16.msra.mxu0 %v1432
  %2208 = vmatpush.bf16.msra.mxu0 %v1431
  %2209 = vmatpush.bf16.msra.mxu0 %v1430
  %2210 = vmatpush.bf16.msra.mxu0 %v1429
  %2211 = vmatmul.bf16.gmra.mxu0 %v2153
  %v2212 = vpop.f32.mrf.mxu0
  %v2213 = vadd.f32 %v2195, %v2212
  %v2214 = vpop.f32.mrf.mxu0
  %v2215 = vadd.f32 %v2197, %v2214
  %2216 = vmatmul.bf16.gmra.mxu0 %v2161
  %v2217 = vpop.f32.mrf.mxu0
  %v2218 = vadd.f32 %v2200, %v2217
  %v2219 = vpop.f32.mrf.mxu0
  %2220 = vdwg.mxu0
  %2221 = vmatpush.bf16.msra.mxu0 %v1444
  %2222 = vmatpush.bf16.msra.mxu0 %v1443
  %2223 = vmatpush.bf16.msra.mxu0 %v1442
  %2224 = vmatpush.bf16.msra.mxu0 %v1441
  %2225 = vmatpush.bf16.msra.mxu0 %v1440
  %2226 = vmatpush.bf16.msra.mxu0 %v1439
  %2227 = vmatpush.bf16.msra.mxu0 %v1438
  %2228 = vmatpush.bf16.msra.mxu0 %v1437
  %2229 = vmatmul.bf16.gmra.mxu0 %v2154
  %v2230 = vpop.f32.mrf.mxu0
  %v2231 = vadd.f32 %v2213, %v2230
  %v2232 = vpop.f32.mrf.mxu0
  %v2233 = vadd.f32 %v2215, %v2232
  %2234 = vmatmul.bf16.gmra.mxu0 %v2162
  %v2235 = vpop.f32.mrf.mxu0
  %v2236 = vadd.f32 %v2218, %v2235
  %v2237 = vpop.f32.mrf.mxu0
  %2238 = vdwg.mxu0
  %2239 = vmatpush.bf16.msra.mxu0 %v1452
  %2240 = vmatpush.bf16.msra.mxu0 %v1451
  %2241 = vmatpush.bf16.msra.mxu0 %v1450
  %2242 = vmatpush.bf16.msra.mxu0 %v1449
  %2243 = vmatpush.bf16.msra.mxu0 %v1448
  %2244 = vmatpush.bf16.msra.mxu0 %v1447
  %2245 = vmatpush.bf16.msra.mxu0 %v1446
  %2246 = vmatpush.bf16.msra.mxu0 %v1445
  %2247 = vmatmul.bf16.gmra.mxu0 %v2155
  %v2248 = vpop.f32.mrf.mxu0
  %v2249 = vadd.f32 %v2231, %v2248
  %v2250 = vpop.f32.mrf.mxu0
  %v2251 = vadd.f32 %v2233, %v2250
  %2252 = vmatmul.bf16.gmra.mxu0 %v2163
  %v2253 = vpop.f32.mrf.mxu0
  %v2254 = vadd.f32 %v2236, %v2253
  %v2255 = vpop.f32.mrf.mxu0
  %2256 = vdwg.mxu0
  %2257 = vmatpush.bf16.msra.mxu0 %v1460
  %2258 = vmatpush.bf16.msra.mxu0 %v1459
  %2259 = vmatpush.bf16.msra.mxu0 %v1458
  %2260 = vmatpush.bf16.msra.mxu0 %v1457
  %2261 = vmatpush.bf16.msra.mxu0 %v1456
  %2262 = vmatpush.bf16.msra.mxu0 %v1455
  %2263 = vmatpush.bf16.msra.mxu0 %v1454
  %2264 = vmatpush.bf16.msra.mxu0 %v1453
  %2265 = vmatmul.bf16.gmra.mxu0 %v2156
  %v2266 = vpop.f32.mrf.mxu0
  %v2267 = vadd.f32 %v2249, %v2266
  %v2268 = vpop.f32.mrf.mxu0
  %v2269 = vadd.f32 %v2251, %v2268
  %2270 = vmatmul.bf16.gmra.mxu0 %v2164
  %v2271 = vpop.f32.mrf.mxu0
  %v2272 = vadd.f32 %v2254, %v2271
  %v2273 = vpop.f32.mrf.mxu0
  %2274 = vdwg.mxu0
  %2275 = vmatpush.bf16.msra.mxu0 %v1468
  %2276 = vmatpush.bf16.msra.mxu0 %v1467
  %2277 = vmatpush.bf16.msra.mxu0 %v1466
  %2278 = vmatpush.bf16.msra.mxu0 %v1465
  %2279 = vmatpush.bf16.msra.mxu0 %v1464
  %2280 = vmatpush.bf16.msra.mxu0 %v1463
  %2281 = vmatpush.bf16.msra.mxu0 %v1462
  %2282 = vmatpush.bf16.msra.mxu0 %v1461
  %2283 = vmatmul.bf16.gmra.mxu0 %v2157
  %v2284 = vpop.f32.mrf.mxu0
  %v2285 = vadd.f32 %v2267, %v2284
  %v2286 = vpop.f32.mrf.mxu0
  %v2287 = vadd.f32 %v2269, %v2286
  %2288 = vmatmul.bf16.gmra.mxu0 %v2165
  %v2289 = vpop.f32.mrf.mxu0
  %v2290 = vadd.f32 %v2272, %v2289
  %v2291 = vpop.f32.mrf.mxu0
  %2292 = vdwg.mxu0
  %2293 = vmatpush.bf16.msra.mxu0 %v1476
  %2294 = vmatpush.bf16.msra.mxu0 %v1475
  %2295 = vmatpush.bf16.msra.mxu0 %v1474
  %2296 = vmatpush.bf16.msra.mxu0 %v1473
  %2297 = vmatpush.bf16.msra.mxu0 %v1472
  %2298 = vmatpush.bf16.msra.mxu0 %v1471
  %2299 = vmatpush.bf16.msra.mxu0 %v1470
  %2300 = vmatpush.bf16.msra.mxu0 %v1469
  %2301 = vmatmul.bf16.gmra.mxu0 %v2158
  %v2302 = vpop.f32.mrf.mxu0
  %v2303 = vadd.f32 %v2285, %v2302
  %v2304 = vpop.f32.mrf.mxu0
  %v2305 = vadd.f32 %v2287, %v2304
  %2306 = vmatmul.bf16.gmra.mxu0 %v2166
  %v2307 = vpop.f32.mrf.mxu0
  %v2308 = vadd.f32 %v2290, %v2307
  %v2309 = vpop.f32.mrf.mxu0
  %2310 = vdwg.mxu0
  %v2311 = vpack.c.bf16 %v2305, %v2303
  %v2312 = vpack.c.bf16 %v2308, %v2308
  %v2314 = vsel %vm1690, %v2312, 0
  %2316 = vmatpush.bf16.msra.mxu0 0
  %2317 = vmatpush.bf16.msra.mxu0 0
  %2318 = vmatpush.bf16.msra.mxu0 0
  %2319 = vmatpush.bf16.msra.mxu0 0
  %2320 = vmatpush.bf16.msra.mxu0 0
  %2321 = vmatpush.bf16.msra.mxu0 0
  %2322 = vmatpush.bf16.msra.mxu0 %v2314
  %2323 = vmatpush.bf16.msra.mxu0 %v2311
  %2324 = vmatmul.bf16.gmra.mxu0 %v1688
  %v2325 = vpop.f32.mrf.mxu0
  %v2326 = vadd.f32 0.0, %v2325
  %v2327 = vpop.f32.mrf.mxu0
  %v2328 = vadd.f32 0.0, %v2327
  %2329 = vdwg.mxu0
  %v2330 = vmul.f32 %v2326, %v143
  %v2331 = vmul.f32 %v2328, %v158
  %v2332 = vsel %vm906, %v1917, 0
  %2334 = vmatpush.bf16.msra.mxu0 0
  %2335 = vmatpush.bf16.msra.mxu0 0
  %2336 = vmatpush.bf16.msra.mxu0 0
  %2337 = vmatpush.bf16.msra.mxu0 0
  %2338 = vmatpush.bf16.msra.mxu0 0
  %2339 = vmatpush.bf16.msra.mxu0 0
  %2340 = vmatpush.bf16.msra.mxu0 %v1719
  %2341 = vmatpush.bf16.msra.mxu0 %v1718
  %2342 = vmatmul.bf16.gmra.mxu0 %v2332
  %v2343 = vpop.f32.mrf.mxu0
  %v2344 = vadd.f32 0.0, %v2343
  %v2345 = vpop.f32.mrf.mxu0
  %v2346 = vadd.f32 0.0, %v2345
  %2347 = vdwg.mxu0
  %v2348 = vadd.f32 %v2330, %v2344
  %v2349 = vadd.f32 %v2331, %v2346
  %v2350 = vadd.f32 %v2348, %v1741
  %v2351 = vadd.f32 %v2349, %v1741
  %v2352 = vmul.f32 %v2350, 0.5
  %v2353 = vmul.f32 %v2351, 0.5
  %v2354 = vtanh.pop %v2352
  %v2355 = vtanh.pop %v2353
  %v2356 = vadd.f32 %v2354, 1.0
  %v2357 = vadd.f32 %v2355, 1.0
  %v2358 = vmul.f32 %v2356, 0.5
  %v2359 = vmul.f32 %v2357, 0.5
  %v2360 = vmul.f32 %v2350, %v2358
  %v2361 = vmul.f32 %v2351, %v2359
  %v2362 = vsel %vm906, %v2360, %v1912
  %v2363 = vsel %vm906, %v2361, %v1913
  %v2364 = vpack.c.bf16 %v2363, %v2362
  %v2366 = vsel %vm474, %v2364, 0
  %2368 = vmatpush.bf16.msra.mxu0 0
  %2369 = vmatpush.bf16.msra.mxu0 0
  %2370 = vmatpush.bf16.msra.mxu0 0
  %2371 = vmatpush.bf16.msra.mxu0 0
  %2372 = vmatpush.bf16.msra.mxu0 %v1801
  %2373 = vmatpush.bf16.msra.mxu0 %v1799
  %2374 = vmatpush.bf16.msra.mxu0 %v1797
  %2375 = vmatpush.bf16.msra.mxu0 %v1795
  %2376 = vmatmul.bf16.gmra.mxu0 %v2366
  %v2377 = vpop.f32.mrf.mxu0
  %v2378 = vadd.f32 %v1767, %v2377
  %v2379 = vpop.f32.mrf.mxu0
  %v2380 = vadd.f32 %v1767, %v2379
  %2381 = vdwg.mxu0
  %2382 = vmatpush.bf16.msra.mxu0 0
  %2383 = vmatpush.bf16.msra.mxu0 0
  %2384 = vmatpush.bf16.msra.mxu0 0
  %2385 = vmatpush.bf16.msra.mxu0 0
  %2386 = vmatpush.bf16.msra.mxu0 %v1802
  %2387 = vmatpush.bf16.msra.mxu0 %v1800
  %2388 = vmatpush.bf16.msra.mxu0 %v1798
  %2389 = vmatpush.bf16.msra.mxu0 %v1796
  %2390 = vmatmul.bf16.gmra.mxu0 %v2366
  %v2391 = vpop.f32.mrf.mxu0
  %v2392 = vadd.f32 %v1768, %v2391
  %v2393 = vpop.f32.mrf.mxu0
  %v2394 = vadd.f32 %v1768, %v2393
  %2395 = vdwg.mxu0
  %2398 = vrot.lane.b32.xlu0 %v2378, 32
  %v2399 = vpop.permute.xlu0 %2398
  %2400 = vrot.lane.b32.xlu0 %v2380, 32
  %v2401 = vpop.permute.xlu0 %2400
  %v2404 = vadd.f32 %v2378, %v2399
  %v2405 = vadd.f32 %v2380, %v2401
  %v2406 = vmul.f32 %v2404, 0.5
  %v2407 = vmul.f32 %v2405, 0.5
  %v2408 = vtanh.pop %v2406
  %v2409 = vtanh.pop %v2407
  %v2410 = vadd.f32 %v2408, 1.0
  %v2411 = vadd.f32 %v2409, 1.0
  %v2412 = vmul.f32 %v2410, 0.5
  %v2413 = vmul.f32 %v2411, 0.5
  %2416 = vrot.lane.b32.xlu0 %v2392, 32
  %v2417 = vpop.permute.xlu0 %2416
  %2418 = vrot.lane.b32.xlu0 %v2394, 32
  %v2419 = vpop.permute.xlu0 %2418
  %v2422 = vadd.f32 %v2378, %v2417
  %v2423 = vadd.f32 %v2380, %v2419
  %v2424 = vmul.f32 %v2422, 0.5
  %v2425 = vmul.f32 %v2423, 0.5
  %v2426 = vtanh.pop %v2424
  %v2427 = vtanh.pop %v2425
  %v2428 = vadd.f32 %v2426, 1.0
  %v2429 = vadd.f32 %v2427, 1.0
  %v2430 = vmul.f32 %v2428, 0.5
  %v2431 = vmul.f32 %v2429, 0.5
  %2432 = vrot.lane.b32.xlu0 %v2392, 96
  %v2433 = vpop.permute.xlu0 %2432
  %2434 = vrot.lane.b32.xlu0 %v2394, 96
  %v2435 = vpop.permute.xlu0 %2434
  %v2438 = vmul.f32 %v2412, %v2433
  %v2439 = vmul.f32 %v2413, %v2435
  %2442 = vrot.lane.b32.xlu0 %v2438, 64
  %v2443 = vpop.permute.xlu0 %2442
  %2444 = vrot.lane.b32.xlu0 %v2439, 64
  %v2445 = vpop.permute.xlu0 %2444
  %v2448 = vadd.f32 %v2378, %v2443
  %v2449 = vadd.f32 %v2380, %v2445
  %v2450 = vtanh.pop %v2448
  %v2451 = vtanh.pop %v2449
  %v2452 = vsub.f32 1.0, %v2430
  %v2453 = vsub.f32 1.0, %v2431
  %2456 = vrot.lane.b32.xlu0 %v2450, 96
  %v2457 = vpop.permute.xlu0 %2456
  %2458 = vrot.lane.b32.xlu0 %v2451, 96
  %v2459 = vpop.permute.xlu0 %2458
  %v2462 = vmul.f32 %v2452, %v2457
  %v2463 = vmul.f32 %v2453, %v2459
  %v2464 = vmul.f32 %v2430, %v1912
  %v2465 = vmul.f32 %v2431, %v1913
  %v2466 = vadd.f32 %v2462, %v2464
  %v2467 = vadd.f32 %v2463, %v2465
  %v2468 = vpack.c.bf16 %v2467, %v2466
  %2470 = vrot.lane.b32.xlu0 %v2468, 96
  %v2471 = vpop.permute.xlu0 %2470
  %v2473 = vsel %vm178, %v2471, 0
  %2475 = vmatpush.bf16.msra.mxu0 0
  %2476 = vmatpush.bf16.msra.mxu0 0
  %2477 = vmatpush.bf16.msra.mxu0 0
  %2478 = vmatpush.bf16.msra.mxu0 0
  %2479 = vmatpush.bf16.msra.mxu0 0
  %2480 = vmatpush.bf16.msra.mxu0 0
  %2481 = vmatpush.bf16.msra.mxu0 0
  %2482 = vmatpush.bf16.msra.mxu0 %v2473
  %2483 = vmatmul.bf16.gmra.mxu0 %v798
  %v2484 = vpop.f32.mrf.mxu0
  %v2485 = vadd.f32 0.0, %v2484
  %v2486 = vpop.f32.mrf.mxu0
  %v2487 = vadd.f32 0.0, %v2486
  %2488 = vmatmul.bf16.gmra.mxu0 %v801
  %v2489 = vpop.f32.mrf.mxu0
  %v2490 = vadd.f32 0.0, %v2489
  %v2491 = vpop.f32.mrf.mxu0
  %2492 = vdwg.mxu0
  %v2493 = vpack.c.bf16 %v2487, %v2485
  %v2494 = vpack.c.bf16 %v2490, %v2490
  %v2496 = vsel %vm906, %v2493, 0
  %v2499 = vsel %vm906, %v2494, 0
  %2501 = vmatpush.bf16.msra.mxu0 0
  %2502 = vmatpush.bf16.msra.mxu0 0
  %2503 = vmatpush.bf16.msra.mxu0 0
  %2504 = vmatpush.bf16.msra.mxu0 0
  %2505 = vmatpush.bf16.msra.mxu0 0
  %2506 = vmatpush.bf16.msra.mxu0 0
  %2507 = vmatpush.bf16.msra.mxu0 %v882
  %2508 = vmatpush.bf16.msra.mxu0 %v874
  %2509 = vmatmul.bf16.gmra.mxu0 %v2496
  %v2510 = vpop.f32.mrf.mxu0
  %v2511 = vadd.f32 0.0, %v2510
  %v2512 = vpop.f32.mrf.mxu0
  %v2513 = vadd.f32 0.0, %v2512
  %2514 = vmatmul.bf16.gmra.mxu0 %v2499
  %v2515 = vpop.f32.mrf.mxu0
  %v2516 = vadd.f32 0.0, %v2515
  %v2517 = vpop.f32.mrf.mxu0
  %2518 = vdwg.mxu0
  %2519 = vmatpush.bf16.msra.mxu0 0
  %2520 = vmatpush.bf16.msra.mxu0 0
  %2521 = vmatpush.bf16.msra.mxu0 0
  %2522 = vmatpush.bf16.msra.mxu0 0
  %2523 = vmatpush.bf16.msra.mxu0 0
  %2524 = vmatpush.bf16.msra.mxu0 0
  %2525 = vmatpush.bf16.msra.mxu0 %v883
  %2526 = vmatpush.bf16.msra.mxu0 %v875
  %2527 = vmatmul.bf16.gmra.mxu0 %v2496
  %v2528 = vpop.f32.mrf.mxu0
  %v2529 = vadd.f32 0.0, %v2528
  %v2530 = vpop.f32.mrf.mxu0
  %v2531 = vadd.f32 0.0, %v2530
  %2532 = vmatmul.bf16.gmra.mxu0 %v2499
  %v2533 = vpop.f32.mrf.mxu0
  %v2534 = vadd.f32 0.0, %v2533
  %v2535 = vpop.f32.mrf.mxu0
  %2536 = vdwg.mxu0
  %2537 = vmatpush.bf16.msra.mxu0 0
  %2538 = vmatpush.bf16.msra.mxu0 0
  %2539 = vmatpush.bf16.msra.mxu0 0
  %2540 = vmatpush.bf16.msra.mxu0 0
  %2541 = vmatpush.bf16.msra.mxu0 0
  %2542 = vmatpush.bf16.msra.mxu0 0
  %2543 = vmatpush.bf16.msra.mxu0 %v884
  %2544 = vmatpush.bf16.msra.mxu0 %v876
  %2545 = vmatmul.bf16.gmra.mxu0 %v2496
  %v2546 = vpop.f32.mrf.mxu0
  %v2547 = vadd.f32 0.0, %v2546
  %v2548 = vpop.f32.mrf.mxu0
  %v2549 = vadd.f32 0.0, %v2548
  %2550 = vmatmul.bf16.gmra.mxu0 %v2499
  %v2551 = vpop.f32.mrf.mxu0
  %v2552 = vadd.f32 0.0, %v2551
  %v2553 = vpop.f32.mrf.mxu0
  %2554 = vdwg.mxu0
  %2555 = vmatpush.bf16.msra.mxu0 0
  %2556 = vmatpush.bf16.msra.mxu0 0
  %2557 = vmatpush.bf16.msra.mxu0 0
  %2558 = vmatpush.bf16.msra.mxu0 0
  %2559 = vmatpush.bf16.msra.mxu0 0
  %2560 = vmatpush.bf16.msra.mxu0 0
  %2561 = vmatpush.bf16.msra.mxu0 %v885
  %2562 = vmatpush.bf16.msra.mxu0 %v877
  %2563 = vmatmul.bf16.gmra.mxu0 %v2496
  %v2564 = vpop.f32.mrf.mxu0
  %v2565 = vadd.f32 0.0, %v2564
  %v2566 = vpop.f32.mrf.mxu0
  %v2567 = vadd.f32 0.0, %v2566
  %2568 = vmatmul.bf16.gmra.mxu0 %v2499
  %v2569 = vpop.f32.mrf.mxu0
  %v2570 = vadd.f32 0.0, %v2569
  %v2571 = vpop.f32.mrf.mxu0
  %2572 = vdwg.mxu0
  %2573 = vmatpush.bf16.msra.mxu0 0
  %2574 = vmatpush.bf16.msra.mxu0 0
  %2575 = vmatpush.bf16.msra.mxu0 0
  %2576 = vmatpush.bf16.msra.mxu0 0
  %2577 = vmatpush.bf16.msra.mxu0 0
  %2578 = vmatpush.bf16.msra.mxu0 0
  %2579 = vmatpush.bf16.msra.mxu0 %v886
  %2580 = vmatpush.bf16.msra.mxu0 %v878
  %2581 = vmatmul.bf16.gmra.mxu0 %v2496
  %v2582 = vpop.f32.mrf.mxu0
  %v2583 = vadd.f32 0.0, %v2582
  %v2584 = vpop.f32.mrf.mxu0
  %v2585 = vadd.f32 0.0, %v2584
  %2586 = vmatmul.bf16.gmra.mxu0 %v2499
  %v2587 = vpop.f32.mrf.mxu0
  %v2588 = vadd.f32 0.0, %v2587
  %v2589 = vpop.f32.mrf.mxu0
  %2590 = vdwg.mxu0
  %2591 = vmatpush.bf16.msra.mxu0 0
  %2592 = vmatpush.bf16.msra.mxu0 0
  %2593 = vmatpush.bf16.msra.mxu0 0
  %2594 = vmatpush.bf16.msra.mxu0 0
  %2595 = vmatpush.bf16.msra.mxu0 0
  %2596 = vmatpush.bf16.msra.mxu0 0
  %2597 = vmatpush.bf16.msra.mxu0 %v887
  %2598 = vmatpush.bf16.msra.mxu0 %v879
  %2599 = vmatmul.bf16.gmra.mxu0 %v2496
  %v2600 = vpop.f32.mrf.mxu0
  %v2601 = vadd.f32 0.0, %v2600
  %v2602 = vpop.f32.mrf.mxu0
  %v2603 = vadd.f32 0.0, %v2602
  %2604 = vmatmul.bf16.gmra.mxu0 %v2499
  %v2605 = vpop.f32.mrf.mxu0
  %v2606 = vadd.f32 0.0, %v2605
  %v2607 = vpop.f32.mrf.mxu0
  %2608 = vdwg.mxu0
  %2609 = vmatpush.bf16.msra.mxu0 0
  %2610 = vmatpush.bf16.msra.mxu0 0
  %2611 = vmatpush.bf16.msra.mxu0 0
  %2612 = vmatpush.bf16.msra.mxu0 0
  %2613 = vmatpush.bf16.msra.mxu0 0
  %2614 = vmatpush.bf16.msra.mxu0 0
  %2615 = vmatpush.bf16.msra.mxu0 %v888
  %2616 = vmatpush.bf16.msra.mxu0 %v880
  %2617 = vmatmul.bf16.gmra.mxu0 %v2496
  %v2618 = vpop.f32.mrf.mxu0
  %v2619 = vadd.f32 0.0, %v2618
  %v2620 = vpop.f32.mrf.mxu0
  %v2621 = vadd.f32 0.0, %v2620
  %2622 = vmatmul.bf16.gmra.mxu0 %v2499
  %v2623 = vpop.f32.mrf.mxu0
  %v2624 = vadd.f32 0.0, %v2623
  %v2625 = vpop.f32.mrf.mxu0
  %2626 = vdwg.mxu0
  %2627 = vmatpush.bf16.msra.mxu0 0
  %2628 = vmatpush.bf16.msra.mxu0 0
  %2629 = vmatpush.bf16.msra.mxu0 0
  %2630 = vmatpush.bf16.msra.mxu0 0
  %2631 = vmatpush.bf16.msra.mxu0 0
  %2632 = vmatpush.bf16.msra.mxu0 0
  %2633 = vmatpush.bf16.msra.mxu0 %v889
  %2634 = vmatpush.bf16.msra.mxu0 %v881
  %2635 = vmatmul.bf16.gmra.mxu0 %v2496
  %v2636 = vpop.f32.mrf.mxu0
  %v2637 = vadd.f32 0.0, %v2636
  %v2638 = vpop.f32.mrf.mxu0
  %v2639 = vadd.f32 0.0, %v2638
  %2640 = vmatmul.bf16.gmra.mxu0 %v2499
  %v2641 = vpop.f32.mrf.mxu0
  %v2642 = vadd.f32 0.0, %v2641
  %v2643 = vpop.f32.mrf.mxu0
  %2644 = vdwg.mxu0
  %v2645 = vpack.c.bf16 %v2529, %v2511
  %v2646 = vpack.c.bf16 %v2565, %v2547
  %v2647 = vpack.c.bf16 %v2601, %v2583
  %v2648 = vpack.c.bf16 %v2637, %v2619
  %v2649 = vpack.c.bf16 %v2531, %v2513
  %v2650 = vpack.c.bf16 %v2567, %v2549
  %v2651 = vpack.c.bf16 %v2603, %v2585
  %v2652 = vpack.c.bf16 %v2639, %v2621
  %v2653 = vpack.c.bf16 %v2534, %v2516
  %v2654 = vpack.c.bf16 %v2570, %v2552
  %v2655 = vpack.c.bf16 %v2606, %v2588
  %v2656 = vpack.c.bf16 %v2642, %v2624
  %v2657 = vunpack.c.l.bf16 %v2645
  %v2658 = vunpack.c.h.bf16 %v2645
  %v2659 = vunpack.c.l.bf16 %v2646
  %v2660 = vunpack.c.h.bf16 %v2646
  %v2661 = vunpack.c.l.bf16 %v2647
  %v2662 = vunpack.c.h.bf16 %v2647
  %v2663 = vunpack.c.l.bf16 %v2648
  %v2664 = vunpack.c.h.bf16 %v2648
  %v2665 = vunpack.c.l.bf16 %v2649
  %v2666 = vunpack.c.h.bf16 %v2649
  %v2667 = vunpack.c.l.bf16 %v2650
  %v2668 = vunpack.c.h.bf16 %v2650
  %v2669 = vunpack.c.l.bf16 %v2651
  %v2670 = vunpack.c.h.bf16 %v2651
  %v2671 = vunpack.c.l.bf16 %v2652
  %v2672 = vunpack.c.h.bf16 %v2652
  %v2673 = vunpack.c.l.bf16 %v2653
  %v2674 = vunpack.c.h.bf16 %v2653
  %v2675 = vunpack.c.l.bf16 %v2654
  %v2676 = vunpack.c.h.bf16 %v2654
  %v2677 = vunpack.c.l.bf16 %v2655
  %v2678 = vunpack.c.h.bf16 %v2655
  %v2679 = vunpack.c.l.bf16 %v2656
  %v2680 = vunpack.c.h.bf16 %v2656
  %v2681 = vmul.f32 %v2657, %v1093
  %v2682 = vmul.f32 %v2658, %v1094
  %v2683 = vmul.f32 %v2659, %v1095
  %v2684 = vmul.f32 %v2660, %v1096
  %v2685 = vmul.f32 %v2661, %v1097
  %v2686 = vmul.f32 %v2662, %v1098
  %v2687 = vmul.f32 %v2663, %v1099
  %v2688 = vmul.f32 %v2664, %v1100
  %v2689 = vmul.f32 %v2665, %v1101
  %v2690 = vmul.f32 %v2666, %v1102
  %v2691 = vmul.f32 %v2667, %v1103
  %v2692 = vmul.f32 %v2668, %v1104
  %v2693 = vmul.f32 %v2669, %v1105
  %v2694 = vmul.f32 %v2670, %v1106
  %v2695 = vmul.f32 %v2671, %v1107
  %v2696 = vmul.f32 %v2672, %v1108
  %v2697 = vmul.f32 %v2673, %v1109
  %v2698 = vmul.f32 %v2674, %v1110
  %v2699 = vmul.f32 %v2675, %v1111
  %v2700 = vmul.f32 %v2676, %v1112
  %v2701 = vmul.f32 %v2677, %v1113
  %v2702 = vmul.f32 %v2678, %v1114
  %v2703 = vmul.f32 %v2679, %v1115
  %v2704 = vmul.f32 %v2680, %v1116
  %v2705 = vpack.c.bf16 %v2689, %v2681
  %v2706 = vpack.c.bf16 %v2690, %v2682
  %v2707 = vpack.c.bf16 %v2691, %v2683
  %v2708 = vpack.c.bf16 %v2692, %v2684
  %v2709 = vpack.c.bf16 %v2693, %v2685
  %v2710 = vpack.c.bf16 %v2694, %v2686
  %v2711 = vpack.c.bf16 %v2695, %v2687
  %v2712 = vpack.c.bf16 %v2696, %v2688
  %v2713 = vpack.c.bf16 %v2697, %v2697
  %v2714 = vpack.c.bf16 %v2698, %v2698
  %v2715 = vpack.c.bf16 %v2699, %v2699
  %v2716 = vpack.c.bf16 %v2700, %v2700
  %v2717 = vpack.c.bf16 %v2701, %v2701
  %v2718 = vpack.c.bf16 %v2702, %v2702
  %v2719 = vpack.c.bf16 %v2703, %v2703
  %v2720 = vpack.c.bf16 %v2704, %v2704
  %2721 = vmatpush.bf16.msra.mxu0 %v1420
  %2722 = vmatpush.bf16.msra.mxu0 %v1419
  %2723 = vmatpush.bf16.msra.mxu0 %v1418
  %2724 = vmatpush.bf16.msra.mxu0 %v1417
  %2725 = vmatpush.bf16.msra.mxu0 %v1416
  %2726 = vmatpush.bf16.msra.mxu0 %v1415
  %2727 = vmatpush.bf16.msra.mxu0 %v1414
  %2728 = vmatpush.bf16.msra.mxu0 %v1413
  %2729 = vmatmul.bf16.gmra.mxu0 %v2705
  %v2730 = vpop.f32.mrf.mxu0
  %v2731 = vadd.f32 0.0, %v2730
  %v2732 = vpop.f32.mrf.mxu0
  %v2733 = vadd.f32 0.0, %v2732
  %2734 = vmatmul.bf16.gmra.mxu0 %v2713
  %v2735 = vpop.f32.mrf.mxu0
  %v2736 = vadd.f32 0.0, %v2735
  %v2737 = vpop.f32.mrf.mxu0
  %2738 = vdwg.mxu0
  %2739 = vmatpush.bf16.msra.mxu0 %v1428
  %2740 = vmatpush.bf16.msra.mxu0 %v1427
  %2741 = vmatpush.bf16.msra.mxu0 %v1426
  %2742 = vmatpush.bf16.msra.mxu0 %v1425
  %2743 = vmatpush.bf16.msra.mxu0 %v1424
  %2744 = vmatpush.bf16.msra.mxu0 %v1423
  %2745 = vmatpush.bf16.msra.mxu0 %v1422
  %2746 = vmatpush.bf16.msra.mxu0 %v1421
  %2747 = vmatmul.bf16.gmra.mxu0 %v2706
  %v2748 = vpop.f32.mrf.mxu0
  %v2749 = vadd.f32 %v2731, %v2748
  %v2750 = vpop.f32.mrf.mxu0
  %v2751 = vadd.f32 %v2733, %v2750
  %2752 = vmatmul.bf16.gmra.mxu0 %v2714
  %v2753 = vpop.f32.mrf.mxu0
  %v2754 = vadd.f32 %v2736, %v2753
  %v2755 = vpop.f32.mrf.mxu0
  %2756 = vdwg.mxu0
  %2757 = vmatpush.bf16.msra.mxu0 %v1436
  %2758 = vmatpush.bf16.msra.mxu0 %v1435
  %2759 = vmatpush.bf16.msra.mxu0 %v1434
  %2760 = vmatpush.bf16.msra.mxu0 %v1433
  %2761 = vmatpush.bf16.msra.mxu0 %v1432
  %2762 = vmatpush.bf16.msra.mxu0 %v1431
  %2763 = vmatpush.bf16.msra.mxu0 %v1430
  %2764 = vmatpush.bf16.msra.mxu0 %v1429
  %2765 = vmatmul.bf16.gmra.mxu0 %v2707
  %v2766 = vpop.f32.mrf.mxu0
  %v2767 = vadd.f32 %v2749, %v2766
  %v2768 = vpop.f32.mrf.mxu0
  %v2769 = vadd.f32 %v2751, %v2768
  %2770 = vmatmul.bf16.gmra.mxu0 %v2715
  %v2771 = vpop.f32.mrf.mxu0
  %v2772 = vadd.f32 %v2754, %v2771
  %v2773 = vpop.f32.mrf.mxu0
  %2774 = vdwg.mxu0
  %2775 = vmatpush.bf16.msra.mxu0 %v1444
  %2776 = vmatpush.bf16.msra.mxu0 %v1443
  %2777 = vmatpush.bf16.msra.mxu0 %v1442
  %2778 = vmatpush.bf16.msra.mxu0 %v1441
  %2779 = vmatpush.bf16.msra.mxu0 %v1440
  %2780 = vmatpush.bf16.msra.mxu0 %v1439
  %2781 = vmatpush.bf16.msra.mxu0 %v1438
  %2782 = vmatpush.bf16.msra.mxu0 %v1437
  %2783 = vmatmul.bf16.gmra.mxu0 %v2708
  %v2784 = vpop.f32.mrf.mxu0
  %v2785 = vadd.f32 %v2767, %v2784
  %v2786 = vpop.f32.mrf.mxu0
  %v2787 = vadd.f32 %v2769, %v2786
  %2788 = vmatmul.bf16.gmra.mxu0 %v2716
  %v2789 = vpop.f32.mrf.mxu0
  %v2790 = vadd.f32 %v2772, %v2789
  %v2791 = vpop.f32.mrf.mxu0
  %2792 = vdwg.mxu0
  %2793 = vmatpush.bf16.msra.mxu0 %v1452
  %2794 = vmatpush.bf16.msra.mxu0 %v1451
  %2795 = vmatpush.bf16.msra.mxu0 %v1450
  %2796 = vmatpush.bf16.msra.mxu0 %v1449
  %2797 = vmatpush.bf16.msra.mxu0 %v1448
  %2798 = vmatpush.bf16.msra.mxu0 %v1447
  %2799 = vmatpush.bf16.msra.mxu0 %v1446
  %2800 = vmatpush.bf16.msra.mxu0 %v1445
  %2801 = vmatmul.bf16.gmra.mxu0 %v2709
  %v2802 = vpop.f32.mrf.mxu0
  %v2803 = vadd.f32 %v2785, %v2802
  %v2804 = vpop.f32.mrf.mxu0
  %v2805 = vadd.f32 %v2787, %v2804
  %2806 = vmatmul.bf16.gmra.mxu0 %v2717
  %v2807 = vpop.f32.mrf.mxu0
  %v2808 = vadd.f32 %v2790, %v2807
  %v2809 = vpop.f32.mrf.mxu0
  %2810 = vdwg.mxu0
  %2811 = vmatpush.bf16.msra.mxu0 %v1460
  %2812 = vmatpush.bf16.msra.mxu0 %v1459
  %2813 = vmatpush.bf16.msra.mxu0 %v1458
  %2814 = vmatpush.bf16.msra.mxu0 %v1457
  %2815 = vmatpush.bf16.msra.mxu0 %v1456
  %2816 = vmatpush.bf16.msra.mxu0 %v1455
  %2817 = vmatpush.bf16.msra.mxu0 %v1454
  %2818 = vmatpush.bf16.msra.mxu0 %v1453
  %2819 = vmatmul.bf16.gmra.mxu0 %v2710
  %v2820 = vpop.f32.mrf.mxu0
  %v2821 = vadd.f32 %v2803, %v2820
  %v2822 = vpop.f32.mrf.mxu0
  %v2823 = vadd.f32 %v2805, %v2822
  %2824 = vmatmul.bf16.gmra.mxu0 %v2718
  %v2825 = vpop.f32.mrf.mxu0
  %v2826 = vadd.f32 %v2808, %v2825
  %v2827 = vpop.f32.mrf.mxu0
  %2828 = vdwg.mxu0
  %2829 = vmatpush.bf16.msra.mxu0 %v1468
  %2830 = vmatpush.bf16.msra.mxu0 %v1467
  %2831 = vmatpush.bf16.msra.mxu0 %v1466
  %2832 = vmatpush.bf16.msra.mxu0 %v1465
  %2833 = vmatpush.bf16.msra.mxu0 %v1464
  %2834 = vmatpush.bf16.msra.mxu0 %v1463
  %2835 = vmatpush.bf16.msra.mxu0 %v1462
  %2836 = vmatpush.bf16.msra.mxu0 %v1461
  %2837 = vmatmul.bf16.gmra.mxu0 %v2711
  %v2838 = vpop.f32.mrf.mxu0
  %v2839 = vadd.f32 %v2821, %v2838
  %v2840 = vpop.f32.mrf.mxu0
  %v2841 = vadd.f32 %v2823, %v2840
  %2842 = vmatmul.bf16.gmra.mxu0 %v2719
  %v2843 = vpop.f32.mrf.mxu0
  %v2844 = vadd.f32 %v2826, %v2843
  %v2845 = vpop.f32.mrf.mxu0
  %2846 = vdwg.mxu0
  %2847 = vmatpush.bf16.msra.mxu0 %v1476
  %2848 = vmatpush.bf16.msra.mxu0 %v1475
  %2849 = vmatpush.bf16.msra.mxu0 %v1474
  %2850 = vmatpush.bf16.msra.mxu0 %v1473
  %2851 = vmatpush.bf16.msra.mxu0 %v1472
  %2852 = vmatpush.bf16.msra.mxu0 %v1471
  %2853 = vmatpush.bf16.msra.mxu0 %v1470
  %2854 = vmatpush.bf16.msra.mxu0 %v1469
  %2855 = vmatmul.bf16.gmra.mxu0 %v2712
  %v2856 = vpop.f32.mrf.mxu0
  %v2857 = vadd.f32 %v2839, %v2856
  %v2858 = vpop.f32.mrf.mxu0
  %v2859 = vadd.f32 %v2841, %v2858
  %2860 = vmatmul.bf16.gmra.mxu0 %v2720
  %v2861 = vpop.f32.mrf.mxu0
  %v2862 = vadd.f32 %v2844, %v2861
  %v2863 = vpop.f32.mrf.mxu0
  %2864 = vdwg.mxu0
  %v2865 = vpack.c.bf16 %v2859, %v2857
  %v2866 = vpack.c.bf16 %v2862, %v2862
  %v2868 = vsel %vm1690, %v2866, 0
  %2870 = vmatpush.bf16.msra.mxu0 0
  %2871 = vmatpush.bf16.msra.mxu0 0
  %2872 = vmatpush.bf16.msra.mxu0 0
  %2873 = vmatpush.bf16.msra.mxu0 0
  %2874 = vmatpush.bf16.msra.mxu0 0
  %2875 = vmatpush.bf16.msra.mxu0 0
  %2876 = vmatpush.bf16.msra.mxu0 %v2868
  %2877 = vmatpush.bf16.msra.mxu0 %v2865
  %2878 = vmatmul.bf16.gmra.mxu0 %v1688
  %v2879 = vpop.f32.mrf.mxu0
  %v2880 = vadd.f32 0.0, %v2879
  %v2881 = vpop.f32.mrf.mxu0
  %v2882 = vadd.f32 0.0, %v2881
  %2883 = vdwg.mxu0
  %v2884 = vmul.f32 %v2880, %v143
  %v2885 = vmul.f32 %v2882, %v158
  %v2886 = vsel %vm906, %v2471, 0
  %2888 = vmatpush.bf16.msra.mxu0 0
  %2889 = vmatpush.bf16.msra.mxu0 0
  %2890 = vmatpush.bf16.msra.mxu0 0
  %2891 = vmatpush.bf16.msra.mxu0 0
  %2892 = vmatpush.bf16.msra.mxu0 0
  %2893 = vmatpush.bf16.msra.mxu0 0
  %2894 = vmatpush.bf16.msra.mxu0 %v1719
  %2895 = vmatpush.bf16.msra.mxu0 %v1718
  %2896 = vmatmul.bf16.gmra.mxu0 %v2886
  %v2897 = vpop.f32.mrf.mxu0
  %v2898 = vadd.f32 0.0, %v2897
  %v2899 = vpop.f32.mrf.mxu0
  %v2900 = vadd.f32 0.0, %v2899
  %2901 = vdwg.mxu0
  %v2902 = vadd.f32 %v2884, %v2898
  %v2903 = vadd.f32 %v2885, %v2900
  %v2904 = vadd.f32 %v2902, %v1741
  %v2905 = vadd.f32 %v2903, %v1741
  %v2906 = vmul.f32 %v2904, 0.5
  %v2907 = vmul.f32 %v2905, 0.5
  %v2908 = vtanh.pop %v2906
  %v2909 = vtanh.pop %v2907
  %v2910 = vadd.f32 %v2908, 1.0
  %v2911 = vadd.f32 %v2909, 1.0
  %v2912 = vmul.f32 %v2910, 0.5
  %v2913 = vmul.f32 %v2911, 0.5
  %v2914 = vmul.f32 %v2904, %v2912
  %v2915 = vmul.f32 %v2905, %v2913
  %v2916 = vsel %vm906, %v2914, %v2466
  %v2917 = vsel %vm906, %v2915, %v2467
  %v2918 = vpack.c.bf16 %v2917, %v2916
  %v2920 = vsel %vm474, %v2918, 0
  %2922 = vmatpush.bf16.msra.mxu0 0
  %2923 = vmatpush.bf16.msra.mxu0 0
  %2924 = vmatpush.bf16.msra.mxu0 0
  %2925 = vmatpush.bf16.msra.mxu0 0
  %2926 = vmatpush.bf16.msra.mxu0 %v1801
  %2927 = vmatpush.bf16.msra.mxu0 %v1799
  %2928 = vmatpush.bf16.msra.mxu0 %v1797
  %2929 = vmatpush.bf16.msra.mxu0 %v1795
  %2930 = vmatmul.bf16.gmra.mxu0 %v2920
  %v2931 = vpop.f32.mrf.mxu0
  %v2932 = vadd.f32 %v1767, %v2931
  %v2933 = vpop.f32.mrf.mxu0
  %v2934 = vadd.f32 %v1767, %v2933
  %2935 = vdwg.mxu0
  %2936 = vmatpush.bf16.msra.mxu0 0
  %2937 = vmatpush.bf16.msra.mxu0 0
  %2938 = vmatpush.bf16.msra.mxu0 0
  %2939 = vmatpush.bf16.msra.mxu0 0
  %2940 = vmatpush.bf16.msra.mxu0 %v1802
  %2941 = vmatpush.bf16.msra.mxu0 %v1800
  %2942 = vmatpush.bf16.msra.mxu0 %v1798
  %2943 = vmatpush.bf16.msra.mxu0 %v1796
  %2944 = vmatmul.bf16.gmra.mxu0 %v2920
  %v2945 = vpop.f32.mrf.mxu0
  %v2946 = vadd.f32 %v1768, %v2945
  %v2947 = vpop.f32.mrf.mxu0
  %v2948 = vadd.f32 %v1768, %v2947
  %2949 = vdwg.mxu0
  %2952 = vrot.lane.b32.xlu0 %v2932, 32
  %v2953 = vpop.permute.xlu0 %2952
  %2954 = vrot.lane.b32.xlu0 %v2934, 32
  %v2955 = vpop.permute.xlu0 %2954
  %v2958 = vadd.f32 %v2932, %v2953
  %v2959 = vadd.f32 %v2934, %v2955
  %v2960 = vmul.f32 %v2958, 0.5
  %v2961 = vmul.f32 %v2959, 0.5
  %v2962 = vtanh.pop %v2960
  %v2963 = vtanh.pop %v2961
  %v2964 = vadd.f32 %v2962, 1.0
  %v2965 = vadd.f32 %v2963, 1.0
  %v2966 = vmul.f32 %v2964, 0.5
  %v2967 = vmul.f32 %v2965, 0.5
  %2970 = vrot.lane.b32.xlu0 %v2946, 32
  %v2971 = vpop.permute.xlu0 %2970
  %2972 = vrot.lane.b32.xlu0 %v2948, 32
  %v2973 = vpop.permute.xlu0 %2972
  %v2976 = vadd.f32 %v2932, %v2971
  %v2977 = vadd.f32 %v2934, %v2973
  %v2978 = vmul.f32 %v2976, 0.5
  %v2979 = vmul.f32 %v2977, 0.5
  %v2980 = vtanh.pop %v2978
  %v2981 = vtanh.pop %v2979
  %v2982 = vadd.f32 %v2980, 1.0
  %v2983 = vadd.f32 %v2981, 1.0
  %v2984 = vmul.f32 %v2982, 0.5
  %v2985 = vmul.f32 %v2983, 0.5
  %2986 = vrot.lane.b32.xlu0 %v2946, 96
  %v2987 = vpop.permute.xlu0 %2986
  %2988 = vrot.lane.b32.xlu0 %v2948, 96
  %v2989 = vpop.permute.xlu0 %2988
  %v2992 = vmul.f32 %v2966, %v2987
  %v2993 = vmul.f32 %v2967, %v2989
  %2996 = vrot.lane.b32.xlu0 %v2992, 64
  %v2997 = vpop.permute.xlu0 %2996
  %2998 = vrot.lane.b32.xlu0 %v2993, 64
  %v2999 = vpop.permute.xlu0 %2998
  %v3002 = vadd.f32 %v2932, %v2997
  %v3003 = vadd.f32 %v2934, %v2999
  %v3004 = vtanh.pop %v3002
  %v3005 = vtanh.pop %v3003
  %v3006 = vsub.f32 1.0, %v2984
  %v3007 = vsub.f32 1.0, %v2985
  %3010 = vrot.lane.b32.xlu0 %v3004, 96
  %v3011 = vpop.permute.xlu0 %3010
  %3012 = vrot.lane.b32.xlu0 %v3005, 96
  %v3013 = vpop.permute.xlu0 %3012
  %v3016 = vmul.f32 %v3006, %v3011
  %v3017 = vmul.f32 %v3007, %v3013
  %v3018 = vmul.f32 %v2984, %v2466
  %v3019 = vmul.f32 %v2985, %v2467
  %v3020 = vadd.f32 %v3016, %v3018
  %v3021 = vadd.f32 %v3017, %v3019
  %v3022 = vpack.c.bf16 %v3021, %v3020
  %3024 = vrot.lane.b32.xlu0 %v3022, 96
  %v3025 = vpop.permute.xlu0 %3024
  %v3027 = vsel %vm178, %v3025, 0
  %3029 = vmatpush.bf16.msra.mxu0 0
  %3030 = vmatpush.bf16.msra.mxu0 0
  %3031 = vmatpush.bf16.msra.mxu0 0
  %3032 = vmatpush.bf16.msra.mxu0 0
  %3033 = vmatpush.bf16.msra.mxu0 0
  %3034 = vmatpush.bf16.msra.mxu0 0
  %3035 = vmatpush.bf16.msra.mxu0 0
  %3036 = vmatpush.bf16.msra.mxu0 %v3027
  %3037 = vmatmul.bf16.gmra.mxu0 %v798
  %v3038 = vpop.f32.mrf.mxu0
  %v3039 = vadd.f32 0.0, %v3038
  %v3040 = vpop.f32.mrf.mxu0
  %v3041 = vadd.f32 0.0, %v3040
  %3042 = vmatmul.bf16.gmra.mxu0 %v801
  %v3043 = vpop.f32.mrf.mxu0
  %v3044 = vadd.f32 0.0, %v3043
  %v3045 = vpop.f32.mrf.mxu0
  %3046 = vdwg.mxu0
  %v3047 = vpack.c.bf16 %v3041, %v3039
  %v3048 = vpack.c.bf16 %v3044, %v3044
  %v3050 = vsel %vm906, %v3047, 0
  %v3053 = vsel %vm906, %v3048, 0
  %3055 = vmatpush.bf16.msra.mxu0 0
  %3056 = vmatpush.bf16.msra.mxu0 0
  %3057 = vmatpush.bf16.msra.mxu0 0
  %3058 = vmatpush.bf16.msra.mxu0 0
  %3059 = vmatpush.bf16.msra.mxu0 0
  %3060 = vmatpush.bf16.msra.mxu0 0
  %3061 = vmatpush.bf16.msra.mxu0 %v882
  %3062 = vmatpush.bf16.msra.mxu0 %v874
  %3063 = vmatmul.bf16.gmra.mxu0 %v3050
  %v3064 = vpop.f32.mrf.mxu0
  %v3065 = vadd.f32 0.0, %v3064
  %v3066 = vpop.f32.mrf.mxu0
  %v3067 = vadd.f32 0.0, %v3066
  %3068 = vmatmul.bf16.gmra.mxu0 %v3053
  %v3069 = vpop.f32.mrf.mxu0
  %v3070 = vadd.f32 0.0, %v3069
  %v3071 = vpop.f32.mrf.mxu0
  %3072 = vdwg.mxu0
  %3073 = vmatpush.bf16.msra.mxu0 0
  %3074 = vmatpush.bf16.msra.mxu0 0
  %3075 = vmatpush.bf16.msra.mxu0 0
  %3076 = vmatpush.bf16.msra.mxu0 0
  %3077 = vmatpush.bf16.msra.mxu0 0
  %3078 = vmatpush.bf16.msra.mxu0 0
  %3079 = vmatpush.bf16.msra.mxu0 %v883
  %3080 = vmatpush.bf16.msra.mxu0 %v875
  %3081 = vmatmul.bf16.gmra.mxu0 %v3050
  %v3082 = vpop.f32.mrf.mxu0
  %v3083 = vadd.f32 0.0, %v3082
  %v3084 = vpop.f32.mrf.mxu0
  %v3085 = vadd.f32 0.0, %v3084
  %3086 = vmatmul.bf16.gmra.mxu0 %v3053
  %v3087 = vpop.f32.mrf.mxu0
  %v3088 = vadd.f32 0.0, %v3087
  %v3089 = vpop.f32.mrf.mxu0
  %3090 = vdwg.mxu0
  %3091 = vmatpush.bf16.msra.mxu0 0
  %3092 = vmatpush.bf16.msra.mxu0 0
  %3093 = vmatpush.bf16.msra.mxu0 0
  %3094 = vmatpush.bf16.msra.mxu0 0
  %3095 = vmatpush.bf16.msra.mxu0 0
  %3096 = vmatpush.bf16.msra.mxu0 0
  %3097 = vmatpush.bf16.msra.mxu0 %v884
  %3098 = vmatpush.bf16.msra.mxu0 %v876
  %3099 = vmatmul.bf16.gmra.mxu0 %v3050
  %v3100 = vpop.f32.mrf.mxu0
  %v3101 = vadd.f32 0.0, %v3100
  %v3102 = vpop.f32.mrf.mxu0
  %v3103 = vadd.f32 0.0, %v3102
  %3104 = vmatmul.bf16.gmra.mxu0 %v3053
  %v3105 = vpop.f32.mrf.mxu0
  %v3106 = vadd.f32 0.0, %v3105
  %v3107 = vpop.f32.mrf.mxu0
  %3108 = vdwg.mxu0
  %3109 = vmatpush.bf16.msra.mxu0 0
  %3110 = vmatpush.bf16.msra.mxu0 0
  %3111 = vmatpush.bf16.msra.mxu0 0
  %3112 = vmatpush.bf16.msra.mxu0 0
  %3113 = vmatpush.bf16.msra.mxu0 0
  %3114 = vmatpush.bf16.msra.mxu0 0
  %3115 = vmatpush.bf16.msra.mxu0 %v885
  %3116 = vmatpush.bf16.msra.mxu0 %v877
  %3117 = vmatmul.bf16.gmra.mxu0 %v3050
  %v3118 = vpop.f32.mrf.mxu0
  %v3119 = vadd.f32 0.0, %v3118
  %v3120 = vpop.f32.mrf.mxu0
  %v3121 = vadd.f32 0.0, %v3120
  %3122 = vmatmul.bf16.gmra.mxu0 %v3053
  %v3123 = vpop.f32.mrf.mxu0
  %v3124 = vadd.f32 0.0, %v3123
  %v3125 = vpop.f32.mrf.mxu0
  %3126 = vdwg.mxu0
  %3127 = vmatpush.bf16.msra.mxu0 0
  %3128 = vmatpush.bf16.msra.mxu0 0
  %3129 = vmatpush.bf16.msra.mxu0 0
  %3130 = vmatpush.bf16.msra.mxu0 0
  %3131 = vmatpush.bf16.msra.mxu0 0
  %3132 = vmatpush.bf16.msra.mxu0 0
  %3133 = vmatpush.bf16.msra.mxu0 %v886
  %3134 = vmatpush.bf16.msra.mxu0 %v878
  %3135 = vmatmul.bf16.gmra.mxu0 %v3050
  %v3136 = vpop.f32.mrf.mxu0
  %v3137 = vadd.f32 0.0, %v3136
  %v3138 = vpop.f32.mrf.mxu0
  %v3139 = vadd.f32 0.0, %v3138
  %3140 = vmatmul.bf16.gmra.mxu0 %v3053
  %v3141 = vpop.f32.mrf.mxu0
  %v3142 = vadd.f32 0.0, %v3141
  %v3143 = vpop.f32.mrf.mxu0
  %3144 = vdwg.mxu0
  %3145 = vmatpush.bf16.msra.mxu0 0
  %3146 = vmatpush.bf16.msra.mxu0 0
  %3147 = vmatpush.bf16.msra.mxu0 0
  %3148 = vmatpush.bf16.msra.mxu0 0
  %3149 = vmatpush.bf16.msra.mxu0 0
  %3150 = vmatpush.bf16.msra.mxu0 0
  %3151 = vmatpush.bf16.msra.mxu0 %v887
  %3152 = vmatpush.bf16.msra.mxu0 %v879
  %3153 = vmatmul.bf16.gmra.mxu0 %v3050
  %v3154 = vpop.f32.mrf.mxu0
  %v3155 = vadd.f32 0.0, %v3154
  %v3156 = vpop.f32.mrf.mxu0
  %v3157 = vadd.f32 0.0, %v3156
  %3158 = vmatmul.bf16.gmra.mxu0 %v3053
  %v3159 = vpop.f32.mrf.mxu0
  %v3160 = vadd.f32 0.0, %v3159
  %v3161 = vpop.f32.mrf.mxu0
  %3162 = vdwg.mxu0
  %3163 = vmatpush.bf16.msra.mxu0 0
  %3164 = vmatpush.bf16.msra.mxu0 0
  %3165 = vmatpush.bf16.msra.mxu0 0
  %3166 = vmatpush.bf16.msra.mxu0 0
  %3167 = vmatpush.bf16.msra.mxu0 0
  %3168 = vmatpush.bf16.msra.mxu0 0
  %3169 = vmatpush.bf16.msra.mxu0 %v888
  %3170 = vmatpush.bf16.msra.mxu0 %v880
  %3171 = vmatmul.bf16.gmra.mxu0 %v3050
  %v3172 = vpop.f32.mrf.mxu0
  %v3173 = vadd.f32 0.0, %v3172
  %v3174 = vpop.f32.mrf.mxu0
  %v3175 = vadd.f32 0.0, %v3174
  %3176 = vmatmul.bf16.gmra.mxu0 %v3053
  %v3177 = vpop.f32.mrf.mxu0
  %v3178 = vadd.f32 0.0, %v3177
  %v3179 = vpop.f32.mrf.mxu0
  %3180 = vdwg.mxu0
  %3181 = vmatpush.bf16.msra.mxu0 0
  %3182 = vmatpush.bf16.msra.mxu0 0
  %3183 = vmatpush.bf16.msra.mxu0 0
  %3184 = vmatpush.bf16.msra.mxu0 0
  %3185 = vmatpush.bf16.msra.mxu0 0
  %3186 = vmatpush.bf16.msra.mxu0 0
  %3187 = vmatpush.bf16.msra.mxu0 %v889
  %3188 = vmatpush.bf16.msra.mxu0 %v881
  %3189 = vmatmul.bf16.gmra.mxu0 %v3050
  %v3190 = vpop.f32.mrf.mxu0
  %v3191 = vadd.f32 0.0, %v3190
  %v3192 = vpop.f32.mrf.mxu0
  %v3193 = vadd.f32 0.0, %v3192
  %3194 = vmatmul.bf16.gmra.mxu0 %v3053
  %v3195 = vpop.f32.mrf.mxu0
  %v3196 = vadd.f32 0.0, %v3195
  %v3197 = vpop.f32.mrf.mxu0
  %3198 = vdwg.mxu0
  %v3199 = vpack.c.bf16 %v3083, %v3065
  %v3200 = vpack.c.bf16 %v3119, %v3101
  %v3201 = vpack.c.bf16 %v3155, %v3137
  %v3202 = vpack.c.bf16 %v3191, %v3173
  %v3203 = vpack.c.bf16 %v3085, %v3067
  %v3204 = vpack.c.bf16 %v3121, %v3103
  %v3205 = vpack.c.bf16 %v3157, %v3139
  %v3206 = vpack.c.bf16 %v3193, %v3175
  %v3207 = vpack.c.bf16 %v3088, %v3070
  %v3208 = vpack.c.bf16 %v3124, %v3106
  %v3209 = vpack.c.bf16 %v3160, %v3142
  %v3210 = vpack.c.bf16 %v3196, %v3178
  %v3211 = vunpack.c.l.bf16 %v3199
  %v3212 = vunpack.c.h.bf16 %v3199
  %v3213 = vunpack.c.l.bf16 %v3200
  %v3214 = vunpack.c.h.bf16 %v3200
  %v3215 = vunpack.c.l.bf16 %v3201
  %v3216 = vunpack.c.h.bf16 %v3201
  %v3217 = vunpack.c.l.bf16 %v3202
  %v3218 = vunpack.c.h.bf16 %v3202
  %v3219 = vunpack.c.l.bf16 %v3203
  %v3220 = vunpack.c.h.bf16 %v3203
  %v3221 = vunpack.c.l.bf16 %v3204
  %v3222 = vunpack.c.h.bf16 %v3204
  %v3223 = vunpack.c.l.bf16 %v3205
  %v3224 = vunpack.c.h.bf16 %v3205
  %v3225 = vunpack.c.l.bf16 %v3206
  %v3226 = vunpack.c.h.bf16 %v3206
  %v3227 = vunpack.c.l.bf16 %v3207
  %v3228 = vunpack.c.h.bf16 %v3207
  %v3229 = vunpack.c.l.bf16 %v3208
  %v3230 = vunpack.c.h.bf16 %v3208
  %v3231 = vunpack.c.l.bf16 %v3209
  %v3232 = vunpack.c.h.bf16 %v3209
  %v3233 = vunpack.c.l.bf16 %v3210
  %v3234 = vunpack.c.h.bf16 %v3210
  %v3235 = vmul.f32 %v3211, %v1093
  %v3236 = vmul.f32 %v3212, %v1094
  %v3237 = vmul.f32 %v3213, %v1095
  %v3238 = vmul.f32 %v3214, %v1096
  %v3239 = vmul.f32 %v3215, %v1097
  %v3240 = vmul.f32 %v3216, %v1098
  %v3241 = vmul.f32 %v3217, %v1099
  %v3242 = vmul.f32 %v3218, %v1100
  %v3243 = vmul.f32 %v3219, %v1101
  %v3244 = vmul.f32 %v3220, %v1102
  %v3245 = vmul.f32 %v3221, %v1103
  %v3246 = vmul.f32 %v3222, %v1104
  %v3247 = vmul.f32 %v3223, %v1105
  %v3248 = vmul.f32 %v3224, %v1106
  %v3249 = vmul.f32 %v3225, %v1107
  %v3250 = vmul.f32 %v3226, %v1108
  %v3251 = vmul.f32 %v3227, %v1109
  %v3252 = vmul.f32 %v3228, %v1110
  %v3253 = vmul.f32 %v3229, %v1111
  %v3254 = vmul.f32 %v3230, %v1112
  %v3255 = vmul.f32 %v3231, %v1113
  %v3256 = vmul.f32 %v3232, %v1114
  %v3257 = vmul.f32 %v3233, %v1115
  %v3258 = vmul.f32 %v3234, %v1116
  %v3259 = vpack.c.bf16 %v3243, %v3235
  %v3260 = vpack.c.bf16 %v3244, %v3236
  %v3261 = vpack.c.bf16 %v3245, %v3237
  %v3262 = vpack.c.bf16 %v3246, %v3238
  %v3263 = vpack.c.bf16 %v3247, %v3239
  %v3264 = vpack.c.bf16 %v3248, %v3240
  %v3265 = vpack.c.bf16 %v3249, %v3241
  %v3266 = vpack.c.bf16 %v3250, %v3242
  %v3267 = vpack.c.bf16 %v3251, %v3251
  %v3268 = vpack.c.bf16 %v3252, %v3252
  %v3269 = vpack.c.bf16 %v3253, %v3253
  %v3270 = vpack.c.bf16 %v3254, %v3254
  %v3271 = vpack.c.bf16 %v3255, %v3255
  %v3272 = vpack.c.bf16 %v3256, %v3256
  %v3273 = vpack.c.bf16 %v3257, %v3257
  %v3274 = vpack.c.bf16 %v3258, %v3258
  %3275 = vmatpush.bf16.msra.mxu0 %v1420
  %3276 = vmatpush.bf16.msra.mxu0 %v1419
  %3277 = vmatpush.bf16.msra.mxu0 %v1418
  %3278 = vmatpush.bf16.msra.mxu0 %v1417
  %3279 = vmatpush.bf16.msra.mxu0 %v1416
  %3280 = vmatpush.bf16.msra.mxu0 %v1415
  %3281 = vmatpush.bf16.msra.mxu0 %v1414
  %3282 = vmatpush.bf16.msra.mxu0 %v1413
  %3283 = vmatmul.bf16.gmra.mxu0 %v3259
  %v3284 = vpop.f32.mrf.mxu0
  %v3285 = vadd.f32 0.0, %v3284
  %v3286 = vpop.f32.mrf.mxu0
  %v3287 = vadd.f32 0.0, %v3286
  %3288 = vmatmul.bf16.gmra.mxu0 %v3267
  %v3289 = vpop.f32.mrf.mxu0
  %v3290 = vadd.f32 0.0, %v3289
  %v3291 = vpop.f32.mrf.mxu0
  %3292 = vdwg.mxu0
  %3293 = vmatpush.bf16.msra.mxu0 %v1428
  %3294 = vmatpush.bf16.msra.mxu0 %v1427
  %3295 = vmatpush.bf16.msra.mxu0 %v1426
  %3296 = vmatpush.bf16.msra.mxu0 %v1425
  %3297 = vmatpush.bf16.msra.mxu0 %v1424
  %3298 = vmatpush.bf16.msra.mxu0 %v1423
  %3299 = vmatpush.bf16.msra.mxu0 %v1422
  %3300 = vmatpush.bf16.msra.mxu0 %v1421
  %3301 = vmatmul.bf16.gmra.mxu0 %v3260
  %v3302 = vpop.f32.mrf.mxu0
  %v3303 = vadd.f32 %v3285, %v3302
  %v3304 = vpop.f32.mrf.mxu0
  %v3305 = vadd.f32 %v3287, %v3304
  %3306 = vmatmul.bf16.gmra.mxu0 %v3268
  %v3307 = vpop.f32.mrf.mxu0
  %v3308 = vadd.f32 %v3290, %v3307
  %v3309 = vpop.f32.mrf.mxu0
  %3310 = vdwg.mxu0
  %3311 = vmatpush.bf16.msra.mxu0 %v1436
  %3312 = vmatpush.bf16.msra.mxu0 %v1435
  %3313 = vmatpush.bf16.msra.mxu0 %v1434
  %3314 = vmatpush.bf16.msra.mxu0 %v1433
  %3315 = vmatpush.bf16.msra.mxu0 %v1432
  %3316 = vmatpush.bf16.msra.mxu0 %v1431
  %3317 = vmatpush.bf16.msra.mxu0 %v1430
  %3318 = vmatpush.bf16.msra.mxu0 %v1429
  %3319 = vmatmul.bf16.gmra.mxu0 %v3261
  %v3320 = vpop.f32.mrf.mxu0
  %v3321 = vadd.f32 %v3303, %v3320
  %v3322 = vpop.f32.mrf.mxu0
  %v3323 = vadd.f32 %v3305, %v3322
  %3324 = vmatmul.bf16.gmra.mxu0 %v3269
  %v3325 = vpop.f32.mrf.mxu0
  %v3326 = vadd.f32 %v3308, %v3325
  %v3327 = vpop.f32.mrf.mxu0
  %3328 = vdwg.mxu0
  %3329 = vmatpush.bf16.msra.mxu0 %v1444
  %3330 = vmatpush.bf16.msra.mxu0 %v1443
  %3331 = vmatpush.bf16.msra.mxu0 %v1442
  %3332 = vmatpush.bf16.msra.mxu0 %v1441
  %3333 = vmatpush.bf16.msra.mxu0 %v1440
  %3334 = vmatpush.bf16.msra.mxu0 %v1439
  %3335 = vmatpush.bf16.msra.mxu0 %v1438
  %3336 = vmatpush.bf16.msra.mxu0 %v1437
  %3337 = vmatmul.bf16.gmra.mxu0 %v3262
  %v3338 = vpop.f32.mrf.mxu0
  %v3339 = vadd.f32 %v3321, %v3338
  %v3340 = vpop.f32.mrf.mxu0
  %v3341 = vadd.f32 %v3323, %v3340
  %3342 = vmatmul.bf16.gmra.mxu0 %v3270
  %v3343 = vpop.f32.mrf.mxu0
  %v3344 = vadd.f32 %v3326, %v3343
  %v3345 = vpop.f32.mrf.mxu0
  %3346 = vdwg.mxu0
  %3347 = vmatpush.bf16.msra.mxu0 %v1452
  %3348 = vmatpush.bf16.msra.mxu0 %v1451
  %3349 = vmatpush.bf16.msra.mxu0 %v1450
  %3350 = vmatpush.bf16.msra.mxu0 %v1449
  %3351 = vmatpush.bf16.msra.mxu0 %v1448
  %3352 = vmatpush.bf16.msra.mxu0 %v1447
  %3353 = vmatpush.bf16.msra.mxu0 %v1446
  %3354 = vmatpush.bf16.msra.mxu0 %v1445
  %3355 = vmatmul.bf16.gmra.mxu0 %v3263
  %v3356 = vpop.f32.mrf.mxu0
  %v3357 = vadd.f32 %v3339, %v3356
  %v3358 = vpop.f32.mrf.mxu0
  %v3359 = vadd.f32 %v3341, %v3358
  %3360 = vmatmul.bf16.gmra.mxu0 %v3271
  %v3361 = vpop.f32.mrf.mxu0
  %v3362 = vadd.f32 %v3344, %v3361
  %v3363 = vpop.f32.mrf.mxu0
  %3364 = vdwg.mxu0
  %3365 = vmatpush.bf16.msra.mxu0 %v1460
  %3366 = vmatpush.bf16.msra.mxu0 %v1459
  %3367 = vmatpush.bf16.msra.mxu0 %v1458
  %3368 = vmatpush.bf16.msra.mxu0 %v1457
  %3369 = vmatpush.bf16.msra.mxu0 %v1456
  %3370 = vmatpush.bf16.msra.mxu0 %v1455
  %3371 = vmatpush.bf16.msra.mxu0 %v1454
  %3372 = vmatpush.bf16.msra.mxu0 %v1453
  %3373 = vmatmul.bf16.gmra.mxu0 %v3264
  %v3374 = vpop.f32.mrf.mxu0
  %v3375 = vadd.f32 %v3357, %v3374
  %v3376 = vpop.f32.mrf.mxu0
  %v3377 = vadd.f32 %v3359, %v3376
  %3378 = vmatmul.bf16.gmra.mxu0 %v3272
  %v3379 = vpop.f32.mrf.mxu0
  %v3380 = vadd.f32 %v3362, %v3379
  %v3381 = vpop.f32.mrf.mxu0
  %3382 = vdwg.mxu0
  %3383 = vmatpush.bf16.msra.mxu0 %v1468
  %3384 = vmatpush.bf16.msra.mxu0 %v1467
  %3385 = vmatpush.bf16.msra.mxu0 %v1466
  %3386 = vmatpush.bf16.msra.mxu0 %v1465
  %3387 = vmatpush.bf16.msra.mxu0 %v1464
  %3388 = vmatpush.bf16.msra.mxu0 %v1463
  %3389 = vmatpush.bf16.msra.mxu0 %v1462
  %3390 = vmatpush.bf16.msra.mxu0 %v1461
  %3391 = vmatmul.bf16.gmra.mxu0 %v3265
  %v3392 = vpop.f32.mrf.mxu0
  %v3393 = vadd.f32 %v3375, %v3392
  %v3394 = vpop.f32.mrf.mxu0
  %v3395 = vadd.f32 %v3377, %v3394
  %3396 = vmatmul.bf16.gmra.mxu0 %v3273
  %v3397 = vpop.f32.mrf.mxu0
  %v3398 = vadd.f32 %v3380, %v3397
  %v3399 = vpop.f32.mrf.mxu0
  %3400 = vdwg.mxu0
  %3401 = vmatpush.bf16.msra.mxu0 %v1476
  %3402 = vmatpush.bf16.msra.mxu0 %v1475
  %3403 = vmatpush.bf16.msra.mxu0 %v1474
  %3404 = vmatpush.bf16.msra.mxu0 %v1473
  %3405 = vmatpush.bf16.msra.mxu0 %v1472
  %3406 = vmatpush.bf16.msra.mxu0 %v1471
  %3407 = vmatpush.bf16.msra.mxu0 %v1470
  %3408 = vmatpush.bf16.msra.mxu0 %v1469
  %3409 = vmatmul.bf16.gmra.mxu0 %v3266
  %v3410 = vpop.f32.mrf.mxu0
  %v3411 = vadd.f32 %v3393, %v3410
  %v3412 = vpop.f32.mrf.mxu0
  %v3413 = vadd.f32 %v3395, %v3412
  %3414 = vmatmul.bf16.gmra.mxu0 %v3274
  %v3415 = vpop.f32.mrf.mxu0
  %v3416 = vadd.f32 %v3398, %v3415
  %v3417 = vpop.f32.mrf.mxu0
  %3418 = vdwg.mxu0
  %v3419 = vpack.c.bf16 %v3413, %v3411
  %v3420 = vpack.c.bf16 %v3416, %v3416
  %v3422 = vsel %vm1690, %v3420, 0
  %3424 = vmatpush.bf16.msra.mxu0 0
  %3425 = vmatpush.bf16.msra.mxu0 0
  %3426 = vmatpush.bf16.msra.mxu0 0
  %3427 = vmatpush.bf16.msra.mxu0 0
  %3428 = vmatpush.bf16.msra.mxu0 0
  %3429 = vmatpush.bf16.msra.mxu0 0
  %3430 = vmatpush.bf16.msra.mxu0 %v3422
  %3431 = vmatpush.bf16.msra.mxu0 %v3419
  %3432 = vmatmul.bf16.gmra.mxu0 %v1688
  %v3433 = vpop.f32.mrf.mxu0
  %v3434 = vadd.f32 0.0, %v3433
  %v3435 = vpop.f32.mrf.mxu0
  %v3436 = vadd.f32 0.0, %v3435
  %3437 = vdwg.mxu0
  %v3438 = vmul.f32 %v3434, %v143
  %v3439 = vmul.f32 %v3436, %v158
  %v3440 = vsel %vm906, %v3025, 0
  %3442 = vmatpush.bf16.msra.mxu0 0
  %3443 = vmatpush.bf16.msra.mxu0 0
  %3444 = vmatpush.bf16.msra.mxu0 0
  %3445 = vmatpush.bf16.msra.mxu0 0
  %3446 = vmatpush.bf16.msra.mxu0 0
  %3447 = vmatpush.bf16.msra.mxu0 0
  %3448 = vmatpush.bf16.msra.mxu0 %v1719
  %3449 = vmatpush.bf16.msra.mxu0 %v1718
  %3450 = vmatmul.bf16.gmra.mxu0 %v3440
  %v3451 = vpop.f32.mrf.mxu0
  %v3452 = vadd.f32 0.0, %v3451
  %v3453 = vpop.f32.mrf.mxu0
  %v3454 = vadd.f32 0.0, %v3453
  %3455 = vdwg.mxu0
  %v3456 = vadd.f32 %v3438, %v3452
  %v3457 = vadd.f32 %v3439, %v3454
  %v3458 = vadd.f32 %v3456, %v1741
  %v3459 = vadd.f32 %v3457, %v1741
  %v3460 = vmul.f32 %v3458, 0.5
  %v3461 = vmul.f32 %v3459, 0.5
  %v3462 = vtanh.pop %v3460
  %v3463 = vtanh.pop %v3461
  %v3464 = vadd.f32 %v3462, 1.0
  %v3465 = vadd.f32 %v3463, 1.0
  %v3466 = vmul.f32 %v3464, 0.5
  %v3467 = vmul.f32 %v3465, 0.5
  %v3468 = vmul.f32 %v3458, %v3466
  %v3469 = vmul.f32 %v3459, %v3467
  %v3470 = vsel %vm906, %v3468, %v3020
  %v3471 = vsel %vm906, %v3469, %v3021
  %v3472 = vpack.c.bf16 %v3471, %v3470
  %v3474 = vsel %vm474, %v3472, 0
  %3476 = vmatpush.bf16.msra.mxu0 0
  %3477 = vmatpush.bf16.msra.mxu0 0
  %3478 = vmatpush.bf16.msra.mxu0 0
  %3479 = vmatpush.bf16.msra.mxu0 0
  %3480 = vmatpush.bf16.msra.mxu0 %v1801
  %3481 = vmatpush.bf16.msra.mxu0 %v1799
  %3482 = vmatpush.bf16.msra.mxu0 %v1797
  %3483 = vmatpush.bf16.msra.mxu0 %v1795
  %3484 = vmatmul.bf16.gmra.mxu0 %v3474
  %v3485 = vpop.f32.mrf.mxu0
  %v3486 = vadd.f32 %v1767, %v3485
  %v3487 = vpop.f32.mrf.mxu0
  %v3488 = vadd.f32 %v1767, %v3487
  %3489 = vdwg.mxu0
  %3490 = vmatpush.bf16.msra.mxu0 0
  %3491 = vmatpush.bf16.msra.mxu0 0
  %3492 = vmatpush.bf16.msra.mxu0 0
  %3493 = vmatpush.bf16.msra.mxu0 0
  %3494 = vmatpush.bf16.msra.mxu0 %v1802
  %3495 = vmatpush.bf16.msra.mxu0 %v1800
  %3496 = vmatpush.bf16.msra.mxu0 %v1798
  %3497 = vmatpush.bf16.msra.mxu0 %v1796
  %3498 = vmatmul.bf16.gmra.mxu0 %v3474
  %v3499 = vpop.f32.mrf.mxu0
  %v3500 = vadd.f32 %v1768, %v3499
  %v3501 = vpop.f32.mrf.mxu0
  %v3502 = vadd.f32 %v1768, %v3501
  %3503 = vdwg.mxu0
  %3506 = vrot.lane.b32.xlu0 %v3486, 32
  %v3507 = vpop.permute.xlu0 %3506
  %3508 = vrot.lane.b32.xlu0 %v3488, 32
  %v3509 = vpop.permute.xlu0 %3508
  %v3512 = vadd.f32 %v3486, %v3507
  %v3513 = vadd.f32 %v3488, %v3509
  %v3514 = vmul.f32 %v3512, 0.5
  %v3515 = vmul.f32 %v3513, 0.5
  %v3516 = vtanh.pop %v3514
  %v3517 = vtanh.pop %v3515
  %v3518 = vadd.f32 %v3516, 1.0
  %v3519 = vadd.f32 %v3517, 1.0
  %v3520 = vmul.f32 %v3518, 0.5
  %v3521 = vmul.f32 %v3519, 0.5
  %3524 = vrot.lane.b32.xlu0 %v3500, 32
  %v3525 = vpop.permute.xlu0 %3524
  %3526 = vrot.lane.b32.xlu0 %v3502, 32
  %v3527 = vpop.permute.xlu0 %3526
  %v3530 = vadd.f32 %v3486, %v3525
  %v3531 = vadd.f32 %v3488, %v3527
  %v3532 = vmul.f32 %v3530, 0.5
  %v3533 = vmul.f32 %v3531, 0.5
  %v3534 = vtanh.pop %v3532
  %v3535 = vtanh.pop %v3533
  %v3536 = vadd.f32 %v3534, 1.0
  %v3537 = vadd.f32 %v3535, 1.0
  %v3538 = vmul.f32 %v3536, 0.5
  %v3539 = vmul.f32 %v3537, 0.5
  %3540 = vrot.lane.b32.xlu0 %v3500, 96
  %v3541 = vpop.permute.xlu0 %3540
  %3542 = vrot.lane.b32.xlu0 %v3502, 96
  %v3543 = vpop.permute.xlu0 %3542
  %v3546 = vmul.f32 %v3520, %v3541
  %v3547 = vmul.f32 %v3521, %v3543
  %3550 = vrot.lane.b32.xlu0 %v3546, 64
  %v3551 = vpop.permute.xlu0 %3550
  %3552 = vrot.lane.b32.xlu0 %v3547, 64
  %v3553 = vpop.permute.xlu0 %3552
  %v3556 = vadd.f32 %v3486, %v3551
  %v3557 = vadd.f32 %v3488, %v3553
  %v3558 = vtanh.pop %v3556
  %v3559 = vtanh.pop %v3557
  %v3560 = vsub.f32 1.0, %v3538
  %v3561 = vsub.f32 1.0, %v3539
  %3564 = vrot.lane.b32.xlu0 %v3558, 96
  %v3565 = vpop.permute.xlu0 %3564
  %3566 = vrot.lane.b32.xlu0 %v3559, 96
  %v3567 = vpop.permute.xlu0 %3566
  %v3570 = vmul.f32 %v3560, %v3565
  %v3571 = vmul.f32 %v3561, %v3567
  %v3572 = vmul.f32 %v3538, %v3020
  %v3573 = vmul.f32 %v3539, %v3021
  %v3574 = vadd.f32 %v3570, %v3572
  %v3575 = vadd.f32 %v3571, %v3573
  %v3576 = vld [vmem:[%s17] sm:$0xf]
  %v3577 = vld [vmem:[%s17 + $0x4] sm:$0xf]
  %v3578 = vld [vmem:[%s17 + $0x8] sm:$0xf]
  %v3579 = vld [vmem:[%s17 + $0xc] sm:$0xf]
  %v3580 = vld [vmem:[%s17 + $0x10] sm:$0xf]
  %v3581 = vld [vmem:[%s17 + $0x14] sm:$0xf]
  %v3582 = vld [vmem:[%s17 + $0x18] sm:$0xf]
  %v3583 = vld [vmem:[%s17 + $0x1c] sm:$0xf]
  %v3584 = vld [vmem:[%s18] sm:$0x1]
  %v3585 = vpack.c.bf16 %v3575, %v3574
  %v3586 = vpack.c.bf16 0.0, 0.0
  %v3588 = vperm.slane %v3584, 0
  %v3598 = vunpack.c.l.b16 %v3576
  %v3599 = vunpack.c.l.b16 %v3577
  %v3600 = vunpack.c.l.b16 %v3578
  %v3601 = vunpack.c.l.b16 %v3579
  %v3602 = vunpack.c.l.b16 %v3580
  %v3603 = vunpack.c.l.b16 %v3581
  %v3604 = vunpack.c.l.b16 %v3582
  %v3605 = vunpack.c.l.b16 %v3583
  %v3606 = vpack.c.b16 %v3599, %v3598
  %v3607 = vpack.c.b16 %v3601, %v3600
  %v3608 = vpack.c.b16 %v3603, %v3602
  %v3609 = vpack.c.b16 %v3605, %v3604
  %v3615 = vsel %vm474, %v3586, 0
  %3617 = vmatpush.bf16.msra.mxu0 0
  %3618 = vmatpush.bf16.msra.mxu0 0
  %3619 = vmatpush.bf16.msra.mxu0 0
  %3620 = vmatpush.bf16.msra.mxu0 0
  %3621 = vmatpush.bf16.msra.mxu0 %v3609
  %3622 = vmatpush.bf16.msra.mxu0 %v3608
  %3623 = vmatpush.bf16.msra.mxu0 %v3607
  %3624 = vmatpush.bf16.msra.mxu0 %v3606
  %3625 = vmatmul.bf16.gmra.mxu0 %v3615
  %v3626 = vpop.f32.mrf.mxu0
  %v3627 = vadd.f32 %v3588, %v3626
  %v3628 = vpop.f32.mrf.mxu0
  %3629 = vdwg.mxu0
  %v3630 = vmul.f32 %v3627, 0.5
  %v3631 = vtanh.pop %v3630
  %v3632 = vadd.f32 %v3631, 1.0
  %v3633 = vmul.f32 %v3632, 0.5
  %v3634 = vtanh.pop %v3627
  %v3635 = vmul.f32 %v3633, 0.0
  %3637 = vrot.lane.b32.xlu0 %v3634, 64
  %v3638 = vpop.permute.xlu0 %3637
  %v3640 = vmul.f32 %v3633, %v3638
  %3642 = vrot.lane.b32.xlu0 %v3640, 32
  %v3643 = vpop.permute.xlu0 %3642
  %v3645 = vadd.f32 %v3635, %v3643
  %v3646 = vtanh.pop %v3645
  %3648 = vrot.lane.b32.xlu0 %v3646, 64
  %v3649 = vpop.permute.xlu0 %3648
  %v3651 = vmul.f32 %v3633, %v3649
  %v3652 = vpack.c.bf16 %v3651, %v3651
  %3654 = vrot.lane.b32.xlu0 %v3652, 32
  %v3655 = vpop.permute.xlu0 %3654
  %3657 = vrot.lane.b32.xlu0 %v3585, 96
  %v3658 = vpop.permute.xlu0 %3657
  %v3660 = vsel %vm906, %v3655, 0
  %v3663 = vsel %vm906, %v3658, 0
  %3665 = vmatpush.bf16.xpose.msra.mxu0 0
  %3666 = vmatpush.bf16.xpose.msra.mxu0 0
  %3667 = vmatpush.bf16.xpose.msra.mxu0 0
  %3668 = vmatpush.bf16.xpose.msra.mxu0 0
  %3669 = vmatpush.bf16.xpose.msra.mxu0 0
  %3670 = vmatpush.bf16.xpose.msra.mxu0 0
  %3671 = vmatpush.bf16.xpose.msra.mxu0 0
  %3672 = vmatpush.bf16.xpose.msra.mxu0 %v3663
  %3673 = vmatmul.bf16.gmra.mxu0 %v3660
  %v3674 = vpop.f32.mrf.mxu0
  %v3675 = vadd.f32 0.0, %v3674
  %v3676 = vpop.f32.mrf.mxu0
  %3677 = vdwg.mxu0
  %v3678 = vsel %vm116, %v3675, -1e+30
  %vm3679 = vcmask 91136
  %v3680 = vsel %vm3679, %v3678, -inf
  %3681 = vmax.xlane.f32.xlu0 %v3680
  %v3682 = vpop.xlane.xlu0 %3681
  %v3683 = vsub.f32 %v3678, %v3682
  %v3684 = vmul.f32 %v3683, 1.442695
  %v3685 = vpow.pop %v3684
  %v3686 = vsel %vm116, %v3685, 0.0
  %v3687 = vsel %vm3679, %v3686, 0.0
  %3688 = vadd.xlane.f32.xlu0 %v3687
  %v3689 = vpop.xlane.xlu0 %3688
  %v3690 = vmax.f32 %v3689, 1e-30
  %v3691 = vrcp.pop %v3690
  %v3692 = vmul.f32 %v3690, %v3691
  %v3693 = vsub.f32 1.0, %v3692
  %v3694 = vmul.f32 %v3691, %v3693
  %v3695 = vadd.f32 %v3691, %v3694
  %vm3696 = vweird.f32 %v3690
  %vm3697 = vweird.f32 %v3691
  %vm3698 = vmor %vm3696, %vm3697
  %v3699 = vsel %vm3698, %v3691, %v3695
  %v3700 = vand.u32 2147483647, %v3690
  %vm3701 = vcmp.eq.f32.partialorder %v3700, 8.507059e+37
  %v3702 = vand.u32 %v3690, 2147483648
  %v3703 = vor.u32 1.1754944e-38, %v3702
  %v3704 = vsel %vm3701, %v3703, %v3699
  %v3705 = vmul.f32 %v3686, %v3704
  %v3706 = vpack.c.bf16 %v3705, %v3705
  %v3708 = vsel %vm796, %v3706, 0
  %v3710 = vsel %vm178, %v3658, 0
  %3712 = vmatpush.bf16.msra.mxu0 0
  %3713 = vmatpush.bf16.msra.mxu0 0
  %3714 = vmatpush.bf16.msra.mxu0 0
  %3715 = vmatpush.bf16.msra.mxu0 0
  %3716 = vmatpush.bf16.msra.mxu0 0
  %3717 = vmatpush.bf16.msra.mxu0 0
  %3718 = vmatpush.bf16.msra.mxu0 0
  %3719 = vmatpush.bf16.msra.mxu0 %v3710
  %3720 = vmatmul.bf16.gmra.mxu0 %v3708
  %v3721 = vpop.f32.mrf.mxu0
  %v3722 = vadd.f32 0.0, %v3721
  %v3723 = vpop.f32.mrf.mxu0
  %3724 = vdwg.mxu0
  %3726 = vrot.lane.b32.xlu0 %v3651, 32
  %v3727 = vpop.permute.xlu0 %3726
  %3730 = vrot.lane.b32.xlu0 %v3722, 32
  %v3731 = vpop.permute.xlu0 %3730
  %v3733 = vsel %vm906, %v3727, %v3731
  %v3734 = vpack.c.bf16 %v3733, %v3733
  %v3736 = vsel %vm474, %v3734, 0
  %3738 = vmatpush.bf16.msra.mxu0 0
  %3739 = vmatpush.bf16.msra.mxu0 0
  %3740 = vmatpush.bf16.msra.mxu0 0
  %3741 = vmatpush.bf16.msra.mxu0 0
  %3742 = vmatpush.bf16.msra.mxu0 %v3609
  %3743 = vmatpush.bf16.msra.mxu0 %v3608
  %3744 = vmatpush.bf16.msra.mxu0 %v3607
  %3745 = vmatpush.bf16.msra.mxu0 %v3606
  %3746 = vmatmul.bf16.gmra.mxu0 %v3736
  %v3747 = vpop.f32.mrf.mxu0
  %v3748 = vadd.f32 %v3588, %v3747
  %v3749 = vpop.f32.mrf.mxu0
  %3750 = vdwg.mxu0
  %v3751 = vmul.f32 %v3748, 0.5
  %v3752 = vtanh.pop %v3751
  %v3753 = vadd.f32 %v3752, 1.0
  %v3754 = vmul.f32 %v3753, 0.5
  %v3755 = vtanh.pop %v3748
  %v3756 = vmul.f32 %v3754, %v3645
  %3758 = vrot.lane.b32.xlu0 %v3755, 64
  %v3759 = vpop.permute.xlu0 %3758
  %v3761 = vmul.f32 %v3754, %v3759
  %3763 = vrot.lane.b32.xlu0 %v3761, 32
  %v3764 = vpop.permute.xlu0 %3763
  %v3766 = vadd.f32 %v3756, %v3764
  %v3767 = vtanh.pop %v3766
  %3769 = vrot.lane.b32.xlu0 %v3767, 64
  %v3770 = vpop.permute.xlu0 %3769
  %v3772 = vmul.f32 %v3754, %v3770
  %v3773 = vpack.c.bf16 %v3772, %v3772
  %3775 = vrot.lane.b32.xlu0 %v3773, 32
  %v3776 = vpop.permute.xlu0 %3775
  %v3778 = vsel %vm906, %v3776, 0
  %3780 = vmatpush.bf16.xpose.msra.mxu0 0
  %3781 = vmatpush.bf16.xpose.msra.mxu0 0
  %3782 = vmatpush.bf16.xpose.msra.mxu0 0
  %3783 = vmatpush.bf16.xpose.msra.mxu0 0
  %3784 = vmatpush.bf16.xpose.msra.mxu0 0
  %3785 = vmatpush.bf16.xpose.msra.mxu0 0
  %3786 = vmatpush.bf16.xpose.msra.mxu0 0
  %3787 = vmatpush.bf16.xpose.msra.mxu0 %v3663
  %3788 = vmatmul.bf16.gmra.mxu0 %v3778
  %v3789 = vpop.f32.mrf.mxu0
  %v3790 = vadd.f32 0.0, %v3789
  %v3791 = vpop.f32.mrf.mxu0
  %3792 = vdwg.mxu0
  %v3793 = vsel %vm116, %v3790, -1e+30
  %v3794 = vsel %vm3679, %v3793, -inf
  %3795 = vmax.xlane.f32.xlu0 %v3794
  %v3796 = vpop.xlane.xlu0 %3795
  %v3797 = vsub.f32 %v3793, %v3796
  %v3798 = vmul.f32 %v3797, 1.442695
  %v3799 = vpow.pop %v3798
  %v3800 = vsel %vm116, %v3799, 0.0
  %v3801 = vsel %vm3679, %v3800, 0.0
  %3802 = vadd.xlane.f32.xlu0 %v3801
  %v3803 = vpop.xlane.xlu0 %3802
  %v3804 = vmax.f32 %v3803, 1e-30
  %v3805 = vrcp.pop %v3804
  %v3806 = vmul.f32 %v3804, %v3805
  %v3807 = vsub.f32 1.0, %v3806
  %v3808 = vmul.f32 %v3805, %v3807
  %v3809 = vadd.f32 %v3805, %v3808
  %vm3810 = vweird.f32 %v3804
  %vm3811 = vweird.f32 %v3805
  %vm3812 = vmor %vm3810, %vm3811
  %v3813 = vsel %vm3812, %v3805, %v3809
  %v3814 = vand.u32 2147483647, %v3804
  %vm3815 = vcmp.eq.f32.partialorder %v3814, 8.507059e+37
  %v3816 = vand.u32 %v3804, 2147483648
  %v3817 = vor.u32 1.1754944e-38, %v3816
  %v3818 = vsel %vm3815, %v3817, %v3813
  %v3819 = vmul.f32 %v3800, %v3818
  %v3820 = vpack.c.bf16 %v3819, %v3819
  %v3822 = vsel %vm796, %v3820, 0
  %3824 = vmatpush.bf16.msra.mxu0 0
  %3825 = vmatpush.bf16.msra.mxu0 0
  %3826 = vmatpush.bf16.msra.mxu0 0
  %3827 = vmatpush.bf16.msra.mxu0 0
  %3828 = vmatpush.bf16.msra.mxu0 0
  %3829 = vmatpush.bf16.msra.mxu0 0
  %3830 = vmatpush.bf16.msra.mxu0 0
  %3831 = vmatpush.bf16.msra.mxu0 %v3710
  %3832 = vmatmul.bf16.gmra.mxu0 %v3822
  %v3833 = vpop.f32.mrf.mxu0
  %v3834 = vadd.f32 0.0, %v3833
  %v3835 = vpop.f32.mrf.mxu0
  %3836 = vdwg.mxu0
  %3838 = vrot.lane.b32.xlu0 %v3772, 32
  %v3839 = vpop.permute.xlu0 %3838
  %3842 = vrot.lane.b32.xlu0 %v3834, 32
  %v3843 = vpop.permute.xlu0 %3842
  %v3845 = vsel %vm906, %v3839, %v3843
  %v3846 = vpack.c.bf16 %v3845, %v3845
  %v3848 = vsel %vm474, %v3846, 0
  %3850 = vmatpush.bf16.msra.mxu0 0
  %3851 = vmatpush.bf16.msra.mxu0 0
  %3852 = vmatpush.bf16.msra.mxu0 0
  %3853 = vmatpush.bf16.msra.mxu0 0
  %3854 = vmatpush.bf16.msra.mxu0 %v3609
  %3855 = vmatpush.bf16.msra.mxu0 %v3608
  %3856 = vmatpush.bf16.msra.mxu0 %v3607
  %3857 = vmatpush.bf16.msra.mxu0 %v3606
  %3858 = vmatmul.bf16.gmra.mxu0 %v3848
  %v3859 = vpop.f32.mrf.mxu0
  %v3860 = vadd.f32 %v3588, %v3859
  %v3861 = vpop.f32.mrf.mxu0
  %3862 = vdwg.mxu0
  %v3863 = vmul.f32 %v3860, 0.5
  %v3864 = vtanh.pop %v3863
  %v3865 = vadd.f32 %v3864, 1.0
  %v3866 = vmul.f32 %v3865, 0.5
  %v3867 = vtanh.pop %v3860
  %v3868 = vmul.f32 %v3866, %v3766
  %3870 = vrot.lane.b32.xlu0 %v3867, 64
  %v3871 = vpop.permute.xlu0 %3870
  %v3873 = vmul.f32 %v3866, %v3871
  %3875 = vrot.lane.b32.xlu0 %v3873, 32
  %v3876 = vpop.permute.xlu0 %3875
  %v3878 = vadd.f32 %v3868, %v3876
  %v3879 = vtanh.pop %v3878
  %3881 = vrot.lane.b32.xlu0 %v3879, 64
  %v3882 = vpop.permute.xlu0 %3881
  %v3884 = vmul.f32 %v3866, %v3882
  %v3885 = vpack.c.bf16 %v3884, %v3884
  %3887 = vrot.lane.b32.xlu0 %v3885, 32
  %v3888 = vpop.permute.xlu0 %3887
  %v3890 = vsel %vm906, %v3888, 0
  %3892 = vmatpush.bf16.xpose.msra.mxu0 0
  %3893 = vmatpush.bf16.xpose.msra.mxu0 0
  %3894 = vmatpush.bf16.xpose.msra.mxu0 0
  %3895 = vmatpush.bf16.xpose.msra.mxu0 0
  %3896 = vmatpush.bf16.xpose.msra.mxu0 0
  %3897 = vmatpush.bf16.xpose.msra.mxu0 0
  %3898 = vmatpush.bf16.xpose.msra.mxu0 0
  %3899 = vmatpush.bf16.xpose.msra.mxu0 %v3663
  %3900 = vmatmul.bf16.gmra.mxu0 %v3890
  %v3901 = vpop.f32.mrf.mxu0
  %v3902 = vadd.f32 0.0, %v3901
  %v3903 = vpop.f32.mrf.mxu0
  %3904 = vdwg.mxu0
  %v3905 = vsel %vm116, %v3902, -1e+30
  %v3906 = vsel %vm3679, %v3905, -inf
  %3907 = vmax.xlane.f32.xlu0 %v3906
  %v3908 = vpop.xlane.xlu0 %3907
  %v3909 = vsub.f32 %v3905, %v3908
  %v3910 = vmul.f32 %v3909, 1.442695
  %v3911 = vpow.pop %v3910
  %v3912 = vsel %vm116, %v3911, 0.0
  %v3913 = vsel %vm3679, %v3912, 0.0
  %3914 = vadd.xlane.f32.xlu0 %v3913
  %v3915 = vpop.xlane.xlu0 %3914
  %v3916 = vmax.f32 %v3915, 1e-30
  %v3917 = vrcp.pop %v3916
  %v3918 = vmul.f32 %v3916, %v3917
  %v3919 = vsub.f32 1.0, %v3918
  %v3920 = vmul.f32 %v3917, %v3919
  %v3921 = vadd.f32 %v3917, %v3920
  %vm3922 = vweird.f32 %v3916
  %vm3923 = vweird.f32 %v3917
  %vm3924 = vmor %vm3922, %vm3923
  %v3925 = vsel %vm3924, %v3917, %v3921
  %v3926 = vand.u32 2147483647, %v3916
  %vm3927 = vcmp.eq.f32.partialorder %v3926, 8.507059e+37
  %v3928 = vand.u32 %v3916, 2147483648
  %v3929 = vor.u32 1.1754944e-38, %v3928
  %v3930 = vsel %vm3927, %v3929, %v3925
  %v3931 = vmul.f32 %v3912, %v3930
  %v3932 = vpack.c.bf16 %v3931, %v3931
  %v3934 = vsel %vm796, %v3932, 0
  %3936 = vmatpush.bf16.msra.mxu0 0
  %3937 = vmatpush.bf16.msra.mxu0 0
  %3938 = vmatpush.bf16.msra.mxu0 0
  %3939 = vmatpush.bf16.msra.mxu0 0
  %3940 = vmatpush.bf16.msra.mxu0 0
  %3941 = vmatpush.bf16.msra.mxu0 0
  %3942 = vmatpush.bf16.msra.mxu0 0
  %3943 = vmatpush.bf16.msra.mxu0 %v3710
  %3944 = vmatmul.bf16.gmra.mxu0 %v3934
  %v3945 = vpop.f32.mrf.mxu0
  %v3946 = vadd.f32 0.0, %v3945
  %v3947 = vpop.f32.mrf.mxu0
  %3948 = vdwg.mxu0
  %3950 = vrot.lane.b32.xlu0 %v3884, 32
  %v3951 = vpop.permute.xlu0 %3950
  %3954 = vrot.lane.b32.xlu0 %v3946, 32
  %v3955 = vpop.permute.xlu0 %3954
  %v3957 = vsel %vm906, %v3951, %v3955
  %v3958 = vld [vmem:[%s19] sm:$0xf]
  %v3959 = vld [vmem:[%s19 + $0x4] sm:$0xf]
  %v3960 = vld [vmem:[%s19 + $0x8] sm:$0xf]
  %v3961 = vld [vmem:[%s19 + $0xc] sm:$0xf]
  %v3962 = vld [vmem:[%s19 + $0x10] sm:$0xf]
  %v3963 = vld [vmem:[%s19 + $0x14] sm:$0xf]
  %v3964 = vld [vmem:[%s19 + $0x18] sm:$0xf]
  %v3965 = vld [vmem:[%s19 + $0x1c] sm:$0xf]
  %v3966 = vpack.c.bf16 %v3957, %v3957
  %v3967 = vld [vmem:[%s20] sm:$0x1]
  %v3969 = vperm.slane %v3967, 0
  %v3979 = vunpack.c.l.b16 %v3958
  %v3980 = vunpack.c.l.b16 %v3959
  %v3981 = vunpack.c.l.b16 %v3960
  %v3982 = vunpack.c.l.b16 %v3961
  %v3983 = vunpack.c.l.b16 %v3962
  %v3984 = vunpack.c.l.b16 %v3963
  %v3985 = vunpack.c.l.b16 %v3964
  %v3986 = vunpack.c.l.b16 %v3965
  %v3987 = vpack.c.b16 %v3980, %v3979
  %v3988 = vpack.c.b16 %v3982, %v3981
  %v3989 = vpack.c.b16 %v3984, %v3983
  %v3990 = vpack.c.b16 %v3986, %v3985
  %v3996 = vsel %vm474, %v3966, 0
  %3998 = vmatpush.bf16.msra.mxu0 0
  %3999 = vmatpush.bf16.msra.mxu0 0
  %4000 = vmatpush.bf16.msra.mxu0 0
  %4001 = vmatpush.bf16.msra.mxu0 0
  %4002 = vmatpush.bf16.msra.mxu0 %v3990
  %4003 = vmatpush.bf16.msra.mxu0 %v3989
  %4004 = vmatpush.bf16.msra.mxu0 %v3988
  %4005 = vmatpush.bf16.msra.mxu0 %v3987
  %4006 = vmatmul.bf16.gmra.mxu0 %v3996
  %v4007 = vpop.f32.mrf.mxu0
  %v4008 = vadd.f32 %v3969, %v4007
  %v4009 = vpop.f32.mrf.mxu0
  %4010 = vdwg.mxu0
  %v4011 = vmul.f32 %v4008, 0.5
  %v4012 = vtanh.pop %v4011
  %v4013 = vadd.f32 %v4012, 1.0
  %v4014 = vmul.f32 %v4013, 0.5
  %v4015 = vmul.f32 %v4008, %v4014
  %v4016 = vld [vmem:[%s21] sm:$0xf]
  %v4017 = vld [vmem:[%s21 + $0x4] sm:$0xf]
  %v4018 = vld [vmem:[%s21 + $0x8] sm:$0xf]
  %v4019 = vld [vmem:[%s21 + $0xc] sm:$0xf]
  %v4020 = vpack.c.bf16 %v4015, %v4015
  %v4021 = vld [vmem:[#allocation2] sm:$0x1]
  %v4023 = vperm.slane %v4021, 0
  %v4029 = vunpack.c.l.b16 %v4016
  %v4030 = vunpack.c.l.b16 %v4017
  %v4031 = vunpack.c.l.b16 %v4018
  %v4032 = vunpack.c.l.b16 %v4019
  %v4033 = vpack.c.b16 %v4030, %v4029
  %v4034 = vpack.c.b16 %v4032, %v4031
  %v4038 = vsel %vm906, %v4020, 0
  %4040 = vmatpush.bf16.msra.mxu0 0
  %4041 = vmatpush.bf16.msra.mxu0 0
  %4042 = vmatpush.bf16.msra.mxu0 0
  %4043 = vmatpush.bf16.msra.mxu0 0
  %4044 = vmatpush.bf16.msra.mxu0 0
  %4045 = vmatpush.bf16.msra.mxu0 0
  %4046 = vmatpush.bf16.msra.mxu0 %v4034
  %4047 = vmatpush.bf16.msra.mxu0 %v4033
  %4048 = vmatmul.bf16.gmra.mxu0 %v4038
  %v4049 = vpop.f32.mrf.mxu0
  %v4050 = vadd.f32 %v4023, %v4049
  %v4051 = vpop.f32.mrf.mxu0
  %4052 = vdwg.mxu0
  %vm4053 = vcmask 1024
  %4054 = vst.msk [vmem:[%s23] sm:$0x3] %vm4053, %v4050
  // Predicated region
  $region94: #{_gnn_forward_jit.1} parent=0 // pred_check
    _
  $region95: #{_gnn_forward_jit.1} parent=0 // pred_check_branch
    %4056 = sbr.rel (0) target = $region97
  $region96: #{_gnn_forward_jit.1} parent=0 // pred_region
    _
  $region97: #{_gnn_forward_jit.1} parent=0 // pred_fallthru
    _
  // Predicated region
  $region98: #{_gnn_forward_jit.1} parent=0 // pred_check
    _
  $region99: #{_gnn_forward_jit.1} parent=0 // pred_check_branch
    %4058 = sbr.rel (0) target = $region101
  $region100: #{_gnn_forward_jit.1} parent=0 // pred_region
    _
  $region101: #{_gnn_forward_jit.1} parent=0 // pred_fallthru
    _

</llo_original>
